<compile_context>
chip_gen: v7x
topology: tpu7x:2x2x1
jax: 0.10.0
libtpu: 0.0.40
codegen_flags: <defaults>
</compile_context>

<pallas_src>
import functools

import jax
import jax.numpy as jnp
from jax.experimental import pallas as pl
from jax.experimental.pallas import tpu as pltpu

_EPS = 1e-5                       # nn.BatchNorm2d default eps
_LANE = 128
_SUBLANE = 8
_VMEM_LIMIT = 48 * 1024 * 1024    # fits v5e/v6e/v7x scoped-VMEM budgets
_TILE_H_TARGET = 64               # target output rows per grid step


def _round_up(x, m):
    return (x + m - 1) // m * m


def _pick_tile_h(h, target=_TILE_H_TARGET):
    """Largest divisor of h that is <= target (falls back to h)."""
    if h <= target:
        return h
    for th in range(target, 0, -1):
        if h % th == 0:
            return th
    return h


# ----------------------------------------------------------------------------
# Kernel A: implicit-GEMM 3x3 conv (9 shifted matmuls) + per-channel partial
#           sum / sum-of-squares for the BatchNorm reduction.
# ----------------------------------------------------------------------------
def _conv_stats_kernel(x_ref, w_ref, conv_ref, stats_ref, *, th, wout):
    # x_ref:     (1, 1, TH+2, W+2, Cin_p)   bf16  (halo'd NHWC row block)
    # w_ref:     (3, 3, Cin_p, Cout_p)      bf16
    # conv_ref:  (TH*W, Cout_p)             bf16  (pre-BN conv output)
    # stats_ref: (1, 2, Cout_p)             f32   (partial [sum; sumsq])
    acc = jnp.zeros(conv_ref.shape, jnp.float32)
    for dy in range(3):
        for dx in range(3):
            xs = x_ref[0, 0, dy:dy + th, dx:dx + wout, :]
            xs = xs.reshape(th * wout, xs.shape[-1])
            acc = acc + jnp.dot(xs, w_ref[dy, dx],
                                preferred_element_type=jnp.float32)
    conv_ref[...] = acc.astype(conv_ref.dtype)
    stats_ref[0, 0:1, :] = jnp.sum(acc, axis=0, keepdims=True)
    stats_ref[0, 1:2, :] = jnp.sum(acc * acc, axis=0, keepdims=True)


# ----------------------------------------------------------------------------
# Kernel B: per-channel affine (folded BatchNorm) + optional residual + ReLU.
# ----------------------------------------------------------------------------
def _bn_affine_kernel(y_ref, scale_ref, shift_ref, *rest, relu, has_res):
    if has_res:
        r_ref, o_ref = rest
    else:
        (o_ref,) = rest
    y = y_ref[...].astype(jnp.float32) * scale_ref[...] + shift_ref[...]
    if has_res:
        y = y + r_ref[...].astype(jnp.float32)
    if relu:
        y = jnp.maximum(y, 0.0)
    o_ref[...] = y.astype(o_ref.dtype)


# ----------------------------------------------------------------------------
# Glue: build non-overlapping halo'd row blocks directly from the (low-res)
# NHWC tensor.  Fuses zero padding and (optional) nearest-neighbor upsampling
# into a single gather — no 4x upsampled intermediate, no 9x im2col.
# ----------------------------------------------------------------------------
def _build_halo_blocks(x_nhwc, th, scale):
    n, h, w, c = x_nhwc.shape
    h2, w2 = h * scale, w * scale
    nhb = h2 // th
    # padded (upsampled) row indices covered by each block: [hb*th, hb*th+th+2)
    prow = jnp.arange(nhb)[:, None] * th + jnp.arange(th + 2)[None, :]
    src_r = jnp.clip((prow - 1) // scale, 0, h - 1)          # (nhb, th+2)
    rmask = (prow >= 1) & (prow <= h2)
    pcol = jnp.arange(w2 + 2)
    src_c = jnp.clip((pcol - 1) // scale, 0, w - 1)           # (w2+2,)
    cmask = (pcol >= 1) & (pcol <= w2)
    blk = x_nhwc[:, src_r][:, :, :, src_c]                    # (n,nhb,th+2,w2+2,c)
    mask = (rmask[:, :, None] & cmask[None, None, :]).astype(x_nhwc.dtype)
    return blk * mask[None, :, :, :, None]


# ----------------------------------------------------------------------------
# Fused: [nearest-upsample] -> 3x3 conv (stride 1, pad 1) -> BatchNorm(train)
#        [-> residual add] [-> ReLU]
# ----------------------------------------------------------------------------
def conv3x3_bn_fused(x_nchw, w_oihw, gamma, beta, *, scale=1,
                     residual_nchw=None, relu=True, out_dtype=jnp.float32):
    n, cin, h, wd = x_nchw.shape
    cout = w_oihw.shape[0]
    h2, w2 = h * scale, wd * scale
    cin_p = _round_up(cin, _SUBLANE)
    cout_p = _round_up(cout, _LANE)       # lane-dense output channels
    r_rows = n * h2 * w2

    # NHWC bf16 input with channel padding (zeros; padded weights are zero too).
    x_nhwc = jnp.transpose(x_nchw, (0, 2, 3, 1)).astype(jnp.bfloat16)
    if cin_p != cin:
        x_nhwc = jnp.pad(x_nhwc, ((0, 0), (0, 0), (0, 0), (0, cin_p - cin)))

    th = _pick_tile_h(h2)
    nhb = h2 // th
    tm = th * w2                          # output rows per grid step
    xblk = _build_halo_blocks(x_nhwc, th, scale)

    # PyTorch conv weight (Cout, Cin, 3, 3) -> (3, 3, Cin_p, Cout_p), bf16.
    w_k = jnp.transpose(w_oihw, (2, 3, 1, 0))
    w_k = jnp.pad(w_k, ((0, 0), (0, 0), (0, cin_p - cin), (0, cout_p - cout)))
    w_k = w_k.astype(jnp.bfloat16)

    # ---- Pass 1: conv + per-block BN partial sums (fully parallel grid) ----
    kernel_a = functools.partial(_conv_stats_kernel, th=th, wout=w2)
    conv_out, part_stats = pl.pallas_call(
        kernel_a,
        grid=(n, nhb),
        in_specs=[
            pl.BlockSpec((1, 1, th + 2, w2 + 2, cin_p),
                         lambda i, j: (i, j, 0, 0, 0)),
            pl.BlockSpec((3, 3, cin_p, cout_p), lambda i, j: (0, 0, 0, 0)),
        ],
        out_specs=[
            pl.BlockSpec((tm, cout_p), lambda i, j: (i * nhb + j, 0)),
            pl.BlockSpec((1, 2, cout_p), lambda i, j: (i * nhb + j, 0, 0)),
        ],
        out_shape=[
            jax.ShapeDtypeStruct((r_rows, cout_p), jnp.bfloat16),
            jax.ShapeDtypeStruct((n * nhb, 2, cout_p), jnp.float32),
        ],
        compiler_params=pltpu.CompilerParams(
            dimension_semantics=("parallel", "parallel"),
            vmem_limit_bytes=_VMEM_LIMIT),
    )(xblk, w_k)

    # ---- Tiny XLA glue: finalize BN stats -> per-channel scale/shift ----
    sums = jnp.sum(part_stats, axis=0)                 # (2, Cout_p)
    mean = sums[0] / r_rows
    var = jnp.maximum(sums[1] / r_rows - mean * mean, 0.0)
    gamma_p = jnp.pad(gamma.astype(jnp.float32), (0, cout_p - cout))
    beta_p = jnp.pad(beta.astype(jnp.float32), (0, cout_p - cout))
    scale_vec = (gamma_p * jax.lax.rsqrt(var + _EPS)).reshape(1, cout_p)
    shift_vec = (beta_p - mean * scale_vec[0]).reshape(1, cout_p)

    # ---- Pass 2: normalize (+ residual) (+ ReLU), lane-dense row tiles ----
    args = [conv_out, scale_vec, shift_vec]
    in_specs = [
        pl.BlockSpec((tm, cout_p), lambda i: (i, 0)),
        pl.BlockSpec((1, cout_p), lambda i: (0, 0)),
        pl.BlockSpec((1, cout_p), lambda i: (0, 0)),
    ]
    has_res = residual_nchw is not None
    if has_res:
        res = jnp.transpose(residual_nchw, (0, 2, 3, 1)).reshape(r_rows, cout)
        res = jnp.pad(res, ((0, 0), (0, cout_p - cout))).astype(jnp.bfloat16)
        args.append(res)
        in_specs.append(pl.BlockSpec((tm, cout_p), lambda i: (i, 0)))

    kernel_b = functools.partial(_bn_affine_kernel, relu=relu, has_res=has_res)
    out2d = pl.pallas_call(
        kernel_b,
        grid=(r_rows // tm,),
        in_specs=in_specs,
        out_specs=pl.BlockSpec((tm, cout_p), lambda i: (i, 0)),
        out_shape=jax.ShapeDtypeStruct((r_rows, cout_p), out_dtype),
        compiler_params=pltpu.CompilerParams(
            dimension_semantics=("parallel",),
            vmem_limit_bytes=_VMEM_LIMIT),
    )(*args)

    out = out2d.reshape(n, h2, w2, cout_p)[..., :cout]
    return jnp.transpose(out, (0, 3, 1, 2))


# ----------------------------------------------------------------------------
# BasicBlockDec parameters + forward
# ----------------------------------------------------------------------------
def init_basic_block_dec(key, in_planes, stride=1):
    planes = int(in_planes / stride)
    ks = jax.random.split(key, 10)
    p = {
        "conv2_w": 0.1 * jax.random.normal(ks[0], (in_planes, in_planes, 3, 3), jnp.float32),
        "bn2_gamma": 1.0 + 0.1 * jax.random.normal(ks[1], (in_planes,), jnp.float32),
        "bn2_beta": 0.1 * jax.random.normal(ks[2], (in_planes,), jnp.float32),
        "bn1_gamma": 1.0 + 0.1 * jax.random.normal(ks[3], (planes,), jnp.float32),
        "bn1_beta": 0.1 * jax.random.normal(ks[4], (planes,), jnp.float32),
        "conv1_w": 0.1 * jax.random.normal(ks[5], (planes, in_planes, 3, 3), jnp.float32),
    }
    if stride == 1:
        p["conv1_b"] = None                                   # bias=False
    else:
        # ResizeConv2d convs have bias=True (nn.Conv2d default)
        p["conv1_b"] = 0.1 * jax.random.normal(ks[6], (planes,), jnp.float32)
        p["sc_conv_w"] = 0.1 * jax.random.normal(ks[7], (planes, in_planes, 3, 3), jnp.float32)
        p["sc_conv_b"] = 0.1 * jax.random.normal(ks[8], (planes,), jnp.float32)
        p["sc_bn_gamma"] = 1.0 + 0.1 * jax.random.normal(ks[9], (planes,), jnp.float32)
        p["sc_bn_beta"] = jnp.zeros((planes,), jnp.float32)
    return p


def basic_block_dec_forward(x, p, stride=1):
    # Note: conv biases (stride!=1 path) are dropped in the fused kernels — a
    # per-channel constant is exactly cancelled by training-mode BN's mean
    # subtraction (the f32 reference keeps them; results match).
    # out = relu(bn2(conv2(x)))
    out = conv3x3_bn_fused(x, p["conv2_w"], p["bn2_gamma"], p["bn2_beta"],
                           relu=True, out_dtype=jnp.bfloat16)
    if stride == 1:
        # out = relu(bn1(conv1(out)) + x)
        out = conv3x3_bn_fused(out, p["conv1_w"], p["bn1_gamma"], p["bn1_beta"],
                               residual_nchw=x, relu=True, out_dtype=jnp.float32)
    else:
        # conv1 / shortcut are ResizeConv2d: nearest upsample fused into the
        # conv's halo-block gather (scale=stride).
        sc = conv3x3_bn_fused(x, p["sc_conv_w"], p["sc_bn_gamma"], p["sc_bn_beta"],
                              scale=stride, relu=False, out_dtype=jnp.bfloat16)
        out = conv3x3_bn_fused(out, p["conv1_w"], p["bn1_gamma"], p["bn1_beta"],
                               scale=stride, residual_nchw=sc, relu=True,
                               out_dtype=jnp.float32)
    return out


# ----------------------------------------------------------------------------
# Pure-JAX f32 reference (for correctness check only; includes conv biases)
# ----------------------------------------------------------------------------
def _upsample_nearest_ref(x_nchw, scale):
    x = jnp.repeat(x_nchw, scale, axis=2)
    return jnp.repeat(x, scale, axis=3)


def _conv_ref(x, w, b):
    out = jax.lax.conv_general_dilated(
        x, w, (1, 1), ((1, 1), (1, 1)),
        dimension_numbers=("NCHW", "OIHW", "NCHW"))
    if b is not None:
        out = out + b.reshape(1, -1, 1, 1)
    return out


def _bn_ref(x, gamma, beta):
    mean = jnp.mean(x, axis=(0, 2, 3), keepdims=True)
    var = jnp.mean(jnp.square(x - mean), axis=(0, 2, 3), keepdims=True)
    return ((x - mean) * jax.lax.rsqrt(var + _EPS)
            * gamma.reshape(1, -1, 1, 1) + beta.reshape(1, -1, 1, 1))


def basic_block_dec_ref(x, p, stride=1):
    out = jax.nn.relu(_bn_ref(_conv_ref(x, p["conv2_w"], None),
                              p["bn2_gamma"], p["bn2_beta"]))
    if stride == 1:
        out = _bn_ref(_conv_ref(out, p["conv1_w"], None),
                      p["bn1_gamma"], p["bn1_beta"]) + x
    else:
        out_up = _upsample_nearest_ref(out, stride)
        x_up = _upsample_nearest_ref(x, stride)
        sc = _bn_ref(_conv_ref(x_up, p["sc_conv_w"], p["sc_conv_b"]),
                     p["sc_bn_gamma"], p["sc_bn_beta"])
        out = _bn_ref(_conv_ref(out_up, p["conv1_w"], p["conv1_b"]),
                      p["bn1_gamma"], p["bn1_beta"]) + sc
    return jax.nn.relu(out)


if __name__ == "__main__":
    key = jax.random.PRNGKey(0)
    kx, kp1, kp2 = jax.random.split(key, 3)
    x = jax.random.normal(kx, (2, 4, 16, 16), jnp.float32)   # NCHW, like PyTorch

    # stride=1: identity shortcut path
    p1 = init_basic_block_dec(kp1, in_planes=4, stride=1)
    y1 = jax.block_until_ready(basic_block_dec_forward(x, p1, stride=1))
    r1 = basic_block_dec_ref(x, p1, stride=1)
    assert y1.shape == (2, 4, 16, 16)
    assert jnp.allclose(y1, r1, atol=5e-2, rtol=5e-2)        # bf16 MXU path

    # stride=2: ResizeConv2d (nearest x2 upsample) path + conv+BN shortcut
    p2 = init_basic_block_dec(kp2, in_planes=4, stride=2)
    y2 = jax.block_until_ready(basic_block_dec_forward(x, p2, stride=2))
    r2 = basic_block_dec_ref(x, p2, stride=2)
    assert y2.shape == (2, 2, 32, 32)
    assert jnp.allclose(y2, r2, atol=5e-2, rtol=5e-2)

    print("KERNEL_OK")
</pallas_src>

<mosaic_0001>
module attributes {stable_mosaic.version = 11 : i64} {
  func.func @_conv_stats_kernel(%arg0: i32, %arg1: i32, %arg2: memref<1x1x18x18x8xbf16, #tpu.memory_space<vmem>>, %arg3: memref<3x3x8x128xbf16, #tpu.memory_space<vmem>>, %arg4: memref<256x128xbf16, #tpu.memory_space<vmem>>, %arg5: memref<1x2x128xf32, #tpu.memory_space<vmem>>) attributes {dimension_semantics = [#tpu.dimension_semantics<parallel>, #tpu.dimension_semantics<parallel>], iteration_bounds = array<i64: 2, 1>, scalar_prefetch = 0 : i64, scratch_operands = 0 : i64, tpu.core_type = #tpu.core_type<tc>, window_params = [{transform_indices = @transform_0, window_bounds = array<i64: 1, 1, 18, 18, 8>}, {pipeline_mode = #tpu.pipeline_mode<synchronous>, transform_indices = @transform_1, window_bounds = array<i64: 3, 3, 8, 128>}, {transform_indices = @transform_2, window_bounds = array<i64: 256, 128>}, {transform_indices = @transform_3, window_bounds = array<i64: 1, 2, 128>}]} {
    %cst = arith.constant 0.000000e+00 : f32
    %0 = vector.broadcast %cst : f32 to vector<256x128xf32>
    %c0 = arith.constant 0 : index
    %c0_0 = arith.constant 0 : index
    %c0_1 = arith.constant 0 : index
    %c0_2 = arith.constant 0 : index
    %c0_3 = arith.constant 0 : index
    %1 = vector.load %arg2[%c0, %c0_0, %c0_1, %c0_2, %c0_3] : memref<1x1x18x18x8xbf16, #tpu.memory_space<vmem>>, vector<1x1x16x16x8xbf16>
    %2 = vector.shape_cast %1 : vector<1x1x16x16x8xbf16> to vector<16x16x8xbf16>
    %3 = vector.shape_cast %2 : vector<16x16x8xbf16> to vector<256x8xbf16>
    %c0_4 = arith.constant 0 : index
    %c0_5 = arith.constant 0 : index
    %c0_6 = arith.constant 0 : index
    %c0_7 = arith.constant 0 : index
    %4 = vector.load %arg3[%c0_4, %c0_5, %c0_6, %c0_7] : memref<3x3x8x128xbf16, #tpu.memory_space<vmem>>, vector<1x1x8x128xbf16>
    %5 = vector.shape_cast %4 : vector<1x1x8x128xbf16> to vector<8x128xbf16>
    %cst_8 = arith.constant dense<0.000000e+00> : vector<256x128xf32>
    %6 = tpu.matmul %3, %5, %cst_8 {dimension_numbers = #tpu.dot_dimension_numbers<[1], [0], [0], [1], [0, 0, 1, 1], [], []>} : vector<256x8xbf16>, vector<8x128xbf16>, vector<256x128xf32> -> vector<256x128xf32>
    %7 = arith.addf %0, %6 : vector<256x128xf32>
    %c0_9 = arith.constant 0 : index
    %c0_10 = arith.constant 0 : index
    %c0_11 = arith.constant 0 : index
    %c1 = arith.constant 1 : index
    %c0_12 = arith.constant 0 : index
    %8 = vector.load %arg2[%c0_9, %c0_10, %c0_11, %c1, %c0_12] : memref<1x1x18x18x8xbf16, #tpu.memory_space<vmem>>, vector<1x1x16x16x8xbf16>
    %9 = vector.shape_cast %8 : vector<1x1x16x16x8xbf16> to vector<16x16x8xbf16>
    %10 = vector.shape_cast %9 : vector<16x16x8xbf16> to vector<256x8xbf16>
    %c0_13 = arith.constant 0 : index
    %c1_14 = arith.constant 1 : index
    %c0_15 = arith.constant 0 : index
    %c0_16 = arith.constant 0 : index
    %11 = vector.load %arg3[%c0_13, %c1_14, %c0_15, %c0_16] : memref<3x3x8x128xbf16, #tpu.memory_space<vmem>>, vector<1x1x8x128xbf16>
    %12 = vector.shape_cast %11 : vector<1x1x8x128xbf16> to vector<8x128xbf16>
    %cst_17 = arith.constant dense<0.000000e+00> : vector<256x128xf32>
    %13 = tpu.matmul %10, %12, %cst_17 {dimension_numbers = #tpu.dot_dimension_numbers<[1], [0], [0], [1], [0, 0, 1, 1], [], []>} : vector<256x8xbf16>, vector<8x128xbf16>, vector<256x128xf32> -> vector<256x128xf32>
    %14 = arith.addf %7, %13 : vector<256x128xf32>
    %c0_18 = arith.constant 0 : index
    %c0_19 = arith.constant 0 : index
    %c0_20 = arith.constant 0 : index
    %c2 = arith.constant 2 : index
    %c0_21 = arith.constant 0 : index
    %15 = vector.load %arg2[%c0_18, %c0_19, %c0_20, %c2, %c0_21] : memref<1x1x18x18x8xbf16, #tpu.memory_space<vmem>>, vector<1x1x16x16x8xbf16>
    %16 = vector.shape_cast %15 : vector<1x1x16x16x8xbf16> to vector<16x16x8xbf16>
    %17 = vector.shape_cast %16 : vector<16x16x8xbf16> to vector<256x8xbf16>
    %c0_22 = arith.constant 0 : index
    %c2_23 = arith.constant 2 : index
    %c0_24 = arith.constant 0 : index
    %c0_25 = arith.constant 0 : index
    %18 = vector.load %arg3[%c0_22, %c2_23, %c0_24, %c0_25] : memref<3x3x8x128xbf16, #tpu.memory_space<vmem>>, vector<1x1x8x128xbf16>
    %19 = vector.shape_cast %18 : vector<1x1x8x128xbf16> to vector<8x128xbf16>
    %cst_26 = arith.constant dense<0.000000e+00> : vector<256x128xf32>
    %20 = tpu.matmul %17, %19, %cst_26 {dimension_numbers = #tpu.dot_dimension_numbers<[1], [0], [0], [1], [0, 0, 1, 1], [], []>} : vector<256x8xbf16>, vector<8x128xbf16>, vector<256x128xf32> -> vector<256x128xf32>
    %21 = arith.addf %14, %20 : vector<256x128xf32>
    %c0_27 = arith.constant 0 : index
    %c0_28 = arith.constant 0 : index
    %c1_29 = arith.constant 1 : index
    %c0_30 = arith.constant 0 : index
    %c0_31 = arith.constant 0 : index
    %22 = vector.load %arg2[%c0_27, %c0_28, %c1_29, %c0_30, %c0_31] : memref<1x1x18x18x8xbf16, #tpu.memory_space<vmem>>, vector<1x1x16x16x8xbf16>
    %23 = vector.shape_cast %22 : vector<1x1x16x16x8xbf16> to vector<16x16x8xbf16>
    %24 = vector.shape_cast %23 : vector<16x16x8xbf16> to vector<256x8xbf16>
    %c1_32 = arith.constant 1 : index
    %c0_33 = arith.constant 0 : index
    %c0_34 = arith.constant 0 : index
    %c0_35 = arith.constant 0 : index
    %25 = vector.load %arg3[%c1_32, %c0_33, %c0_34, %c0_35] : memref<3x3x8x128xbf16, #tpu.memory_space<vmem>>, vector<1x1x8x128xbf16>
    %26 = vector.shape_cast %25 : vector<1x1x8x128xbf16> to vector<8x128xbf16>
    %cst_36 = arith.constant dense<0.000000e+00> : vector<256x128xf32>
    %27 = tpu.matmul %24, %26, %cst_36 {dimension_numbers = #tpu.dot_dimension_numbers<[1], [0], [0], [1], [0, 0, 1, 1], [], []>} : vector<256x8xbf16>, vector<8x128xbf16>, vector<256x128xf32> -> vector<256x128xf32>
    %28 = arith.addf %21, %27 : vector<256x128xf32>
    %c0_37 = arith.constant 0 : index
    %c0_38 = arith.constant 0 : index
    %c1_39 = arith.constant 1 : index
    %c1_40 = arith.constant 1 : index
    %c0_41 = arith.constant 0 : index
    %29 = vector.load %arg2[%c0_37, %c0_38, %c1_39, %c1_40, %c0_41] : memref<1x1x18x18x8xbf16, #tpu.memory_space<vmem>>, vector<1x1x16x16x8xbf16>
    %30 = vector.shape_cast %29 : vector<1x1x16x16x8xbf16> to vector<16x16x8xbf16>
    %31 = vector.shape_cast %30 : vector<16x16x8xbf16> to vector<256x8xbf16>
    %c1_42 = arith.constant 1 : index
    %c1_43 = arith.constant 1 : index
    %c0_44 = arith.constant 0 : index
    %c0_45 = arith.constant 0 : index
    %32 = vector.load %arg3[%c1_42, %c1_43, %c0_44, %c0_45] : memref<3x3x8x128xbf16, #tpu.memory_space<vmem>>, vector<1x1x8x128xbf16>
    %33 = vector.shape_cast %32 : vector<1x1x8x128xbf16> to vector<8x128xbf16>
    %cst_46 = arith.constant dense<0.000000e+00> : vector<256x128xf32>
    %34 = tpu.matmul %31, %33, %cst_46 {dimension_numbers = #tpu.dot_dimension_numbers<[1], [0], [0], [1], [0, 0, 1, 1], [], []>} : vector<256x8xbf16>, vector<8x128xbf16>, vector<256x128xf32> -> vector<256x128xf32>
    %35 = arith.addf %28, %34 : vector<256x128xf32>
    %c0_47 = arith.constant 0 : index
    %c0_48 = arith.constant 0 : index
    %c1_49 = arith.constant 1 : index
    %c2_50 = arith.constant 2 : index
    %c0_51 = arith.constant 0 : index
    %36 = vector.load %arg2[%c0_47, %c0_48, %c1_49, %c2_50, %c0_51] : memref<1x1x18x18x8xbf16, #tpu.memory_space<vmem>>, vector<1x1x16x16x8xbf16>
    %37 = vector.shape_cast %36 : vector<1x1x16x16x8xbf16> to vector<16x16x8xbf16>
    %38 = vector.shape_cast %37 : vector<16x16x8xbf16> to vector<256x8xbf16>
    %c1_52 = arith.constant 1 : index
    %c2_53 = arith.constant 2 : index
    %c0_54 = arith.constant 0 : index
    %c0_55 = arith.constant 0 : index
    %39 = vector.load %arg3[%c1_52, %c2_53, %c0_54, %c0_55] : memref<3x3x8x128xbf16, #tpu.memory_space<vmem>>, vector<1x1x8x128xbf16>
    %40 = vector.shape_cast %39 : vector<1x1x8x128xbf16> to vector<8x128xbf16>
    %cst_56 = arith.constant dense<0.000000e+00> : vector<256x128xf32>
    %41 = tpu.matmul %38, %40, %cst_56 {dimension_numbers = #tpu.dot_dimension_numbers<[1], [0], [0], [1], [0, 0, 1, 1], [], []>} : vector<256x8xbf16>, vector<8x128xbf16>, vector<256x128xf32> -> vector<256x128xf32>
    %42 = arith.addf %35, %41 : vector<256x128xf32>
    %c0_57 = arith.constant 0 : index
    %c0_58 = arith.constant 0 : index
    %c2_59 = arith.constant 2 : index
    %c0_60 = arith.constant 0 : index
    %c0_61 = arith.constant 0 : index
    %43 = vector.load %arg2[%c0_57, %c0_58, %c2_59, %c0_60, %c0_61] : memref<1x1x18x18x8xbf16, #tpu.memory_space<vmem>>, vector<1x1x16x16x8xbf16>
    %44 = vector.shape_cast %43 : vector<1x1x16x16x8xbf16> to vector<16x16x8xbf16>
    %45 = vector.shape_cast %44 : vector<16x16x8xbf16> to vector<256x8xbf16>
    %c2_62 = arith.constant 2 : index
    %c0_63 = arith.constant 0 : index
    %c0_64 = arith.constant 0 : index
    %c0_65 = arith.constant 0 : index
    %46 = vector.load %arg3[%c2_62, %c0_63, %c0_64, %c0_65] : memref<3x3x8x128xbf16, #tpu.memory_space<vmem>>, vector<1x1x8x128xbf16>
    %47 = vector.shape_cast %46 : vector<1x1x8x128xbf16> to vector<8x128xbf16>
    %cst_66 = arith.constant dense<0.000000e+00> : vector<256x128xf32>
    %48 = tpu.matmul %45, %47, %cst_66 {dimension_numbers = #tpu.dot_dimension_numbers<[1], [0], [0], [1], [0, 0, 1, 1], [], []>} : vector<256x8xbf16>, vector<8x128xbf16>, vector<256x128xf32> -> vector<256x128xf32>
    %49 = arith.addf %42, %48 : vector<256x128xf32>
    %c0_67 = arith.constant 0 : index
    %c0_68 = arith.constant 0 : index
    %c2_69 = arith.constant 2 : index
    %c1_70 = arith.constant 1 : index
    %c0_71 = arith.constant 0 : index
    %50 = vector.load %arg2[%c0_67, %c0_68, %c2_69, %c1_70, %c0_71] : memref<1x1x18x18x8xbf16, #tpu.memory_space<vmem>>, vector<1x1x16x16x8xbf16>
    %51 = vector.shape_cast %50 : vector<1x1x16x16x8xbf16> to vector<16x16x8xbf16>
    %52 = vector.shape_cast %51 : vector<16x16x8xbf16> to vector<256x8xbf16>
    %c2_72 = arith.constant 2 : index
    %c1_73 = arith.constant 1 : index
    %c0_74 = arith.constant 0 : index
    %c0_75 = arith.constant 0 : index
    %53 = vector.load %arg3[%c2_72, %c1_73, %c0_74, %c0_75] : memref<3x3x8x128xbf16, #tpu.memory_space<vmem>>, vector<1x1x8x128xbf16>
    %54 = vector.shape_cast %53 : vector<1x1x8x128xbf16> to vector<8x128xbf16>
    %cst_76 = arith.constant dense<0.000000e+00> : vector<256x128xf32>
    %55 = tpu.matmul %52, %54, %cst_76 {dimension_numbers = #tpu.dot_dimension_numbers<[1], [0], [0], [1], [0, 0, 1, 1], [], []>} : vector<256x8xbf16>, vector<8x128xbf16>, vector<256x128xf32> -> vector<256x128xf32>
    %56 = arith.addf %49, %55 : vector<256x128xf32>
    %c0_77 = arith.constant 0 : index
    %c0_78 = arith.constant 0 : index
    %c2_79 = arith.constant 2 : index
    %c2_80 = arith.constant 2 : index
    %c0_81 = arith.constant 0 : index
    %57 = vector.load %arg2[%c0_77, %c0_78, %c2_79, %c2_80, %c0_81] : memref<1x1x18x18x8xbf16, #tpu.memory_space<vmem>>, vector<1x1x16x16x8xbf16>
    %58 = vector.shape_cast %57 : vector<1x1x16x16x8xbf16> to vector<16x16x8xbf16>
    %59 = vector.shape_cast %58 : vector<16x16x8xbf16> to vector<256x8xbf16>
    %c2_82 = arith.constant 2 : index
    %c2_83 = arith.constant 2 : index
    %c0_84 = arith.constant 0 : index
    %c0_85 = arith.constant 0 : index
    %60 = vector.load %arg3[%c2_82, %c2_83, %c0_84, %c0_85] : memref<3x3x8x128xbf16, #tpu.memory_space<vmem>>, vector<1x1x8x128xbf16>
    %61 = vector.shape_cast %60 : vector<1x1x8x128xbf16> to vector<8x128xbf16>
    %cst_86 = arith.constant dense<0.000000e+00> : vector<256x128xf32>
    %62 = tpu.matmul %59, %61, %cst_86 {dimension_numbers = #tpu.dot_dimension_numbers<[1], [0], [0], [1], [0, 0, 1, 1], [], []>} : vector<256x8xbf16>, vector<8x128xbf16>, vector<256x128xf32> -> vector<256x128xf32>
    %63 = arith.addf %56, %62 : vector<256x128xf32>
    %64 = arith.truncf %63 : vector<256x128xf32> to vector<256x128xbf16>
    %c0_87 = arith.constant 0 : index
    %c0_88 = arith.constant 0 : index
    %65 = vector.load %arg4[%c0_87, %c0_88] : memref<256x128xbf16, #tpu.memory_space<vmem>>, vector<256x128xbf16>
    tpu.vector_store %arg4[%c0_87, %c0_88], %64 {strides = array<i32>} : memref<256x128xbf16, #tpu.memory_space<vmem>>, vector<256x128xbf16>,
    %cst_89 = arith.constant dense<0.000000e+00> : vector<128xf32>
    %66 = vector.multi_reduction <add>, %63, %cst_89 [0] : vector<256x128xf32> to vector<128xf32>
    %67 = vector.shape_cast %66 : vector<128xf32> to vector<1x128xf32>
    %c0_90 = arith.constant 0 : index
    %c0_91 = arith.constant 0 : index
    %c0_92 = arith.constant 0 : index
    %68 = vector.load %arg5[%c0_90, %c0_91, %c0_92] : memref<1x2x128xf32, #tpu.memory_space<vmem>>, vector<1x1x128xf32>
    %69 = vector.shape_cast %68 : vector<1x1x128xf32> to vector<1x128xf32>
    %70 = vector.shape_cast %67 : vector<1x128xf32> to vector<1x1x128xf32>
    tpu.vector_store %arg5[%c0_90, %c0_91, %c0_92], %70 {strides = array<i32>} : memref<1x2x128xf32, #tpu.memory_space<vmem>>, vector<1x1x128xf32>,
    %71 = arith.mulf %63, %63 : vector<256x128xf32>
    %cst_93 = arith.constant dense<0.000000e+00> : vector<128xf32>
    %72 = vector.multi_reduction <add>, %71, %cst_93 [0] : vector<256x128xf32> to vector<128xf32>
    %73 = vector.shape_cast %72 : vector<128xf32> to vector<1x128xf32>
    %c0_94 = arith.constant 0 : index
    %c1_95 = arith.constant 1 : index
    %c0_96 = arith.constant 0 : index
    %74 = vector.load %arg5[%c0_94, %c1_95, %c0_96] : memref<1x2x128xf32, #tpu.memory_space<vmem>>, vector<1x1x128xf32>
    %75 = vector.shape_cast %74 : vector<1x1x128xf32> to vector<1x128xf32>
    %76 = vector.shape_cast %73 : vector<1x128xf32> to vector<1x1x128xf32>
    tpu.vector_store %arg5[%c0_94, %c1_95, %c0_96], %76 {strides = array<i32>} : memref<1x2x128xf32, #tpu.memory_space<vmem>>, vector<1x1x128xf32>,
    return
  }
  func.func @transform_0(%arg0: i32, %arg1: i32) -> (i32, i32, i32, i32, i32) {
    %c0_i32 = arith.constant 0 : i32
    %c0_i32_0 = arith.constant 0 : i32
    %c0_i32_1 = arith.constant 0 : i32
    %c0_i32_2 = arith.constant 0 : i32
    return %arg0, %arg1, %c0_i32, %c0_i32_0, %c0_i32_1 : i32, i32, i32, i32, i32
  }
  func.func @transform_1(%arg0: i32, %arg1: i32) -> (i32, i32, i32, i32) {
    %c0_i32 = arith.constant 0 : i32
    %c0_i32_0 = arith.constant 0 : i32
    %c0_i32_1 = arith.constant 0 : i32
    %c0_i32_2 = arith.constant 0 : i32
    %c0_i32_3 = arith.constant 0 : i32
    return %c0_i32, %c0_i32_0, %c0_i32_1, %c0_i32_2 : i32, i32, i32, i32
  }
  func.func @transform_2(%arg0: i32, %arg1: i32) -> (i32, i32) {
    %c1_i32 = arith.constant 1 : i32
    %0 = arith.muli %arg0, %c1_i32 : i32
    %1 = arith.addi %0, %arg1 : i32
    %c0_i32 = arith.constant 0 : i32
    %c0_i32_0 = arith.constant 0 : i32
    return %1, %c0_i32 : i32, i32
  }
  func.func @transform_3(%arg0: i32, %arg1: i32) -> (i32, i32, i32) {
    %c1_i32 = arith.constant 1 : i32
    %0 = arith.muli %arg0, %c1_i32 : i32
    %1 = arith.addi %0, %arg1 : i32
    %c0_i32 = arith.constant 0 : i32
    %c0_i32_0 = arith.constant 0 : i32
    %c0_i32_1 = arith.constant 0 : i32
    return %1, %c0_i32, %c0_i32_0 : i32, i32, i32
  }
}

</mosaic_0001>

<llo_original>
// kernel: tpu_custom_call.1
$region0: #{tpu_custom_call.1}
  #allocation0 [shape = 'u32[]', space=smem, size = 0x4, offset = 0x4, fixed_abs, tag = 'smem constant byte address 0x4 - core index']
  #allocation1 [shape = 'u32[144,128]{1,0:T(1,128)}', space=vmem, size = 0x12000, scoped, tag = 'internal scratch']
  %s0 = inlined_call_operand.vmem [shape: bf16[2,1,18,18,8], index: 0, kind: input, shape index: {}]
  %s1 = inlined_call_operand.vmem [shape: bf16[3,3,8,128], index: 1, kind: input, shape index: {}]
  %s2 = inlined_call_operand.hbm [shape: bf16[512,128], index: 2, kind: output, shape index: {0}]
  %s3 = inlined_call_operand.hbm [shape: f32[2,2,128], index: 3, kind: output, shape index: {1}]
  %4 = xla_tuple %s2, %s3
  %s5 = sld [smem:[#allocation0]]
  $region49: #{tpu_custom_call.1} parent=0
    _
  %s7 = ssub.s32 1, %s5
  %s8 = scalar_select 0, %s7, %s5
  $region1: #{tpu_custom_call.1} parent=0
    #allocation2 [shape = 'u8[131072]{0}', space=vmem, size = 0x20000, scoped, tag = 'output window, operand 0']
    #allocation3 [shape = 's32[2]{0}', space=sflag, size = 0x8, scoped, tag = 'scoped memory for tpu_custom_call.1']
    #allocation4 [shape = 'u8[2048]{0}', space=vmem, size = 0x800, scoped, tag = 'output window, operand 1']
    #allocation5 [shape = 's32[2]{0}', space=sflag, size = 0x8, scoped, tag = 'scoped memory for tpu_custom_call.1']
    %9 = vsyncpa [#allocation3], 0
    %s10 = scalar_lea.sflag [#allocation3], 1
    %11 = vsyncpa %s10, 0
    %12 = vsyncpa [#allocation5], 0
    %s13 = scalar_lea.sflag [#allocation5], 1
    %14 = vsyncpa %s13, 0
    loop: start=0, step=1, limit=4
    $region2: #{tpu_custom_call.1} parent=1 // loop_pre_header
      _
    $region3: #{tpu_custom_call.1} parent=1 // loop_header
      %s16 = sphi 0, %s20
      %p17 = scmp.ge.s32.totalorder %s16, 4
      %s23 = sphi 0, %s35
      %s24 = sphi 0, %s31
      %s25 = sphi 0, %s23
      %s26 = sphi 0, %s24
      %s27 = sphi 0, %s25
      %s28 = sphi 0, %s26
      %s40 = sphi 0, %s42
      %s43 = sphi 0, %s40
      %s44 = sphi 0, %s43
      %s60 = sphi 0, %s44
      %s64 = sphi 0, %s64
      %s66 = sphi 0, %s64
      %s67 = sphi 0, %s66
      %s81 = sphi 0, %s67
      %s89 = sphi 0, %s91
      %s92 = sphi 0, %s89
      %s93 = sphi 0, %s92
      %s109 = sphi 0, %s93
      %s117 = sphi 0, %s119
      %s120 = sphi 0, %s117
      %s121 = sphi 0, %s120
      %s137 = sphi 0, %s121
    $region4: #{tpu_custom_call.1} parent=1 // loop_header_branch
      %19 = sbr.rel (%p17) target = $region8
    $region5: #{tpu_custom_call.1} parent=1 // loop_body
      %s21 = ssub.s32 %s16, 1
      %s22 = ssub.s32 %s16, 2
      %s29 = sadd.s32 1, %s24
      %p30 = scmp.ge.s32.totalorder %s29, 1
      %s31 = scalar_select %p30, 0, %s29
      %s32 = sadd.s32 1, %s23
      %s33 = scalar_select %p30, %s32, %s23
      %p34 = scmp.ge.s32.totalorder %s33, 2
      %s35 = scalar_select %p34, 0, %s33
      %s36 = ssub.s32 %s23, %s35
      %s37 = ssub.s32 %s24, %s31
      %s38 = sor.u32 %s36, %s37
      %p39 = scmp.eq.s32.totalorder %s38, 0
      %s41 = sadd.s32 %s40, 1
      %s42 = scalar_select %p39, %s40, %s41
      %p45 = pneg %p39
      %p46 = scmp.eq.s32.totalorder %s16, 1
      %p47 = por %p45, %p46
      %p48 = scmp.ne.s32.totalorder %s40, %s43
      %p49 = scmp.eq.s32.totalorder %s16, 0
      %p50 = por %p48, %p49
      %p51 = scmp.ne.s32.totalorder %s40, %s43
      %p52 = scmp.eq.s32.totalorder %s21, 1
      %p53 = por %p51, %p52
      %p54 = scmp.ne.s32.totalorder %s43, %s44
      %p55 = scmp.eq.s32.totalorder %s21, 0
      %p56 = por %p54, %p55
      %p57 = scmp.ne.s32.totalorder %s43, %s44
      %p58 = scmp.eq.s32.totalorder %s22, 1
      %p59 = por %p57, %p58
      %p61 = scmp.ne.s32.totalorder %s44, %s60
      %p62 = scmp.eq.s32.totalorder %s22, 0
      %p63 = por %p61, %p62
      %s65 = sadd.s32 %s64, 1
      %p68 = scmp.eq.s32.totalorder %s16, 1
      %p69 = scmp.ne.s32.totalorder %s64, %s66
      %p70 = scmp.eq.s32.totalorder %s16, 0
      %p71 = por %p69, %p70
      %p72 = scmp.ne.s32.totalorder %s64, %s66
      %p73 = scmp.eq.s32.totalorder %s21, 1
      %p74 = por %p72, %p73
      %p75 = scmp.ne.s32.totalorder %s66, %s67
      %p76 = scmp.eq.s32.totalorder %s21, 0
      %p77 = por %p75, %p76
      %p78 = scmp.ne.s32.totalorder %s66, %s67
      %p79 = scmp.eq.s32.totalorder %s22, 1
      %p80 = por %p78, %p79
      %p82 = scmp.ne.s32.totalorder %s67, %s81
      %p83 = scmp.eq.s32.totalorder %s22, 0
      %p84 = por %p82, %p83
      %s85 = sadd.s32 %s23, %s24
      %s86 = sadd.s32 %s35, %s31
      %s87 = ssub.s32 %s85, %s86
      %p88 = scmp.eq.s32.totalorder %s87, 0
      %s90 = sadd.s32 %s89, 1
      %s91 = scalar_select %p88, %s89, %s90
      %p94 = pneg %p88
      %p95 = scmp.eq.s32.totalorder %s16, 1
      %p96 = por %p94, %p95
      %p97 = scmp.ne.s32.totalorder %s89, %s92
      %p98 = scmp.eq.s32.totalorder %s16, 0
      %p99 = por %p97, %p98
      %p100 = scmp.ne.s32.totalorder %s89, %s92
      %p101 = scmp.eq.s32.totalorder %s21, 1
      %p102 = por %p100, %p101
      %p103 = scmp.ne.s32.totalorder %s92, %s93
      %p104 = scmp.eq.s32.totalorder %s21, 0
      %p105 = por %p103, %p104
      %p106 = scmp.ne.s32.totalorder %s92, %s93
      %p107 = scmp.eq.s32.totalorder %s22, 1
      %p108 = por %p106, %p107
      %p110 = scmp.ne.s32.totalorder %s93, %s109
      %p111 = scmp.eq.s32.totalorder %s22, 0
      %p112 = por %p110, %p111
      %s113 = sadd.s32 %s23, %s24
      %s114 = sadd.s32 %s35, %s31
      %s115 = ssub.s32 %s113, %s114
      %p116 = scmp.eq.s32.totalorder %s115, 0
      %s118 = sadd.s32 %s117, 1
      %s119 = scalar_select %p116, %s117, %s118
      %p122 = pneg %p116
      %p123 = scmp.eq.s32.totalorder %s16, 1
      %p124 = por %p122, %p123
      %p125 = scmp.ne.s32.totalorder %s117, %s120
      %p126 = scmp.eq.s32.totalorder %s16, 0
      %p127 = por %p125, %p126
      %p128 = scmp.ne.s32.totalorder %s117, %s120
      %p129 = scmp.eq.s32.totalorder %s21, 1
      %p130 = por %p128, %p129
      %p131 = scmp.ne.s32.totalorder %s120, %s121
      %p132 = scmp.eq.s32.totalorder %s21, 0
      %p133 = por %p131, %p132
      %p134 = scmp.ne.s32.totalorder %s120, %s121
      %p135 = scmp.eq.s32.totalorder %s22, 1
      %p136 = por %p134, %p135
      %p138 = scmp.ne.s32.totalorder %s121, %s137
      %p139 = scmp.eq.s32.totalorder %s22, 0
      %p140 = por %p138, %p139
      %p141 = scmp.le.s32.totalorder 1, %s16
      %p142 = scmp.lt.s32.totalorder %s16, 3
      %p143 = pnand %p141, %p142
      %p144 = pneg %p143
      // Predicated region
      $region9: #{tpu_custom_call.1} parent=5 // pred_check
        _
      $region10: #{tpu_custom_call.1} parent=5 // pred_check_branch
        %146 = sbr.rel (%p143) target = $region12
      $region11: #{tpu_custom_call.1} parent=5 // pred_region
        %s147 = ssub.s32 %s16, 1
        // Predicated region
        $region13: #{tpu_custom_call.1} parent=11 // pred_check
          %p148 = pneg %p77
        $region14: #{tpu_custom_call.1} parent=11 // pred_check_branch
          %150 = sbr.rel (%p148) target = $region16
        $region15: #{tpu_custom_call.1} parent=11 // pred_region
          _
        $region16: #{tpu_custom_call.1} parent=11 // pred_fallthru
          _
      $region12: #{tpu_custom_call.1} parent=5 // pred_fallthru
        _
      %p151 = scmp.lt.s32.totalorder %s16, 2
      // Predicated region
      $region17: #{tpu_custom_call.1} parent=5 // pred_check
        %p152 = pneg %p151
      $region18: #{tpu_custom_call.1} parent=5 // pred_check_branch
        %154 = sbr.rel (%p152) target = $region20
      $region19: #{tpu_custom_call.1} parent=5 // pred_region
        // Predicated region
        $region21: #{tpu_custom_call.1} parent=19 // pred_check
          %p155 = pneg %p50
        $region22: #{tpu_custom_call.1} parent=19 // pred_check_branch
          %157 = sbr.rel (%p155) target = $region24
        $region23: #{tpu_custom_call.1} parent=19 // pred_region
          %p158 = scmp.lt.s32.totalorder %s23, 1
          %s159 = scalar_select %p158, %s23, 1
          %p160 = scmp.lt.s32.totalorder %s24, 0
          %s161 = scalar_select %p160, %s24, 0
          %s162 = smul.addr %s161, 54
          %s163 = smul.addr %s159, 54
          %s164 = sadd.s32 %s162, %s163
          %s165 = smul.addr %s164, 4
          %s166 = scalar_lea.vmem %s0, %s165
        $region24: #{tpu_custom_call.1} parent=19 // pred_fallthru
          _
      $region20: #{tpu_custom_call.1} parent=5 // pred_fallthru
        _
      %p167 = scmp.le.s32.totalorder 1, %s16
      %p168 = scmp.lt.s32.totalorder %s16, 3
      %p169 = pnand %p167, %p168
      %p170 = pneg %p169
      // Predicated region
      $region25: #{tpu_custom_call.1} parent=5 // pred_check
        _
      $region26: #{tpu_custom_call.1} parent=5 // pred_check_branch
        %172 = sbr.rel (%p169) target = $region28
      $region27: #{tpu_custom_call.1} parent=5 // pred_region
        %s173 = ssub.s32 %s16, 1
        %p174 = scmp.lt.s32.totalorder %s25, 1
        %s175 = scalar_select %p174, %s25, 1
        %p176 = scmp.lt.s32.totalorder %s26, 0
        %s177 = scalar_select %p176, %s26, 0
        %s178 = smul.addr %s177, 54
        %s179 = smul.addr %s175, 54
        %s180 = sadd.s32 %s178, %s179
        %s181 = smul.addr %s180, 4
        %s182 = scalar_lea.vmem %s0, %s181
        %p183 = pneg %p56
        %p184 = pneg %p53
        %p185 = pneg %p77
        %p186 = pneg %p74
        %p187 = pneg %p105
        %p188 = pneg %p102
        %s189 = sand.u32 %s92, 1
        %s190 = scalar_lea.sflag [#allocation3], %s189
        %s191 = sand.u32 %s92, 1
        %s192 = smul.addr %s191, 128
        %s193 = scalar_lea.vmem [#allocation2], %s192
        %p194 = pneg %p133
        %p195 = pneg %p130
        %s196 = sand.u32 %s120, 1
        %s197 = scalar_lea.sflag [#allocation5], %s196
        %s198 = sand.u32 %s120, 1
        %s199 = smul.addr %s198, 2
        %s200 = scalar_lea.vmem [#allocation4], %s199
        %p201 = scmp.lt.s32.totalorder %s25, 1
        %s202 = scalar_select %p201, %s25, 1
        %p203 = scmp.lt.s32.totalorder %s26, 0
        %s204 = scalar_select %p203, %s26, 0
        %s205 = smul.addr %s204, 54
        %s206 = smul.addr %s202, 54
        %s207 = sadd.s32 %s205, %s206
        %s208 = smul.addr %s207, 4
        %s209 = scalar_lea.vmem %s0, %s208
        %s210 = sadd.s32 %s25, %s26
        %s211 = smul.u32 32, %s210
        %s212 = sadd.s32 %s25, %s26
        %v214 = vld [vmem:[%s209] sm:$0xf]
        %v215 = vld [vmem:[%s209 + $0x4] sm:$0xf]
        %v216 = vld [vmem:[%s209 + $0xc] sm:$0xf]
        %v217 = vld [vmem:[%s209 + $0x10] sm:$0xf]
        %v218 = vld [vmem:[%s209 + $0x18] sm:$0xf]
        %v219 = vld [vmem:[%s209 + $0x1c] sm:$0xf]
        %v220 = vld [vmem:[%s209 + $0x24] sm:$0xf]
        %v221 = vld [vmem:[%s209 + $0x28] sm:$0xf]
        %v222 = vld [vmem:[%s209 + $0x30] sm:$0xf]
        %v223 = vld [vmem:[%s209 + $0x34] sm:$0xf]
        %v224 = vld [vmem:[%s209 + $0x3c] sm:$0xf]
        %v225 = vld [vmem:[%s209 + $0x40] sm:$0xf]
        %v226 = vld [vmem:[%s209 + $0x48] sm:$0xf]
        %v227 = vld [vmem:[%s209 + $0x4c] sm:$0xf]
        %v228 = vld [vmem:[%s209 + $0x54] sm:$0xf]
        %v229 = vld [vmem:[%s209 + $0x58] sm:$0xf]
        %v230 = vld [vmem:[%s209 + $0x60] sm:$0xf]
        %v231 = vld [vmem:[%s209 + $0x64] sm:$0xf]
        %v232 = vld [vmem:[%s209 + $0x6c] sm:$0xf]
        %v233 = vld [vmem:[%s209 + $0x70] sm:$0xf]
        %v234 = vld [vmem:[%s209 + $0x78] sm:$0xf]
        %v235 = vld [vmem:[%s209 + $0x7c] sm:$0xf]
        %v236 = vld [vmem:[%s209 + $0x84] sm:$0xf]
        %v237 = vld [vmem:[%s209 + $0x88] sm:$0xf]
        %v238 = vld [vmem:[%s209 + $0x90] sm:$0xf]
        %v239 = vld [vmem:[%s209 + $0x94] sm:$0xf]
        %v240 = vld [vmem:[%s209 + $0x9c] sm:$0xf]
        %v241 = vld [vmem:[%s209 + $0xa0] sm:$0xf]
        %v242 = vld [vmem:[%s209 + $0xa8] sm:$0xf]
        %v243 = vld [vmem:[%s209 + $0xac] sm:$0xf]
        %v244 = vld [vmem:[%s209 + $0xb4] sm:$0xf]
        %v245 = vld [vmem:[%s209 + $0xb8] sm:$0xf]
        %v246 = vld [vmem:[%s1] sm:$0xf]
        %v247 = vld [vmem:[%s209 + $0x8] sm:$0x1]
        %v248 = vld [vmem:[%s209 + $0x14] sm:$0x1]
        %v249 = vld [vmem:[%s209 + $0x20] sm:$0x1]
        %v250 = vld [vmem:[%s209 + $0x2c] sm:$0x1]
        %v251 = vld [vmem:[%s209 + $0x38] sm:$0x1]
        %v252 = vld [vmem:[%s209 + $0x44] sm:$0x1]
        %v253 = vld [vmem:[%s209 + $0x50] sm:$0x1]
        %v254 = vld [vmem:[%s209 + $0x5c] sm:$0x1]
        %v255 = vld [vmem:[%s209 + $0x68] sm:$0x1]
        %v256 = vld [vmem:[%s209 + $0x74] sm:$0x1]
        %v257 = vld [vmem:[%s209 + $0x80] sm:$0x1]
        %v258 = vld [vmem:[%s209 + $0x8c] sm:$0x1]
        %v259 = vld [vmem:[%s209 + $0x98] sm:$0x1]
        %v260 = vld [vmem:[%s209 + $0xa4] sm:$0x1]
        %v261 = vld [vmem:[%s209 + $0xb0] sm:$0x1]
        %v262 = vld [vmem:[%s209 + $0xbc] sm:$0x1]
        %vm263 = vsmask.f32 3328
        %vm264 = vsmask.f32 7440
        %vm265 = vmor %vm263, %vm264
        %v267 = vshrl.u32 %v214, 16
        %v269 = vrot.slane %v267, 4
        %v270 = vshll.u32 %v214, 16
        %v272 = vrot.slane %v270, 5
        %v273 = vor.u32 %v269, %v272
        %v274 = vrot.slane %v273, 4
        %v276 = vshll.u32 %v215, 16
        %v278 = vrot.slane %v276, 5
        %v279 = vsel %vm265, %v274, %v278
        %v280 = vshrl.u32 %v215, 16
        %v282 = vrot.slane %v280, 4
        %v283 = vor.u32 %v282, %v278
        %v284 = vrot.slane %v283, 4
        %v286 = vshll.u32 %v247, 16
        %v288 = vrot.slane %v286, 5
        %v289 = vsel %vm265, %v284, %v288
        %v291 = vshrl.u32 %v216, 16
        %v293 = vrot.slane %v291, 4
        %v294 = vshll.u32 %v216, 16
        %v296 = vrot.slane %v294, 5
        %v297 = vor.u32 %v293, %v296
        %v298 = vrot.slane %v297, 4
        %v300 = vshll.u32 %v217, 16
        %v302 = vrot.slane %v300, 5
        %v303 = vsel %vm265, %v298, %v302
        %v304 = vshrl.u32 %v217, 16
        %v306 = vrot.slane %v304, 4
        %v307 = vor.u32 %v306, %v302
        %v308 = vrot.slane %v307, 4
        %v310 = vshll.u32 %v248, 16
        %v312 = vrot.slane %v310, 5
        %v313 = vsel %vm265, %v308, %v312
        %v315 = vshrl.u32 %v218, 16
        %v317 = vrot.slane %v315, 4
        %v318 = vshll.u32 %v218, 16
        %v320 = vrot.slane %v318, 5
        %v321 = vor.u32 %v317, %v320
        %v322 = vrot.slane %v321, 4
        %v324 = vshll.u32 %v219, 16
        %v326 = vrot.slane %v324, 5
        %v327 = vsel %vm265, %v322, %v326
        %v328 = vshrl.u32 %v219, 16
        %v330 = vrot.slane %v328, 4
        %v331 = vor.u32 %v330, %v326
        %v332 = vrot.slane %v331, 4
        %v334 = vshll.u32 %v249, 16
        %v336 = vrot.slane %v334, 5
        %v337 = vsel %vm265, %v332, %v336
        %v339 = vshrl.u32 %v220, 16
        %v341 = vrot.slane %v339, 4
        %v342 = vshll.u32 %v220, 16
        %v344 = vrot.slane %v342, 5
        %v345 = vor.u32 %v341, %v344
        %v346 = vrot.slane %v345, 4
        %v348 = vshll.u32 %v221, 16
        %v350 = vrot.slane %v348, 5
        %v351 = vsel %vm265, %v346, %v350
        %v352 = vshrl.u32 %v221, 16
        %v354 = vrot.slane %v352, 4
        %v355 = vor.u32 %v354, %v350
        %v356 = vrot.slane %v355, 4
        %v358 = vshll.u32 %v250, 16
        %v360 = vrot.slane %v358, 5
        %v361 = vsel %vm265, %v356, %v360
        %v363 = vshrl.u32 %v222, 16
        %v365 = vrot.slane %v363, 4
        %v366 = vshll.u32 %v222, 16
        %v368 = vrot.slane %v366, 5
        %v369 = vor.u32 %v365, %v368
        %v370 = vrot.slane %v369, 4
        %v372 = vshll.u32 %v223, 16
        %v374 = vrot.slane %v372, 5
        %v375 = vsel %vm265, %v370, %v374
        %v376 = vshrl.u32 %v223, 16
        %v378 = vrot.slane %v376, 4
        %v379 = vor.u32 %v378, %v374
        %v380 = vrot.slane %v379, 4
        %v382 = vshll.u32 %v251, 16
        %v384 = vrot.slane %v382, 5
        %v385 = vsel %vm265, %v380, %v384
        %v387 = vshrl.u32 %v224, 16
        %v389 = vrot.slane %v387, 4
        %v390 = vshll.u32 %v224, 16
        %v392 = vrot.slane %v390, 5
        %v393 = vor.u32 %v389, %v392
        %v394 = vrot.slane %v393, 4
        %v396 = vshll.u32 %v225, 16
        %v398 = vrot.slane %v396, 5
        %v399 = vsel %vm265, %v394, %v398
        %v400 = vshrl.u32 %v225, 16
        %v402 = vrot.slane %v400, 4
        %v403 = vor.u32 %v402, %v398
        %v404 = vrot.slane %v403, 4
        %v406 = vshll.u32 %v252, 16
        %v408 = vrot.slane %v406, 5
        %v409 = vsel %vm265, %v404, %v408
        %v411 = vshrl.u32 %v226, 16
        %v413 = vrot.slane %v411, 4
        %v414 = vshll.u32 %v226, 16
        %v416 = vrot.slane %v414, 5
        %v417 = vor.u32 %v413, %v416
        %v418 = vrot.slane %v417, 4
        %v420 = vshll.u32 %v227, 16
        %v422 = vrot.slane %v420, 5
        %v423 = vsel %vm265, %v418, %v422
        %v424 = vshrl.u32 %v227, 16
        %v426 = vrot.slane %v424, 4
        %v427 = vor.u32 %v426, %v422
        %v428 = vrot.slane %v427, 4
        %v430 = vshll.u32 %v253, 16
        %v432 = vrot.slane %v430, 5
        %v433 = vsel %vm265, %v428, %v432
        %v435 = vshrl.u32 %v228, 16
        %v437 = vrot.slane %v435, 4
        %v438 = vshll.u32 %v228, 16
        %v440 = vrot.slane %v438, 5
        %v441 = vor.u32 %v437, %v440
        %v442 = vrot.slane %v441, 4
        %v444 = vshll.u32 %v229, 16
        %v446 = vrot.slane %v444, 5
        %v447 = vsel %vm265, %v442, %v446
        %v448 = vshrl.u32 %v229, 16
        %v450 = vrot.slane %v448, 4
        %v451 = vor.u32 %v450, %v446
        %v452 = vrot.slane %v451, 4
        %v454 = vshll.u32 %v254, 16
        %v456 = vrot.slane %v454, 5
        %v457 = vsel %vm265, %v452, %v456
        %v459 = vshrl.u32 %v230, 16
        %v461 = vrot.slane %v459, 4
        %v462 = vshll.u32 %v230, 16
        %v464 = vrot.slane %v462, 5
        %v465 = vor.u32 %v461, %v464
        %v466 = vrot.slane %v465, 4
        %v468 = vshll.u32 %v231, 16
        %v470 = vrot.slane %v468, 5
        %v471 = vsel %vm265, %v466, %v470
        %v472 = vshrl.u32 %v231, 16
        %v474 = vrot.slane %v472, 4
        %v475 = vor.u32 %v474, %v470
        %v476 = vrot.slane %v475, 4
        %v478 = vshll.u32 %v255, 16
        %v480 = vrot.slane %v478, 5
        %v481 = vsel %vm265, %v476, %v480
        %v483 = vshrl.u32 %v232, 16
        %v485 = vrot.slane %v483, 4
        %v486 = vshll.u32 %v232, 16
        %v488 = vrot.slane %v486, 5
        %v489 = vor.u32 %v485, %v488
        %v490 = vrot.slane %v489, 4
        %v492 = vshll.u32 %v233, 16
        %v494 = vrot.slane %v492, 5
        %v495 = vsel %vm265, %v490, %v494
        %v496 = vshrl.u32 %v233, 16
        %v498 = vrot.slane %v496, 4
        %v499 = vor.u32 %v498, %v494
        %v500 = vrot.slane %v499, 4
        %v502 = vshll.u32 %v256, 16
        %v504 = vrot.slane %v502, 5
        %v505 = vsel %vm265, %v500, %v504
        %v507 = vshrl.u32 %v234, 16
        %v509 = vrot.slane %v507, 4
        %v510 = vshll.u32 %v234, 16
        %v512 = vrot.slane %v510, 5
        %v513 = vor.u32 %v509, %v512
        %v514 = vrot.slane %v513, 4
        %v516 = vshll.u32 %v235, 16
        %v518 = vrot.slane %v516, 5
        %v519 = vsel %vm265, %v514, %v518
        %v520 = vshrl.u32 %v235, 16
        %v522 = vrot.slane %v520, 4
        %v523 = vor.u32 %v522, %v518
        %v524 = vrot.slane %v523, 4
        %v526 = vshll.u32 %v257, 16
        %v528 = vrot.slane %v526, 5
        %v529 = vsel %vm265, %v524, %v528
        %v531 = vshrl.u32 %v236, 16
        %v533 = vrot.slane %v531, 4
        %v534 = vshll.u32 %v236, 16
        %v536 = vrot.slane %v534, 5
        %v537 = vor.u32 %v533, %v536
        %v538 = vrot.slane %v537, 4
        %v540 = vshll.u32 %v237, 16
        %v542 = vrot.slane %v540, 5
        %v543 = vsel %vm265, %v538, %v542
        %v544 = vshrl.u32 %v237, 16
        %v546 = vrot.slane %v544, 4
        %v547 = vor.u32 %v546, %v542
        %v548 = vrot.slane %v547, 4
        %v550 = vshll.u32 %v258, 16
        %v552 = vrot.slane %v550, 5
        %v553 = vsel %vm265, %v548, %v552
        %v555 = vshrl.u32 %v238, 16
        %v557 = vrot.slane %v555, 4
        %v558 = vshll.u32 %v238, 16
        %v560 = vrot.slane %v558, 5
        %v561 = vor.u32 %v557, %v560
        %v562 = vrot.slane %v561, 4
        %v564 = vshll.u32 %v239, 16
        %v566 = vrot.slane %v564, 5
        %v567 = vsel %vm265, %v562, %v566
        %v568 = vshrl.u32 %v239, 16
        %v570 = vrot.slane %v568, 4
        %v571 = vor.u32 %v570, %v566
        %v572 = vrot.slane %v571, 4
        %v574 = vshll.u32 %v259, 16
        %v576 = vrot.slane %v574, 5
        %v577 = vsel %vm265, %v572, %v576
        %v579 = vshrl.u32 %v240, 16
        %v581 = vrot.slane %v579, 4
        %v582 = vshll.u32 %v240, 16
        %v584 = vrot.slane %v582, 5
        %v585 = vor.u32 %v581, %v584
        %v586 = vrot.slane %v585, 4
        %v588 = vshll.u32 %v241, 16
        %v590 = vrot.slane %v588, 5
        %v591 = vsel %vm265, %v586, %v590
        %v592 = vshrl.u32 %v241, 16
        %v594 = vrot.slane %v592, 4
        %v595 = vor.u32 %v594, %v590
        %v596 = vrot.slane %v595, 4
        %v598 = vshll.u32 %v260, 16
        %v600 = vrot.slane %v598, 5
        %v601 = vsel %vm265, %v596, %v600
        %v603 = vshrl.u32 %v242, 16
        %v605 = vrot.slane %v603, 4
        %v606 = vshll.u32 %v242, 16
        %v608 = vrot.slane %v606, 5
        %v609 = vor.u32 %v605, %v608
        %v610 = vrot.slane %v609, 4
        %v612 = vshll.u32 %v243, 16
        %v614 = vrot.slane %v612, 5
        %v615 = vsel %vm265, %v610, %v614
        %v616 = vshrl.u32 %v243, 16
        %v618 = vrot.slane %v616, 4
        %v619 = vor.u32 %v618, %v614
        %v620 = vrot.slane %v619, 4
        %v622 = vshll.u32 %v261, 16
        %v624 = vrot.slane %v622, 5
        %v625 = vsel %vm265, %v620, %v624
        %v627 = vshrl.u32 %v244, 16
        %v629 = vrot.slane %v627, 4
        %v630 = vshll.u32 %v244, 16
        %v632 = vrot.slane %v630, 5
        %v633 = vor.u32 %v629, %v632
        %v634 = vrot.slane %v633, 4
        %v636 = vshll.u32 %v245, 16
        %v638 = vrot.slane %v636, 5
        %v639 = vsel %vm265, %v634, %v638
        %v640 = vshrl.u32 %v245, 16
        %v642 = vrot.slane %v640, 4
        %v643 = vor.u32 %v642, %v638
        %v644 = vrot.slane %v643, 4
        %v646 = vshll.u32 %v262, 16
        %v648 = vrot.slane %v646, 5
        %v649 = vsel %vm265, %v644, %v648
        %s650 = scalar_lea.vmem %s1, 4
        %v651 = vld [vmem:[%s650] sm:$0xf]
        %v652 = vunpack.c.l.b16 %v279
        %v653 = vunpack.c.l.b16 %v289
        %v654 = vunpack.c.l.b16 %v303
        %v655 = vunpack.c.l.b16 %v313
        %v656 = vunpack.c.l.b16 %v327
        %v657 = vunpack.c.l.b16 %v337
        %v658 = vunpack.c.l.b16 %v351
        %v659 = vunpack.c.l.b16 %v361
        %v660 = vunpack.c.l.b16 %v375
        %v661 = vunpack.c.l.b16 %v385
        %v662 = vunpack.c.l.b16 %v399
        %v663 = vunpack.c.l.b16 %v409
        %v664 = vunpack.c.l.b16 %v423
        %v665 = vunpack.c.l.b16 %v433
        %v666 = vunpack.c.l.b16 %v447
        %v667 = vunpack.c.l.b16 %v457
        %v668 = vunpack.c.l.b16 %v471
        %v669 = vunpack.c.l.b16 %v481
        %v670 = vunpack.c.l.b16 %v495
        %v671 = vunpack.c.l.b16 %v505
        %v672 = vunpack.c.l.b16 %v519
        %v673 = vunpack.c.l.b16 %v529
        %v674 = vunpack.c.l.b16 %v543
        %v675 = vunpack.c.l.b16 %v553
        %v676 = vunpack.c.l.b16 %v567
        %v677 = vunpack.c.l.b16 %v577
        %v678 = vunpack.c.l.b16 %v591
        %v679 = vunpack.c.l.b16 %v601
        %v680 = vunpack.c.l.b16 %v615
        %v681 = vunpack.c.l.b16 %v625
        %v682 = vunpack.c.l.b16 %v639
        %v683 = vunpack.c.l.b16 %v649
        %v684 = vpack.c.b16 %v653, %v652
        %v685 = vpack.c.b16 %v655, %v654
        %v686 = vpack.c.b16 %v657, %v656
        %v687 = vpack.c.b16 %v659, %v658
        %v688 = vpack.c.b16 %v661, %v660
        %v689 = vpack.c.b16 %v663, %v662
        %v690 = vpack.c.b16 %v665, %v664
        %v691 = vpack.c.b16 %v667, %v666
        %v692 = vpack.c.b16 %v669, %v668
        %v693 = vpack.c.b16 %v671, %v670
        %v694 = vpack.c.b16 %v673, %v672
        %v695 = vpack.c.b16 %v675, %v674
        %v696 = vpack.c.b16 %v677, %v676
        %v697 = vpack.c.b16 %v679, %v678
        %v698 = vpack.c.b16 %v681, %v680
        %v699 = vpack.c.b16 %v683, %v682
        %vm700 = vcmask 64512
        %v702 = vsel %vm700, %v684, 0
        %v705 = vsel %vm700, %v685, 0
        %v708 = vsel %vm700, %v686, 0
        %v711 = vsel %vm700, %v687, 0
        %v714 = vsel %vm700, %v688, 0
        %v717 = vsel %vm700, %v689, 0
        %v720 = vsel %vm700, %v690, 0
        %v723 = vsel %vm700, %v691, 0
        %v726 = vsel %vm700, %v692, 0
        %v729 = vsel %vm700, %v693, 0
        %v732 = vsel %vm700, %v694, 0
        %v735 = vsel %vm700, %v695, 0
        %v738 = vsel %vm700, %v696, 0
        %v741 = vsel %vm700, %v697, 0
        %v744 = vsel %vm700, %v698, 0
        %v747 = vsel %vm700, %v699, 0
        %vm749 = vcmask 1043456
        %v751 = vsel %vm749, %v651, 0
        %753 = vmatprep.subr.bf16.mxu0 0
        %754 = vmatpush1.bf16.msra.mxu0 %v751
        %755 = vmatprep.subr.bf16.mxu0 0
        %756 = vmatpush1.bf16.msra.mxu0 0
        %757 = vmatprep.subr.bf16.mxu0 0
        %758 = vmatpush1.bf16.msra.mxu0 0
        %759 = vmatprep.subr.bf16.mxu0 0
        %760 = vmatpush1.bf16.msra.mxu0 0
        %761 = vmatprep.subr.bf16.mxu0 0
        %762 = vmatpush1.bf16.msra.mxu0 0
        %763 = vmatprep.subr.bf16.mxu0 0
        %764 = vmatpush1.bf16.msra.mxu0 0
        %765 = vmatprep.subr.bf16.mxu0 0
        %766 = vmatpush1.bf16.msra.mxu0 0
        %767 = vmatprep.subr.bf16.mxu0 0
        %768 = vmatpush1.bf16.msra.mxu0 0
        %769 = vmatprep.subr.bf16.mxu0 0
        %770 = vmatpush1.bf16.msra.mxu0 0
        %771 = vmatprep.subr.bf16.mxu0 0
        %772 = vmatpush1.bf16.msra.mxu0 0
        %773 = vmatprep.subr.bf16.mxu0 0
        %774 = vmatpush1.bf16.msra.mxu0 0
        %775 = vmatprep.subr.bf16.mxu0 0
        %776 = vmatpush1.bf16.msra.mxu0 0
        %777 = vmatprep.subr.bf16.mxu0 0
        %778 = vmatpush1.bf16.msra.mxu0 0
        %779 = vmatprep.subr.bf16.mxu0 0
        %780 = vmatpush1.bf16.msra.mxu0 0
        %781 = vmatprep.subr.bf16.mxu0 0
        %782 = vmatpush1.bf16.msra.mxu0 0
        %783 = vmatprep.subr.bf16.mxu0 0
        %784 = vmatpush1.bf16.msra.mxu0 0
        %785 = vmatprep.mubr.bf16.mxu0 0
        %786 = vmatmul.mubr.bf16.gmra.mrb[0].mxu0 %v702
        %v787 = vpop.f32.mrb[0].mxu0
        %v788 = vadd.f32 0.0, %v787
        %v789 = vpop.f32.mrb[0].mxu0
        %v790 = vpop.f32.mrb[0].mxu0
        %v791 = vadd.f32 0.0, %v790
        %v792 = vpop.f32.mrb[0].mxu0
        %793 = vmatprep.mubr.bf16.mxu0 0
        %794 = vmatmul.mubr.bf16.gmra.mrb[0].mxu0 %v705
        %v795 = vpop.f32.mrb[0].mxu0
        %v796 = vadd.f32 0.0, %v795
        %v797 = vpop.f32.mrb[0].mxu0
        %v798 = vpop.f32.mrb[0].mxu0
        %v799 = vadd.f32 0.0, %v798
        %v800 = vpop.f32.mrb[0].mxu0
        %801 = vmatprep.mubr.bf16.mxu0 0
        %802 = vmatmul.mubr.bf16.gmra.mrb[0].mxu0 %v708
        %v803 = vpop.f32.mrb[0].mxu0
        %v804 = vadd.f32 0.0, %v803
        %v805 = vpop.f32.mrb[0].mxu0
        %v806 = vpop.f32.mrb[0].mxu0
        %v807 = vadd.f32 0.0, %v806
        %v808 = vpop.f32.mrb[0].mxu0
        %809 = vmatprep.mubr.bf16.mxu0 0
        %810 = vmatmul.mubr.bf16.gmra.mrb[0].mxu0 %v711
        %v811 = vpop.f32.mrb[0].mxu0
        %v812 = vadd.f32 0.0, %v811
        %v813 = vpop.f32.mrb[0].mxu0
        %v814 = vpop.f32.mrb[0].mxu0
        %v815 = vadd.f32 0.0, %v814
        %v816 = vpop.f32.mrb[0].mxu0
        %817 = vmatprep.mubr.bf16.mxu0 0
        %818 = vmatmul.mubr.bf16.gmra.mrb[0].mxu0 %v714
        %v819 = vpop.f32.mrb[0].mxu0
        %v820 = vadd.f32 0.0, %v819
        %v821 = vpop.f32.mrb[0].mxu0
        %v822 = vpop.f32.mrb[0].mxu0
        %v823 = vadd.f32 0.0, %v822
        %v824 = vpop.f32.mrb[0].mxu0
        %825 = vmatprep.mubr.bf16.mxu0 0
        %826 = vmatmul.mubr.bf16.gmra.mrb[0].mxu0 %v717
        %v827 = vpop.f32.mrb[0].mxu0
        %v828 = vadd.f32 0.0, %v827
        %v829 = vpop.f32.mrb[0].mxu0
        %v830 = vpop.f32.mrb[0].mxu0
        %v831 = vadd.f32 0.0, %v830
        %v832 = vpop.f32.mrb[0].mxu0
        %833 = vmatprep.mubr.bf16.mxu0 0
        %834 = vmatmul.mubr.bf16.gmra.mrb[0].mxu0 %v720
        %v835 = vpop.f32.mrb[0].mxu0
        %v836 = vadd.f32 0.0, %v835
        %v837 = vpop.f32.mrb[0].mxu0
        %v838 = vpop.f32.mrb[0].mxu0
        %v839 = vadd.f32 0.0, %v838
        %v840 = vpop.f32.mrb[0].mxu0
        %841 = vmatprep.mubr.bf16.mxu0 0
        %842 = vmatmul.mubr.bf16.gmra.mrb[0].mxu0 %v723
        %v843 = vpop.f32.mrb[0].mxu0
        %v844 = vadd.f32 0.0, %v843
        %v845 = vpop.f32.mrb[0].mxu0
        %v846 = vpop.f32.mrb[0].mxu0
        %v847 = vadd.f32 0.0, %v846
        %v848 = vpop.f32.mrb[0].mxu0
        %849 = vmatprep.mubr.bf16.mxu0 0
        %850 = vmatmul.mubr.bf16.gmra.mrb[0].mxu0 %v726
        %v851 = vpop.f32.mrb[0].mxu0
        %v852 = vadd.f32 0.0, %v851
        %v853 = vpop.f32.mrb[0].mxu0
        %v854 = vpop.f32.mrb[0].mxu0
        %v855 = vadd.f32 0.0, %v854
        %v856 = vpop.f32.mrb[0].mxu0
        %857 = vmatprep.mubr.bf16.mxu0 0
        %858 = vmatmul.mubr.bf16.gmra.mrb[0].mxu0 %v729
        %v859 = vpop.f32.mrb[0].mxu0
        %v860 = vadd.f32 0.0, %v859
        %v861 = vpop.f32.mrb[0].mxu0
        %v862 = vpop.f32.mrb[0].mxu0
        %v863 = vadd.f32 0.0, %v862
        %v864 = vpop.f32.mrb[0].mxu0
        %865 = vmatprep.mubr.bf16.mxu0 0
        %866 = vmatmul.mubr.bf16.gmra.mrb[0].mxu0 %v732
        %v867 = vpop.f32.mrb[0].mxu0
        %v868 = vadd.f32 0.0, %v867
        %v869 = vpop.f32.mrb[0].mxu0
        %v870 = vpop.f32.mrb[0].mxu0
        %v871 = vadd.f32 0.0, %v870
        %v872 = vpop.f32.mrb[0].mxu0
        %873 = vmatprep.mubr.bf16.mxu0 0
        %874 = vmatmul.mubr.bf16.gmra.mrb[0].mxu0 %v735
        %v875 = vpop.f32.mrb[0].mxu0
        %v876 = vadd.f32 0.0, %v875
        %v877 = vpop.f32.mrb[0].mxu0
        %v878 = vpop.f32.mrb[0].mxu0
        %v879 = vadd.f32 0.0, %v878
        %v880 = vpop.f32.mrb[0].mxu0
        %881 = vmatprep.mubr.bf16.mxu0 0
        %882 = vmatmul.mubr.bf16.gmra.mrb[0].mxu0 %v738
        %v883 = vpop.f32.mrb[0].mxu0
        %v884 = vadd.f32 0.0, %v883
        %v885 = vpop.f32.mrb[0].mxu0
        %v886 = vpop.f32.mrb[0].mxu0
        %v887 = vadd.f32 0.0, %v886
        %v888 = vpop.f32.mrb[0].mxu0
        %889 = vmatprep.mubr.bf16.mxu0 0
        %890 = vmatmul.mubr.bf16.gmra.mrb[0].mxu0 %v741
        %v891 = vpop.f32.mrb[0].mxu0
        %v892 = vadd.f32 0.0, %v891
        %v893 = vpop.f32.mrb[0].mxu0
        %v894 = vpop.f32.mrb[0].mxu0
        %v895 = vadd.f32 0.0, %v894
        %v896 = vpop.f32.mrb[0].mxu0
        %897 = vmatprep.mubr.bf16.mxu0 0
        %898 = vmatmul.mubr.bf16.gmra.mrb[0].mxu0 %v744
        %v899 = vpop.f32.mrb[0].mxu0
        %v900 = vadd.f32 0.0, %v899
        %v901 = vpop.f32.mrb[0].mxu0
        %v902 = vpop.f32.mrb[0].mxu0
        %v903 = vadd.f32 0.0, %v902
        %v904 = vpop.f32.mrb[0].mxu0
        %905 = vmatprep.mubr.bf16.mxu0 0
        %906 = vmatmul.mubr.bf16.gmra.mrb[0].mxu0 %v747
        %v907 = vpop.f32.mrb[0].mxu0
        %v908 = vadd.f32 0.0, %v907
        %v909 = vpop.f32.mrb[0].mxu0
        %v910 = vpop.f32.mrb[0].mxu0
        %v911 = vadd.f32 0.0, %v910
        %v912 = vpop.f32.mrb[0].mxu0
        %913 = vdwg.mxu0
        %v946 = vunpack.c.l.b16 %v214
        %v947 = vunpack.c.l.b16 %v215
        %v948 = vunpack.c.l.b16 %v216
        %v949 = vunpack.c.l.b16 %v217
        %v950 = vunpack.c.l.b16 %v218
        %v951 = vunpack.c.l.b16 %v219
        %v952 = vunpack.c.l.b16 %v220
        %v953 = vunpack.c.l.b16 %v221
        %v954 = vunpack.c.l.b16 %v222
        %v955 = vunpack.c.l.b16 %v223
        %v956 = vunpack.c.l.b16 %v224
        %v957 = vunpack.c.l.b16 %v225
        %v958 = vunpack.c.l.b16 %v226
        %v959 = vunpack.c.l.b16 %v227
        %v960 = vunpack.c.l.b16 %v228
        %v961 = vunpack.c.l.b16 %v229
        %v962 = vunpack.c.l.b16 %v230
        %v963 = vunpack.c.l.b16 %v231
        %v964 = vunpack.c.l.b16 %v232
        %v965 = vunpack.c.l.b16 %v233
        %v966 = vunpack.c.l.b16 %v234
        %v967 = vunpack.c.l.b16 %v235
        %v968 = vunpack.c.l.b16 %v236
        %v969 = vunpack.c.l.b16 %v237
        %v970 = vunpack.c.l.b16 %v238
        %v971 = vunpack.c.l.b16 %v239
        %v972 = vunpack.c.l.b16 %v240
        %v973 = vunpack.c.l.b16 %v241
        %v974 = vunpack.c.l.b16 %v242
        %v975 = vunpack.c.l.b16 %v243
        %v976 = vunpack.c.l.b16 %v244
        %v977 = vunpack.c.l.b16 %v245
        %v978 = vpack.c.b16 %v947, %v946
        %v979 = vpack.c.b16 %v949, %v948
        %v980 = vpack.c.b16 %v951, %v950
        %v981 = vpack.c.b16 %v953, %v952
        %v982 = vpack.c.b16 %v955, %v954
        %v983 = vpack.c.b16 %v957, %v956
        %v984 = vpack.c.b16 %v959, %v958
        %v985 = vpack.c.b16 %v961, %v960
        %v986 = vpack.c.b16 %v963, %v962
        %v987 = vpack.c.b16 %v965, %v964
        %v988 = vpack.c.b16 %v967, %v966
        %v989 = vpack.c.b16 %v969, %v968
        %v990 = vpack.c.b16 %v971, %v970
        %v991 = vpack.c.b16 %v973, %v972
        %v992 = vpack.c.b16 %v975, %v974
        %v993 = vpack.c.b16 %v977, %v976
        %v995 = vsel %vm700, %v978, 0
        %v998 = vsel %vm700, %v979, 0
        %v1001 = vsel %vm700, %v980, 0
        %v1004 = vsel %vm700, %v981, 0
        %v1007 = vsel %vm700, %v982, 0
        %v1010 = vsel %vm700, %v983, 0
        %v1013 = vsel %vm700, %v984, 0
        %v1016 = vsel %vm700, %v985, 0
        %v1019 = vsel %vm700, %v986, 0
        %v1022 = vsel %vm700, %v987, 0
        %v1025 = vsel %vm700, %v988, 0
        %v1028 = vsel %vm700, %v989, 0
        %v1031 = vsel %vm700, %v990, 0
        %v1034 = vsel %vm700, %v991, 0
        %v1037 = vsel %vm700, %v992, 0
        %v1040 = vsel %vm700, %v993, 0
        %v1043 = vsel %vm749, %v246, 0
        %1045 = vmatprep.subr.bf16.mxu0 0
        %1046 = vmatpush1.bf16.msra.mxu0 %v1043
        %1047 = vmatprep.subr.bf16.mxu0 0
        %1048 = vmatpush1.bf16.msra.mxu0 0
        %1049 = vmatprep.subr.bf16.mxu0 0
        %1050 = vmatpush1.bf16.msra.mxu0 0
        %1051 = vmatprep.subr.bf16.mxu0 0
        %1052 = vmatpush1.bf16.msra.mxu0 0
        %1053 = vmatprep.subr.bf16.mxu0 0
        %1054 = vmatpush1.bf16.msra.mxu0 0
        %1055 = vmatprep.subr.bf16.mxu0 0
        %1056 = vmatpush1.bf16.msra.mxu0 0
        %1057 = vmatprep.subr.bf16.mxu0 0
        %1058 = vmatpush1.bf16.msra.mxu0 0
        %1059 = vmatprep.subr.bf16.mxu0 0
        %1060 = vmatpush1.bf16.msra.mxu0 0
        %1061 = vmatprep.subr.bf16.mxu0 0
        %1062 = vmatpush1.bf16.msra.mxu0 0
        %1063 = vmatprep.subr.bf16.mxu0 0
        %1064 = vmatpush1.bf16.msra.mxu0 0
        %1065 = vmatprep.subr.bf16.mxu0 0
        %1066 = vmatpush1.bf16.msra.mxu0 0
        %1067 = vmatprep.subr.bf16.mxu0 0
        %1068 = vmatpush1.bf16.msra.mxu0 0
        %1069 = vmatprep.subr.bf16.mxu0 0
        %1070 = vmatpush1.bf16.msra.mxu0 0
        %1071 = vmatprep.subr.bf16.mxu0 0
        %1072 = vmatpush1.bf16.msra.mxu0 0
        %1073 = vmatprep.subr.bf16.mxu0 0
        %1074 = vmatpush1.bf16.msra.mxu0 0
        %1075 = vmatprep.subr.bf16.mxu0 0
        %1076 = vmatpush1.bf16.msra.mxu0 0
        %1077 = vmatprep.mubr.bf16.mxu0 0
        %1078 = vmatmul.mubr.bf16.gmra.mrb[0].mxu0 %v995
        %v1079 = vpop.f32.mrb[0].mxu0
        %v1080 = vadd.f32 %v788, %v1079
        %v1081 = vpop.f32.mrb[0].mxu0
        %v1082 = vpop.f32.mrb[0].mxu0
        %v1083 = vadd.f32 %v791, %v1082
        %v1084 = vpop.f32.mrb[0].mxu0
        %1085 = vmatprep.mubr.bf16.mxu0 0
        %1086 = vmatmul.mubr.bf16.gmra.mrb[0].mxu0 %v998
        %v1087 = vpop.f32.mrb[0].mxu0
        %v1088 = vadd.f32 %v796, %v1087
        %v1089 = vpop.f32.mrb[0].mxu0
        %v1090 = vpop.f32.mrb[0].mxu0
        %v1091 = vadd.f32 %v799, %v1090
        %v1092 = vpop.f32.mrb[0].mxu0
        %1093 = vmatprep.mubr.bf16.mxu0 0
        %1094 = vmatmul.mubr.bf16.gmra.mrb[0].mxu0 %v1001
        %v1095 = vpop.f32.mrb[0].mxu0
        %v1096 = vadd.f32 %v804, %v1095
        %v1097 = vpop.f32.mrb[0].mxu0
        %v1098 = vpop.f32.mrb[0].mxu0
        %v1099 = vadd.f32 %v807, %v1098
        %v1100 = vpop.f32.mrb[0].mxu0
        %1101 = vmatprep.mubr.bf16.mxu0 0
        %1102 = vmatmul.mubr.bf16.gmra.mrb[0].mxu0 %v1004
        %v1103 = vpop.f32.mrb[0].mxu0
        %v1104 = vadd.f32 %v812, %v1103
        %v1105 = vpop.f32.mrb[0].mxu0
        %v1106 = vpop.f32.mrb[0].mxu0
        %v1107 = vadd.f32 %v815, %v1106
        %v1108 = vpop.f32.mrb[0].mxu0
        %1109 = vmatprep.mubr.bf16.mxu0 0
        %1110 = vmatmul.mubr.bf16.gmra.mrb[0].mxu0 %v1007
        %v1111 = vpop.f32.mrb[0].mxu0
        %v1112 = vadd.f32 %v820, %v1111
        %v1113 = vpop.f32.mrb[0].mxu0
        %v1114 = vpop.f32.mrb[0].mxu0
        %v1115 = vadd.f32 %v823, %v1114
        %v1116 = vpop.f32.mrb[0].mxu0
        %1117 = vmatprep.mubr.bf16.mxu0 0
        %1118 = vmatmul.mubr.bf16.gmra.mrb[0].mxu0 %v1010
        %v1119 = vpop.f32.mrb[0].mxu0
        %v1120 = vadd.f32 %v828, %v1119
        %v1121 = vpop.f32.mrb[0].mxu0
        %v1122 = vpop.f32.mrb[0].mxu0
        %v1123 = vadd.f32 %v831, %v1122
        %v1124 = vpop.f32.mrb[0].mxu0
        %1125 = vmatprep.mubr.bf16.mxu0 0
        %1126 = vmatmul.mubr.bf16.gmra.mrb[0].mxu0 %v1013
        %v1127 = vpop.f32.mrb[0].mxu0
        %v1128 = vadd.f32 %v836, %v1127
        %v1129 = vpop.f32.mrb[0].mxu0
        %v1130 = vpop.f32.mrb[0].mxu0
        %v1131 = vadd.f32 %v839, %v1130
        %v1132 = vpop.f32.mrb[0].mxu0
        %1133 = vmatprep.mubr.bf16.mxu0 0
        %1134 = vmatmul.mubr.bf16.gmra.mrb[0].mxu0 %v1016
        %v1135 = vpop.f32.mrb[0].mxu0
        %v1136 = vadd.f32 %v844, %v1135
        %v1137 = vpop.f32.mrb[0].mxu0
        %v1138 = vpop.f32.mrb[0].mxu0
        %v1139 = vadd.f32 %v847, %v1138
        %v1140 = vpop.f32.mrb[0].mxu0
        %1141 = vmatprep.mubr.bf16.mxu0 0
        %1142 = vmatmul.mubr.bf16.gmra.mrb[0].mxu0 %v1019
        %v1143 = vpop.f32.mrb[0].mxu0
        %v1144 = vadd.f32 %v852, %v1143
        %v1145 = vpop.f32.mrb[0].mxu0
        %v1146 = vpop.f32.mrb[0].mxu0
        %v1147 = vadd.f32 %v855, %v1146
        %v1148 = vpop.f32.mrb[0].mxu0
        %1149 = vmatprep.mubr.bf16.mxu0 0
        %1150 = vmatmul.mubr.bf16.gmra.mrb[0].mxu0 %v1022
        %v1151 = vpop.f32.mrb[0].mxu0
        %v1152 = vadd.f32 %v860, %v1151
        %v1153 = vpop.f32.mrb[0].mxu0
        %v1154 = vpop.f32.mrb[0].mxu0
        %v1155 = vadd.f32 %v863, %v1154
        %v1156 = vpop.f32.mrb[0].mxu0
        %1157 = vmatprep.mubr.bf16.mxu0 0
        %1158 = vmatmul.mubr.bf16.gmra.mrb[0].mxu0 %v1025
        %v1159 = vpop.f32.mrb[0].mxu0
        %v1160 = vadd.f32 %v868, %v1159
        %v1161 = vpop.f32.mrb[0].mxu0
        %v1162 = vpop.f32.mrb[0].mxu0
        %v1163 = vadd.f32 %v871, %v1162
        %v1164 = vpop.f32.mrb[0].mxu0
        %1165 = vmatprep.mubr.bf16.mxu0 0
        %1166 = vmatmul.mubr.bf16.gmra.mrb[0].mxu0 %v1028
        %v1167 = vpop.f32.mrb[0].mxu0
        %v1168 = vadd.f32 %v876, %v1167
        %v1169 = vpop.f32.mrb[0].mxu0
        %v1170 = vpop.f32.mrb[0].mxu0
        %v1171 = vadd.f32 %v879, %v1170
        %v1172 = vpop.f32.mrb[0].mxu0
        %1173 = vmatprep.mubr.bf16.mxu0 0
        %1174 = vmatmul.mubr.bf16.gmra.mrb[0].mxu0 %v1031
        %v1175 = vpop.f32.mrb[0].mxu0
        %v1176 = vadd.f32 %v884, %v1175
        %v1177 = vpop.f32.mrb[0].mxu0
        %v1178 = vpop.f32.mrb[0].mxu0
        %v1179 = vadd.f32 %v887, %v1178
        %v1180 = vpop.f32.mrb[0].mxu0
        %1181 = vmatprep.mubr.bf16.mxu0 0
        %1182 = vmatmul.mubr.bf16.gmra.mrb[0].mxu0 %v1034
        %v1183 = vpop.f32.mrb[0].mxu0
        %v1184 = vadd.f32 %v892, %v1183
        %v1185 = vpop.f32.mrb[0].mxu0
        %v1186 = vpop.f32.mrb[0].mxu0
        %v1187 = vadd.f32 %v895, %v1186
        %v1188 = vpop.f32.mrb[0].mxu0
        %1189 = vmatprep.mubr.bf16.mxu0 0
        %1190 = vmatmul.mubr.bf16.gmra.mrb[0].mxu0 %v1037
        %v1191 = vpop.f32.mrb[0].mxu0
        %v1192 = vadd.f32 %v900, %v1191
        %v1193 = vpop.f32.mrb[0].mxu0
        %v1194 = vpop.f32.mrb[0].mxu0
        %v1195 = vadd.f32 %v903, %v1194
        %v1196 = vpop.f32.mrb[0].mxu0
        %1197 = vmatprep.mubr.bf16.mxu0 0
        %1198 = vmatmul.mubr.bf16.gmra.mrb[0].mxu0 %v1040
        %v1199 = vpop.f32.mrb[0].mxu0
        %v1200 = vadd.f32 %v908, %v1199
        %v1201 = vpop.f32.mrb[0].mxu0
        %v1202 = vpop.f32.mrb[0].mxu0
        %v1203 = vadd.f32 %v911, %v1202
        %v1204 = vpop.f32.mrb[0].mxu0
        %1205 = vdwg.mxu0
        %v1206 = vld [vmem:[%s209] sm:$0xe]
        %v1207 = vld [vmem:[%s209 + $0xc] sm:$0xe]
        %v1208 = vld [vmem:[%s209 + $0x18] sm:$0xe]
        %v1209 = vld [vmem:[%s209 + $0x24] sm:$0xe]
        %v1210 = vld [vmem:[%s209 + $0x30] sm:$0xe]
        %v1211 = vld [vmem:[%s209 + $0x3c] sm:$0xe]
        %v1212 = vld [vmem:[%s209 + $0x48] sm:$0xe]
        %v1213 = vld [vmem:[%s209 + $0x54] sm:$0xe]
        %v1214 = vld [vmem:[%s209 + $0x60] sm:$0xe]
        %v1215 = vld [vmem:[%s209 + $0x6c] sm:$0xe]
        %v1216 = vld [vmem:[%s209 + $0x78] sm:$0xe]
        %v1217 = vld [vmem:[%s209 + $0x84] sm:$0xe]
        %v1218 = vld [vmem:[%s209 + $0x90] sm:$0xe]
        %v1219 = vld [vmem:[%s209 + $0x9c] sm:$0xe]
        %v1220 = vld [vmem:[%s209 + $0xa8] sm:$0xe]
        %v1221 = vld [vmem:[%s209 + $0xb4] sm:$0xe]
        %vm1254 = vcmask 1042432
        %vm1255 = vcmask 1046532
        %vm1256 = vmor %vm1254, %vm1255
        %v1257 = vrot.slane %v1206, 5
        %v1258 = vrot.slane %v1257, 4
        %v1259 = vrot.slane %v215, 5
        %v1260 = vsel %vm1256, %v1258, %v1259
        %v1261 = vrot.slane %v1259, 4
        %v1262 = vrot.slane %v247, 5
        %v1263 = vsel %vm1256, %v1261, %v1262
        %v1264 = vrot.slane %v1207, 5
        %v1265 = vrot.slane %v1264, 4
        %v1266 = vrot.slane %v217, 5
        %v1267 = vsel %vm1256, %v1265, %v1266
        %v1268 = vrot.slane %v1266, 4
        %v1269 = vrot.slane %v248, 5
        %v1270 = vsel %vm1256, %v1268, %v1269
        %v1271 = vrot.slane %v1208, 5
        %v1272 = vrot.slane %v1271, 4
        %v1273 = vrot.slane %v219, 5
        %v1274 = vsel %vm1256, %v1272, %v1273
        %v1275 = vrot.slane %v1273, 4
        %v1276 = vrot.slane %v249, 5
        %v1277 = vsel %vm1256, %v1275, %v1276
        %v1278 = vrot.slane %v1209, 5
        %v1279 = vrot.slane %v1278, 4
        %v1280 = vrot.slane %v221, 5
        %v1281 = vsel %vm1256, %v1279, %v1280
        %v1282 = vrot.slane %v1280, 4
        %v1283 = vrot.slane %v250, 5
        %v1284 = vsel %vm1256, %v1282, %v1283
        %v1285 = vrot.slane %v1210, 5
        %v1286 = vrot.slane %v1285, 4
        %v1287 = vrot.slane %v223, 5
        %v1288 = vsel %vm1256, %v1286, %v1287
        %v1289 = vrot.slane %v1287, 4
        %v1290 = vrot.slane %v251, 5
        %v1291 = vsel %vm1256, %v1289, %v1290
        %v1292 = vrot.slane %v1211, 5
        %v1293 = vrot.slane %v1292, 4
        %v1294 = vrot.slane %v225, 5
        %v1295 = vsel %vm1256, %v1293, %v1294
        %v1296 = vrot.slane %v1294, 4
        %v1297 = vrot.slane %v252, 5
        %v1298 = vsel %vm1256, %v1296, %v1297
        %v1299 = vrot.slane %v1212, 5
        %v1300 = vrot.slane %v1299, 4
        %v1301 = vrot.slane %v227, 5
        %v1302 = vsel %vm1256, %v1300, %v1301
        %v1303 = vrot.slane %v1301, 4
        %v1304 = vrot.slane %v253, 5
        %v1305 = vsel %vm1256, %v1303, %v1304
        %v1306 = vrot.slane %v1213, 5
        %v1307 = vrot.slane %v1306, 4
        %v1308 = vrot.slane %v229, 5
        %v1309 = vsel %vm1256, %v1307, %v1308
        %v1310 = vrot.slane %v1308, 4
        %v1311 = vrot.slane %v254, 5
        %v1312 = vsel %vm1256, %v1310, %v1311
        %v1313 = vrot.slane %v1214, 5
        %v1314 = vrot.slane %v1313, 4
        %v1315 = vrot.slane %v231, 5
        %v1316 = vsel %vm1256, %v1314, %v1315
        %v1317 = vrot.slane %v1315, 4
        %v1318 = vrot.slane %v255, 5
        %v1319 = vsel %vm1256, %v1317, %v1318
        %v1320 = vrot.slane %v1215, 5
        %v1321 = vrot.slane %v1320, 4
        %v1322 = vrot.slane %v233, 5
        %v1323 = vsel %vm1256, %v1321, %v1322
        %v1324 = vrot.slane %v1322, 4
        %v1325 = vrot.slane %v256, 5
        %v1326 = vsel %vm1256, %v1324, %v1325
        %v1327 = vrot.slane %v1216, 5
        %v1328 = vrot.slane %v1327, 4
        %v1329 = vrot.slane %v235, 5
        %v1330 = vsel %vm1256, %v1328, %v1329
        %v1331 = vrot.slane %v1329, 4
        %v1332 = vrot.slane %v257, 5
        %v1333 = vsel %vm1256, %v1331, %v1332
        %v1334 = vrot.slane %v1217, 5
        %v1335 = vrot.slane %v1334, 4
        %v1336 = vrot.slane %v237, 5
        %v1337 = vsel %vm1256, %v1335, %v1336
        %v1338 = vrot.slane %v1336, 4
        %v1339 = vrot.slane %v258, 5
        %v1340 = vsel %vm1256, %v1338, %v1339
        %v1341 = vrot.slane %v1218, 5
        %v1342 = vrot.slane %v1341, 4
        %v1343 = vrot.slane %v239, 5
        %v1344 = vsel %vm1256, %v1342, %v1343
        %v1345 = vrot.slane %v1343, 4
        %v1346 = vrot.slane %v259, 5
        %v1347 = vsel %vm1256, %v1345, %v1346
        %v1348 = vrot.slane %v1219, 5
        %v1349 = vrot.slane %v1348, 4
        %v1350 = vrot.slane %v241, 5
        %v1351 = vsel %vm1256, %v1349, %v1350
        %v1352 = vrot.slane %v1350, 4
        %v1353 = vrot.slane %v260, 5
        %v1354 = vsel %vm1256, %v1352, %v1353
        %v1355 = vrot.slane %v1220, 5
        %v1356 = vrot.slane %v1355, 4
        %v1357 = vrot.slane %v243, 5
        %v1358 = vsel %vm1256, %v1356, %v1357
        %v1359 = vrot.slane %v1357, 4
        %v1360 = vrot.slane %v261, 5
        %v1361 = vsel %vm1256, %v1359, %v1360
        %v1362 = vrot.slane %v1221, 5
        %v1363 = vrot.slane %v1362, 4
        %v1364 = vrot.slane %v245, 5
        %v1365 = vsel %vm1256, %v1363, %v1364
        %v1366 = vrot.slane %v1364, 4
        %v1367 = vrot.slane %v262, 5
        %v1368 = vsel %vm1256, %v1366, %v1367
        %s1369 = scalar_lea.vmem %s1, 8
        %v1370 = vld [vmem:[%s1369] sm:$0xf]
        %v1371 = vunpack.c.l.b16 %v1260
        %v1372 = vunpack.c.l.b16 %v1263
        %v1373 = vunpack.c.l.b16 %v1267
        %v1374 = vunpack.c.l.b16 %v1270
        %v1375 = vunpack.c.l.b16 %v1274
        %v1376 = vunpack.c.l.b16 %v1277
        %v1377 = vunpack.c.l.b16 %v1281
        %v1378 = vunpack.c.l.b16 %v1284
        %v1379 = vunpack.c.l.b16 %v1288
        %v1380 = vunpack.c.l.b16 %v1291
        %v1381 = vunpack.c.l.b16 %v1295
        %v1382 = vunpack.c.l.b16 %v1298
        %v1383 = vunpack.c.l.b16 %v1302
        %v1384 = vunpack.c.l.b16 %v1305
        %v1385 = vunpack.c.l.b16 %v1309
        %v1386 = vunpack.c.l.b16 %v1312
        %v1387 = vunpack.c.l.b16 %v1316
        %v1388 = vunpack.c.l.b16 %v1319
        %v1389 = vunpack.c.l.b16 %v1323
        %v1390 = vunpack.c.l.b16 %v1326
        %v1391 = vunpack.c.l.b16 %v1330
        %v1392 = vunpack.c.l.b16 %v1333
        %v1393 = vunpack.c.l.b16 %v1337
        %v1394 = vunpack.c.l.b16 %v1340
        %v1395 = vunpack.c.l.b16 %v1344
        %v1396 = vunpack.c.l.b16 %v1347
        %v1397 = vunpack.c.l.b16 %v1351
        %v1398 = vunpack.c.l.b16 %v1354
        %v1399 = vunpack.c.l.b16 %v1358
        %v1400 = vunpack.c.l.b16 %v1361
        %v1401 = vunpack.c.l.b16 %v1365
        %v1402 = vunpack.c.l.b16 %v1368
        %v1403 = vpack.c.b16 %v1372, %v1371
        %v1404 = vpack.c.b16 %v1374, %v1373
        %v1405 = vpack.c.b16 %v1376, %v1375
        %v1406 = vpack.c.b16 %v1378, %v1377
        %v1407 = vpack.c.b16 %v1380, %v1379
        %v1408 = vpack.c.b16 %v1382, %v1381
        %v1409 = vpack.c.b16 %v1384, %v1383
        %v1410 = vpack.c.b16 %v1386, %v1385
        %v1411 = vpack.c.b16 %v1388, %v1387
        %v1412 = vpack.c.b16 %v1390, %v1389
        %v1413 = vpack.c.b16 %v1392, %v1391
        %v1414 = vpack.c.b16 %v1394, %v1393
        %v1415 = vpack.c.b16 %v1396, %v1395
        %v1416 = vpack.c.b16 %v1398, %v1397
        %v1417 = vpack.c.b16 %v1400, %v1399
        %v1418 = vpack.c.b16 %v1402, %v1401
        %v1420 = vsel %vm700, %v1403, 0
        %v1423 = vsel %vm700, %v1404, 0
        %v1426 = vsel %vm700, %v1405, 0
        %v1429 = vsel %vm700, %v1406, 0
        %v1432 = vsel %vm700, %v1407, 0
        %v1435 = vsel %vm700, %v1408, 0
        %v1438 = vsel %vm700, %v1409, 0
        %v1441 = vsel %vm700, %v1410, 0
        %v1444 = vsel %vm700, %v1411, 0
        %v1447 = vsel %vm700, %v1412, 0
        %v1450 = vsel %vm700, %v1413, 0
        %v1453 = vsel %vm700, %v1414, 0
        %v1456 = vsel %vm700, %v1415, 0
        %v1459 = vsel %vm700, %v1416, 0
        %v1462 = vsel %vm700, %v1417, 0
        %v1465 = vsel %vm700, %v1418, 0
        %v1468 = vsel %vm749, %v1370, 0
        %1470 = vmatprep.subr.bf16.mxu0 0
        %1471 = vmatpush1.bf16.msra.mxu0 %v1468
        %1472 = vmatprep.subr.bf16.mxu0 0
        %1473 = vmatpush1.bf16.msra.mxu0 0
        %1474 = vmatprep.subr.bf16.mxu0 0
        %1475 = vmatpush1.bf16.msra.mxu0 0
        %1476 = vmatprep.subr.bf16.mxu0 0
        %1477 = vmatpush1.bf16.msra.mxu0 0
        %1478 = vmatprep.subr.bf16.mxu0 0
        %1479 = vmatpush1.bf16.msra.mxu0 0
        %1480 = vmatprep.subr.bf16.mxu0 0
        %1481 = vmatpush1.bf16.msra.mxu0 0
        %1482 = vmatprep.subr.bf16.mxu0 0
        %1483 = vmatpush1.bf16.msra.mxu0 0
        %1484 = vmatprep.subr.bf16.mxu0 0
        %1485 = vmatpush1.bf16.msra.mxu0 0
        %1486 = vmatprep.subr.bf16.mxu0 0
        %1487 = vmatpush1.bf16.msra.mxu0 0
        %1488 = vmatprep.subr.bf16.mxu0 0
        %1489 = vmatpush1.bf16.msra.mxu0 0
        %1490 = vmatprep.subr.bf16.mxu0 0
        %1491 = vmatpush1.bf16.msra.mxu0 0
        %1492 = vmatprep.subr.bf16.mxu0 0
        %1493 = vmatpush1.bf16.msra.mxu0 0
        %1494 = vmatprep.subr.bf16.mxu0 0
        %1495 = vmatpush1.bf16.msra.mxu0 0
        %1496 = vmatprep.subr.bf16.mxu0 0
        %1497 = vmatpush1.bf16.msra.mxu0 0
        %1498 = vmatprep.subr.bf16.mxu0 0
        %1499 = vmatpush1.bf16.msra.mxu0 0
        %1500 = vmatprep.subr.bf16.mxu0 0
        %1501 = vmatpush1.bf16.msra.mxu0 0
        %1502 = vmatprep.mubr.bf16.mxu0 0
        %1503 = vmatmul.mubr.bf16.gmra.mrb[0].mxu0 %v1420
        %v1504 = vpop.f32.mrb[0].mxu0
        %v1505 = vadd.f32 0.0, %v1504
        %v1506 = vpop.f32.mrb[0].mxu0
        %v1507 = vpop.f32.mrb[0].mxu0
        %v1508 = vadd.f32 0.0, %v1507
        %v1509 = vpop.f32.mrb[0].mxu0
        %1510 = vmatprep.mubr.bf16.mxu0 0
        %1511 = vmatmul.mubr.bf16.gmra.mrb[0].mxu0 %v1423
        %v1512 = vpop.f32.mrb[0].mxu0
        %v1513 = vadd.f32 0.0, %v1512
        %v1514 = vpop.f32.mrb[0].mxu0
        %v1515 = vpop.f32.mrb[0].mxu0
        %v1516 = vadd.f32 0.0, %v1515
        %v1517 = vpop.f32.mrb[0].mxu0
        %1518 = vmatprep.mubr.bf16.mxu0 0
        %1519 = vmatmul.mubr.bf16.gmra.mrb[0].mxu0 %v1426
        %v1520 = vpop.f32.mrb[0].mxu0
        %v1521 = vadd.f32 0.0, %v1520
        %v1522 = vpop.f32.mrb[0].mxu0
        %v1523 = vpop.f32.mrb[0].mxu0
        %v1524 = vadd.f32 0.0, %v1523
        %v1525 = vpop.f32.mrb[0].mxu0
        %1526 = vmatprep.mubr.bf16.mxu0 0
        %1527 = vmatmul.mubr.bf16.gmra.mrb[0].mxu0 %v1429
        %v1528 = vpop.f32.mrb[0].mxu0
        %v1529 = vadd.f32 0.0, %v1528
        %v1530 = vpop.f32.mrb[0].mxu0
        %v1531 = vpop.f32.mrb[0].mxu0
        %v1532 = vadd.f32 0.0, %v1531
        %v1533 = vpop.f32.mrb[0].mxu0
        %1534 = vmatprep.mubr.bf16.mxu0 0
        %1535 = vmatmul.mubr.bf16.gmra.mrb[0].mxu0 %v1432
        %v1536 = vpop.f32.mrb[0].mxu0
        %v1537 = vadd.f32 0.0, %v1536
        %v1538 = vpop.f32.mrb[0].mxu0
        %v1539 = vpop.f32.mrb[0].mxu0
        %v1540 = vadd.f32 0.0, %v1539
        %v1541 = vpop.f32.mrb[0].mxu0
        %1542 = vmatprep.mubr.bf16.mxu0 0
        %1543 = vmatmul.mubr.bf16.gmra.mrb[0].mxu0 %v1435
        %v1544 = vpop.f32.mrb[0].mxu0
        %v1545 = vadd.f32 0.0, %v1544
        %v1546 = vpop.f32.mrb[0].mxu0
        %v1547 = vpop.f32.mrb[0].mxu0
        %v1548 = vadd.f32 0.0, %v1547
        %v1549 = vpop.f32.mrb[0].mxu0
        %1550 = vmatprep.mubr.bf16.mxu0 0
        %1551 = vmatmul.mubr.bf16.gmra.mrb[0].mxu0 %v1438
        %v1552 = vpop.f32.mrb[0].mxu0
        %v1553 = vadd.f32 0.0, %v1552
        %v1554 = vpop.f32.mrb[0].mxu0
        %v1555 = vpop.f32.mrb[0].mxu0
        %v1556 = vadd.f32 0.0, %v1555
        %v1557 = vpop.f32.mrb[0].mxu0
        %1558 = vmatprep.mubr.bf16.mxu0 0
        %1559 = vmatmul.mubr.bf16.gmra.mrb[0].mxu0 %v1441
        %v1560 = vpop.f32.mrb[0].mxu0
        %v1561 = vadd.f32 0.0, %v1560
        %v1562 = vpop.f32.mrb[0].mxu0
        %v1563 = vpop.f32.mrb[0].mxu0
        %v1564 = vadd.f32 0.0, %v1563
        %v1565 = vpop.f32.mrb[0].mxu0
        %1566 = vmatprep.mubr.bf16.mxu0 0
        %1567 = vmatmul.mubr.bf16.gmra.mrb[0].mxu0 %v1444
        %v1568 = vpop.f32.mrb[0].mxu0
        %v1569 = vadd.f32 0.0, %v1568
        %v1570 = vpop.f32.mrb[0].mxu0
        %v1571 = vpop.f32.mrb[0].mxu0
        %v1572 = vadd.f32 0.0, %v1571
        %v1573 = vpop.f32.mrb[0].mxu0
        %1574 = vmatprep.mubr.bf16.mxu0 0
        %1575 = vmatmul.mubr.bf16.gmra.mrb[0].mxu0 %v1447
        %v1576 = vpop.f32.mrb[0].mxu0
        %v1577 = vadd.f32 0.0, %v1576
        %v1578 = vpop.f32.mrb[0].mxu0
        %v1579 = vpop.f32.mrb[0].mxu0
        %v1580 = vadd.f32 0.0, %v1579
        %v1581 = vpop.f32.mrb[0].mxu0
        %1582 = vmatprep.mubr.bf16.mxu0 0
        %1583 = vmatmul.mubr.bf16.gmra.mrb[0].mxu0 %v1450
        %v1584 = vpop.f32.mrb[0].mxu0
        %v1585 = vadd.f32 0.0, %v1584
        %v1586 = vpop.f32.mrb[0].mxu0
        %v1587 = vpop.f32.mrb[0].mxu0
        %v1588 = vadd.f32 0.0, %v1587
        %v1589 = vpop.f32.mrb[0].mxu0
        %1590 = vmatprep.mubr.bf16.mxu0 0
        %1591 = vmatmul.mubr.bf16.gmra.mrb[0].mxu0 %v1453
        %v1592 = vpop.f32.mrb[0].mxu0
        %v1593 = vadd.f32 0.0, %v1592
        %v1594 = vpop.f32.mrb[0].mxu0
        %v1595 = vpop.f32.mrb[0].mxu0
        %v1596 = vadd.f32 0.0, %v1595
        %v1597 = vpop.f32.mrb[0].mxu0
        %1598 = vmatprep.mubr.bf16.mxu0 0
        %1599 = vmatmul.mubr.bf16.gmra.mrb[0].mxu0 %v1456
        %v1600 = vpop.f32.mrb[0].mxu0
        %v1601 = vadd.f32 0.0, %v1600
        %v1602 = vpop.f32.mrb[0].mxu0
        %v1603 = vpop.f32.mrb[0].mxu0
        %v1604 = vadd.f32 0.0, %v1603
        %v1605 = vpop.f32.mrb[0].mxu0
        %1606 = vmatprep.mubr.bf16.mxu0 0
        %1607 = vmatmul.mubr.bf16.gmra.mrb[0].mxu0 %v1459
        %v1608 = vpop.f32.mrb[0].mxu0
        %v1609 = vadd.f32 0.0, %v1608
        %v1610 = vpop.f32.mrb[0].mxu0
        %v1611 = vpop.f32.mrb[0].mxu0
        %v1612 = vadd.f32 0.0, %v1611
        %v1613 = vpop.f32.mrb[0].mxu0
        %1614 = vmatprep.mubr.bf16.mxu0 0
        %1615 = vmatmul.mubr.bf16.gmra.mrb[0].mxu0 %v1462
        %v1616 = vpop.f32.mrb[0].mxu0
        %v1617 = vadd.f32 0.0, %v1616
        %v1618 = vpop.f32.mrb[0].mxu0
        %v1619 = vpop.f32.mrb[0].mxu0
        %v1620 = vadd.f32 0.0, %v1619
        %v1621 = vpop.f32.mrb[0].mxu0
        %1622 = vmatprep.mubr.bf16.mxu0 0
        %1623 = vmatmul.mubr.bf16.gmra.mrb[0].mxu0 %v1465
        %v1624 = vpop.f32.mrb[0].mxu0
        %v1625 = vadd.f32 0.0, %v1624
        %v1626 = vpop.f32.mrb[0].mxu0
        %v1627 = vpop.f32.mrb[0].mxu0
        %v1628 = vadd.f32 0.0, %v1627
        %v1629 = vpop.f32.mrb[0].mxu0
        %1630 = vdwg.mxu0
        %v1631 = vadd.f32 %v1080, %v1505
        %v1632 = vadd.f32 %v1083, %v1508
        %v1633 = vadd.f32 %v1088, %v1513
        %v1634 = vadd.f32 %v1091, %v1516
        %v1635 = vadd.f32 %v1096, %v1521
        %v1636 = vadd.f32 %v1099, %v1524
        %v1637 = vadd.f32 %v1104, %v1529
        %v1638 = vadd.f32 %v1107, %v1532
        %v1639 = vadd.f32 %v1112, %v1537
        %v1640 = vadd.f32 %v1115, %v1540
        %v1641 = vadd.f32 %v1120, %v1545
        %v1642 = vadd.f32 %v1123, %v1548
        %v1643 = vadd.f32 %v1128, %v1553
        %v1644 = vadd.f32 %v1131, %v1556
        %v1645 = vadd.f32 %v1136, %v1561
        %v1646 = vadd.f32 %v1139, %v1564
        %v1647 = vadd.f32 %v1144, %v1569
        %v1648 = vadd.f32 %v1147, %v1572
        %v1649 = vadd.f32 %v1152, %v1577
        %v1650 = vadd.f32 %v1155, %v1580
        %v1651 = vadd.f32 %v1160, %v1585
        %v1652 = vadd.f32 %v1163, %v1588
        %v1653 = vadd.f32 %v1168, %v1593
        %v1654 = vadd.f32 %v1171, %v1596
        %v1655 = vadd.f32 %v1176, %v1601
        %v1656 = vadd.f32 %v1179, %v1604
        %v1657 = vadd.f32 %v1184, %v1609
        %v1658 = vadd.f32 %v1187, %v1612
        %v1659 = vadd.f32 %v1192, %v1617
        %v1660 = vadd.f32 %v1195, %v1620
        %v1661 = vadd.f32 %v1200, %v1625
        %v1662 = vadd.f32 %v1203, %v1628
        %s1663 = scalar_lea.vmem %s209, 12
        %v1664 = vld [vmem:[%s1663] sm:$0xf]
        %v1665 = vld [vmem:[%s1663 + $0x4] sm:$0xf]
        %v1666 = vld [vmem:[%s1663 + $0xc] sm:$0xf]
        %v1667 = vld [vmem:[%s1663 + $0x10] sm:$0xf]
        %v1668 = vld [vmem:[%s1663 + $0x18] sm:$0xf]
        %v1669 = vld [vmem:[%s1663 + $0x1c] sm:$0xf]
        %v1670 = vld [vmem:[%s1663 + $0x24] sm:$0xf]
        %v1671 = vld [vmem:[%s1663 + $0x28] sm:$0xf]
        %v1672 = vld [vmem:[%s1663 + $0x30] sm:$0xf]
        %v1673 = vld [vmem:[%s1663 + $0x34] sm:$0xf]
        %v1674 = vld [vmem:[%s1663 + $0x3c] sm:$0xf]
        %v1675 = vld [vmem:[%s1663 + $0x40] sm:$0xf]
        %v1676 = vld [vmem:[%s1663 + $0x48] sm:$0xf]
        %v1677 = vld [vmem:[%s1663 + $0x4c] sm:$0xf]
        %v1678 = vld [vmem:[%s1663 + $0x54] sm:$0xf]
        %v1679 = vld [vmem:[%s1663 + $0x58] sm:$0xf]
        %v1680 = vld [vmem:[%s1663 + $0x60] sm:$0xf]
        %v1681 = vld [vmem:[%s1663 + $0x64] sm:$0xf]
        %v1682 = vld [vmem:[%s1663 + $0x6c] sm:$0xf]
        %v1683 = vld [vmem:[%s1663 + $0x70] sm:$0xf]
        %v1684 = vld [vmem:[%s1663 + $0x78] sm:$0xf]
        %v1685 = vld [vmem:[%s1663 + $0x7c] sm:$0xf]
        %v1686 = vld [vmem:[%s1663 + $0x84] sm:$0xf]
        %v1687 = vld [vmem:[%s1663 + $0x88] sm:$0xf]
        %v1688 = vld [vmem:[%s1663 + $0x90] sm:$0xf]
        %v1689 = vld [vmem:[%s1663 + $0x94] sm:$0xf]
        %v1690 = vld [vmem:[%s1663 + $0x9c] sm:$0xf]
        %v1691 = vld [vmem:[%s1663 + $0xa0] sm:$0xf]
        %v1692 = vld [vmem:[%s1663 + $0xa8] sm:$0xf]
        %v1693 = vld [vmem:[%s1663 + $0xac] sm:$0xf]
        %v1694 = vld [vmem:[%s1663 + $0xb4] sm:$0xf]
        %v1695 = vld [vmem:[%s1663 + $0xb8] sm:$0xf]
        %s1696 = scalar_lea.vmem %s1, 12
        %v1697 = vld [vmem:[%s1696] sm:$0xf]
        %v1730 = vunpack.c.l.b16 %v1664
        %v1731 = vunpack.c.l.b16 %v1665
        %v1732 = vunpack.c.l.b16 %v1666
        %v1733 = vunpack.c.l.b16 %v1667
        %v1734 = vunpack.c.l.b16 %v1668
        %v1735 = vunpack.c.l.b16 %v1669
        %v1736 = vunpack.c.l.b16 %v1670
        %v1737 = vunpack.c.l.b16 %v1671
        %v1738 = vunpack.c.l.b16 %v1672
        %v1739 = vunpack.c.l.b16 %v1673
        %v1740 = vunpack.c.l.b16 %v1674
        %v1741 = vunpack.c.l.b16 %v1675
        %v1742 = vunpack.c.l.b16 %v1676
        %v1743 = vunpack.c.l.b16 %v1677
        %v1744 = vunpack.c.l.b16 %v1678
        %v1745 = vunpack.c.l.b16 %v1679
        %v1746 = vunpack.c.l.b16 %v1680
        %v1747 = vunpack.c.l.b16 %v1681
        %v1748 = vunpack.c.l.b16 %v1682
        %v1749 = vunpack.c.l.b16 %v1683
        %v1750 = vunpack.c.l.b16 %v1684
        %v1751 = vunpack.c.l.b16 %v1685
        %v1752 = vunpack.c.l.b16 %v1686
        %v1753 = vunpack.c.l.b16 %v1687
        %v1754 = vunpack.c.l.b16 %v1688
        %v1755 = vunpack.c.l.b16 %v1689
        %v1756 = vunpack.c.l.b16 %v1690
        %v1757 = vunpack.c.l.b16 %v1691
        %v1758 = vunpack.c.l.b16 %v1692
        %v1759 = vunpack.c.l.b16 %v1693
        %v1760 = vunpack.c.l.b16 %v1694
        %v1761 = vunpack.c.l.b16 %v1695
        %v1762 = vpack.c.b16 %v1731, %v1730
        %v1763 = vpack.c.b16 %v1733, %v1732
        %v1764 = vpack.c.b16 %v1735, %v1734
        %v1765 = vpack.c.b16 %v1737, %v1736
        %v1766 = vpack.c.b16 %v1739, %v1738
        %v1767 = vpack.c.b16 %v1741, %v1740
        %v1768 = vpack.c.b16 %v1743, %v1742
        %v1769 = vpack.c.b16 %v1745, %v1744
        %v1770 = vpack.c.b16 %v1747, %v1746
        %v1771 = vpack.c.b16 %v1749, %v1748
        %v1772 = vpack.c.b16 %v1751, %v1750
        %v1773 = vpack.c.b16 %v1753, %v1752
        %v1774 = vpack.c.b16 %v1755, %v1754
        %v1775 = vpack.c.b16 %v1757, %v1756
        %v1776 = vpack.c.b16 %v1759, %v1758
        %v1777 = vpack.c.b16 %v1761, %v1760
        %v1779 = vsel %vm700, %v1762, 0
        %v1782 = vsel %vm700, %v1763, 0
        %v1785 = vsel %vm700, %v1764, 0
        %v1788 = vsel %vm700, %v1765, 0
        %v1791 = vsel %vm700, %v1766, 0
        %v1794 = vsel %vm700, %v1767, 0
        %v1797 = vsel %vm700, %v1768, 0
        %v1800 = vsel %vm700, %v1769, 0
        %v1803 = vsel %vm700, %v1770, 0
        %v1806 = vsel %vm700, %v1771, 0
        %v1809 = vsel %vm700, %v1772, 0
        %v1812 = vsel %vm700, %v1773, 0
        %v1815 = vsel %vm700, %v1774, 0
        %v1818 = vsel %vm700, %v1775, 0
        %v1821 = vsel %vm700, %v1776, 0
        %v1824 = vsel %vm700, %v1777, 0
        %v1827 = vsel %vm749, %v1697, 0
        %1829 = vmatprep.subr.bf16.mxu0 0
        %1830 = vmatpush1.bf16.msra.mxu0 %v1827
        %1831 = vmatprep.subr.bf16.mxu0 0
        %1832 = vmatpush1.bf16.msra.mxu0 0
        %1833 = vmatprep.subr.bf16.mxu0 0
        %1834 = vmatpush1.bf16.msra.mxu0 0
        %1835 = vmatprep.subr.bf16.mxu0 0
        %1836 = vmatpush1.bf16.msra.mxu0 0
        %1837 = vmatprep.subr.bf16.mxu0 0
        %1838 = vmatpush1.bf16.msra.mxu0 0
        %1839 = vmatprep.subr.bf16.mxu0 0
        %1840 = vmatpush1.bf16.msra.mxu0 0
        %1841 = vmatprep.subr.bf16.mxu0 0
        %1842 = vmatpush1.bf16.msra.mxu0 0
        %1843 = vmatprep.subr.bf16.mxu0 0
        %1844 = vmatpush1.bf16.msra.mxu0 0
        %1845 = vmatprep.subr.bf16.mxu0 0
        %1846 = vmatpush1.bf16.msra.mxu0 0
        %1847 = vmatprep.subr.bf16.mxu0 0
        %1848 = vmatpush1.bf16.msra.mxu0 0
        %1849 = vmatprep.subr.bf16.mxu0 0
        %1850 = vmatpush1.bf16.msra.mxu0 0
        %1851 = vmatprep.subr.bf16.mxu0 0
        %1852 = vmatpush1.bf16.msra.mxu0 0
        %1853 = vmatprep.subr.bf16.mxu0 0
        %1854 = vmatpush1.bf16.msra.mxu0 0
        %1855 = vmatprep.subr.bf16.mxu0 0
        %1856 = vmatpush1.bf16.msra.mxu0 0
        %1857 = vmatprep.subr.bf16.mxu0 0
        %1858 = vmatpush1.bf16.msra.mxu0 0
        %1859 = vmatprep.subr.bf16.mxu0 0
        %1860 = vmatpush1.bf16.msra.mxu0 0
        %1861 = vmatprep.mubr.bf16.mxu0 0
        %1862 = vmatmul.mubr.bf16.gmra.mrb[0].mxu0 %v1779
        %v1863 = vpop.f32.mrb[0].mxu0
        %v1864 = vadd.f32 0.0, %v1863
        %v1865 = vpop.f32.mrb[0].mxu0
        %v1866 = vpop.f32.mrb[0].mxu0
        %v1867 = vadd.f32 0.0, %v1866
        %v1868 = vpop.f32.mrb[0].mxu0
        %1869 = vmatprep.mubr.bf16.mxu0 0
        %1870 = vmatmul.mubr.bf16.gmra.mrb[0].mxu0 %v1782
        %v1871 = vpop.f32.mrb[0].mxu0
        %v1872 = vadd.f32 0.0, %v1871
        %v1873 = vpop.f32.mrb[0].mxu0
        %v1874 = vpop.f32.mrb[0].mxu0
        %v1875 = vadd.f32 0.0, %v1874
        %v1876 = vpop.f32.mrb[0].mxu0
        %1877 = vmatprep.mubr.bf16.mxu0 0
        %1878 = vmatmul.mubr.bf16.gmra.mrb[0].mxu0 %v1785
        %v1879 = vpop.f32.mrb[0].mxu0
        %v1880 = vadd.f32 0.0, %v1879
        %v1881 = vpop.f32.mrb[0].mxu0
        %v1882 = vpop.f32.mrb[0].mxu0
        %v1883 = vadd.f32 0.0, %v1882
        %v1884 = vpop.f32.mrb[0].mxu0
        %1885 = vmatprep.mubr.bf16.mxu0 0
        %1886 = vmatmul.mubr.bf16.gmra.mrb[0].mxu0 %v1788
        %v1887 = vpop.f32.mrb[0].mxu0
        %v1888 = vadd.f32 0.0, %v1887
        %v1889 = vpop.f32.mrb[0].mxu0
        %v1890 = vpop.f32.mrb[0].mxu0
        %v1891 = vadd.f32 0.0, %v1890
        %v1892 = vpop.f32.mrb[0].mxu0
        %1893 = vmatprep.mubr.bf16.mxu0 0
        %1894 = vmatmul.mubr.bf16.gmra.mrb[0].mxu0 %v1791
        %v1895 = vpop.f32.mrb[0].mxu0
        %v1896 = vadd.f32 0.0, %v1895
        %v1897 = vpop.f32.mrb[0].mxu0
        %v1898 = vpop.f32.mrb[0].mxu0
        %v1899 = vadd.f32 0.0, %v1898
        %v1900 = vpop.f32.mrb[0].mxu0
        %1901 = vmatprep.mubr.bf16.mxu0 0
        %1902 = vmatmul.mubr.bf16.gmra.mrb[0].mxu0 %v1794
        %v1903 = vpop.f32.mrb[0].mxu0
        %v1904 = vadd.f32 0.0, %v1903
        %v1905 = vpop.f32.mrb[0].mxu0
        %v1906 = vpop.f32.mrb[0].mxu0
        %v1907 = vadd.f32 0.0, %v1906
        %v1908 = vpop.f32.mrb[0].mxu0
        %1909 = vmatprep.mubr.bf16.mxu0 0
        %1910 = vmatmul.mubr.bf16.gmra.mrb[0].mxu0 %v1797
        %v1911 = vpop.f32.mrb[0].mxu0
        %v1912 = vadd.f32 0.0, %v1911
        %v1913 = vpop.f32.mrb[0].mxu0
        %v1914 = vpop.f32.mrb[0].mxu0
        %v1915 = vadd.f32 0.0, %v1914
        %v1916 = vpop.f32.mrb[0].mxu0
        %1917 = vmatprep.mubr.bf16.mxu0 0
        %1918 = vmatmul.mubr.bf16.gmra.mrb[0].mxu0 %v1800
        %v1919 = vpop.f32.mrb[0].mxu0
        %v1920 = vadd.f32 0.0, %v1919
        %v1921 = vpop.f32.mrb[0].mxu0
        %v1922 = vpop.f32.mrb[0].mxu0
        %v1923 = vadd.f32 0.0, %v1922
        %v1924 = vpop.f32.mrb[0].mxu0
        %1925 = vmatprep.mubr.bf16.mxu0 0
        %1926 = vmatmul.mubr.bf16.gmra.mrb[0].mxu0 %v1803
        %v1927 = vpop.f32.mrb[0].mxu0
        %v1928 = vadd.f32 0.0, %v1927
        %v1929 = vpop.f32.mrb[0].mxu0
        %v1930 = vpop.f32.mrb[0].mxu0
        %v1931 = vadd.f32 0.0, %v1930
        %v1932 = vpop.f32.mrb[0].mxu0
        %1933 = vmatprep.mubr.bf16.mxu0 0
        %1934 = vmatmul.mubr.bf16.gmra.mrb[0].mxu0 %v1806
        %v1935 = vpop.f32.mrb[0].mxu0
        %v1936 = vadd.f32 0.0, %v1935
        %v1937 = vpop.f32.mrb[0].mxu0
        %v1938 = vpop.f32.mrb[0].mxu0
        %v1939 = vadd.f32 0.0, %v1938
        %v1940 = vpop.f32.mrb[0].mxu0
        %1941 = vmatprep.mubr.bf16.mxu0 0
        %1942 = vmatmul.mubr.bf16.gmra.mrb[0].mxu0 %v1809
        %v1943 = vpop.f32.mrb[0].mxu0
        %v1944 = vadd.f32 0.0, %v1943
        %v1945 = vpop.f32.mrb[0].mxu0
        %v1946 = vpop.f32.mrb[0].mxu0
        %v1947 = vadd.f32 0.0, %v1946
        %v1948 = vpop.f32.mrb[0].mxu0
        %1949 = vmatprep.mubr.bf16.mxu0 0
        %1950 = vmatmul.mubr.bf16.gmra.mrb[0].mxu0 %v1812
        %v1951 = vpop.f32.mrb[0].mxu0
        %v1952 = vadd.f32 0.0, %v1951
        %v1953 = vpop.f32.mrb[0].mxu0
        %v1954 = vpop.f32.mrb[0].mxu0
        %v1955 = vadd.f32 0.0, %v1954
        %v1956 = vpop.f32.mrb[0].mxu0
        %1957 = vmatprep.mubr.bf16.mxu0 0
        %1958 = vmatmul.mubr.bf16.gmra.mrb[0].mxu0 %v1815
        %v1959 = vpop.f32.mrb[0].mxu0
        %v1960 = vadd.f32 0.0, %v1959
        %v1961 = vpop.f32.mrb[0].mxu0
        %v1962 = vpop.f32.mrb[0].mxu0
        %v1963 = vadd.f32 0.0, %v1962
        %v1964 = vpop.f32.mrb[0].mxu0
        %1965 = vmatprep.mubr.bf16.mxu0 0
        %1966 = vmatmul.mubr.bf16.gmra.mrb[0].mxu0 %v1818
        %v1967 = vpop.f32.mrb[0].mxu0
        %v1968 = vadd.f32 0.0, %v1967
        %v1969 = vpop.f32.mrb[0].mxu0
        %v1970 = vpop.f32.mrb[0].mxu0
        %v1971 = vadd.f32 0.0, %v1970
        %v1972 = vpop.f32.mrb[0].mxu0
        %1973 = vmatprep.mubr.bf16.mxu0 0
        %1974 = vmatmul.mubr.bf16.gmra.mrb[0].mxu0 %v1821
        %v1975 = vpop.f32.mrb[0].mxu0
        %v1976 = vadd.f32 0.0, %v1975
        %v1977 = vpop.f32.mrb[0].mxu0
        %v1978 = vpop.f32.mrb[0].mxu0
        %v1979 = vadd.f32 0.0, %v1978
        %v1980 = vpop.f32.mrb[0].mxu0
        %1981 = vmatprep.mubr.bf16.mxu0 0
        %1982 = vmatmul.mubr.bf16.gmra.mrb[0].mxu0 %v1824
        %v1983 = vpop.f32.mrb[0].mxu0
        %v1984 = vadd.f32 0.0, %v1983
        %v1985 = vpop.f32.mrb[0].mxu0
        %v1986 = vpop.f32.mrb[0].mxu0
        %v1987 = vadd.f32 0.0, %v1986
        %v1988 = vpop.f32.mrb[0].mxu0
        %1989 = vdwg.mxu0
        %v1990 = vadd.f32 %v1631, %v1864
        %v1991 = vadd.f32 %v1632, %v1867
        %v1992 = vadd.f32 %v1633, %v1872
        %v1993 = vadd.f32 %v1634, %v1875
        %v1994 = vadd.f32 %v1635, %v1880
        %v1995 = vadd.f32 %v1636, %v1883
        %v1996 = vadd.f32 %v1637, %v1888
        %v1997 = vadd.f32 %v1638, %v1891
        %v1998 = vadd.f32 %v1639, %v1896
        %v1999 = vadd.f32 %v1640, %v1899
        %v2000 = vadd.f32 %v1641, %v1904
        %v2001 = vadd.f32 %v1642, %v1907
        %v2002 = vadd.f32 %v1643, %v1912
        %v2003 = vadd.f32 %v1644, %v1915
        %v2004 = vadd.f32 %v1645, %v1920
        %v2005 = vadd.f32 %v1646, %v1923
        %v2006 = vadd.f32 %v1647, %v1928
        %v2007 = vadd.f32 %v1648, %v1931
        %v2008 = vadd.f32 %v1649, %v1936
        %v2009 = vadd.f32 %v1650, %v1939
        %v2010 = vadd.f32 %v1651, %v1944
        %v2011 = vadd.f32 %v1652, %v1947
        %v2012 = vadd.f32 %v1653, %v1952
        %v2013 = vadd.f32 %v1654, %v1955
        %v2014 = vadd.f32 %v1655, %v1960
        %v2015 = vadd.f32 %v1656, %v1963
        %v2016 = vadd.f32 %v1657, %v1968
        %v2017 = vadd.f32 %v1658, %v1971
        %v2018 = vadd.f32 %v1659, %v1976
        %v2019 = vadd.f32 %v1660, %v1979
        %v2020 = vadd.f32 %v1661, %v1984
        %v2021 = vadd.f32 %v1662, %v1987
        %v2022 = vld [vmem:[%s1663] sm:$0xf]
        %v2023 = vld [vmem:[%s1663 + $0x4] sm:$0xf]
        %v2024 = vld [vmem:[%s1663 + $0x8] sm:$0x1]
        %v2025 = vld [vmem:[%s1663 + $0xc] sm:$0xf]
        %v2026 = vld [vmem:[%s1663 + $0x10] sm:$0xf]
        %v2027 = vld [vmem:[%s1663 + $0x14] sm:$0x1]
        %v2028 = vld [vmem:[%s1663 + $0x18] sm:$0xf]
        %v2029 = vld [vmem:[%s1663 + $0x1c] sm:$0xf]
        %v2030 = vld [vmem:[%s1663 + $0x20] sm:$0x1]
        %v2031 = vld [vmem:[%s1663 + $0x24] sm:$0xf]
        %v2032 = vld [vmem:[%s1663 + $0x28] sm:$0xf]
        %v2033 = vld [vmem:[%s1663 + $0x2c] sm:$0x1]
        %v2034 = vld [vmem:[%s1663 + $0x30] sm:$0xf]
        %v2035 = vld [vmem:[%s1663 + $0x34] sm:$0xf]
        %v2036 = vld [vmem:[%s1663 + $0x38] sm:$0x1]
        %v2037 = vld [vmem:[%s1663 + $0x3c] sm:$0xf]
        %v2038 = vld [vmem:[%s1663 + $0x40] sm:$0xf]
        %v2039 = vld [vmem:[%s1663 + $0x44] sm:$0x1]
        %v2040 = vld [vmem:[%s1663 + $0x48] sm:$0xf]
        %v2041 = vld [vmem:[%s1663 + $0x4c] sm:$0xf]
        %v2042 = vld [vmem:[%s1663 + $0x50] sm:$0x1]
        %v2043 = vld [vmem:[%s1663 + $0x54] sm:$0xf]
        %v2044 = vld [vmem:[%s1663 + $0x58] sm:$0xf]
        %v2045 = vld [vmem:[%s1663 + $0x5c] sm:$0x1]
        %v2046 = vld [vmem:[%s1663 + $0x60] sm:$0xf]
        %v2047 = vld [vmem:[%s1663 + $0x64] sm:$0xf]
        %v2048 = vld [vmem:[%s1663 + $0x68] sm:$0x1]
        %v2049 = vld [vmem:[%s1663 + $0x6c] sm:$0xf]
        %v2050 = vld [vmem:[%s1663 + $0x70] sm:$0xf]
        %v2051 = vld [vmem:[%s1663 + $0x74] sm:$0x1]
        %v2052 = vld [vmem:[%s1663 + $0x78] sm:$0xf]
        %v2053 = vld [vmem:[%s1663 + $0x7c] sm:$0xf]
        %v2054 = vld [vmem:[%s1663 + $0x80] sm:$0x1]
        %v2055 = vld [vmem:[%s1663 + $0x84] sm:$0xf]
        %v2056 = vld [vmem:[%s1663 + $0x88] sm:$0xf]
        %v2057 = vld [vmem:[%s1663 + $0x8c] sm:$0x1]
        %v2058 = vld [vmem:[%s1663 + $0x90] sm:$0xf]
        %v2059 = vld [vmem:[%s1663 + $0x94] sm:$0xf]
        %v2060 = vld [vmem:[%s1663 + $0x98] sm:$0x1]
        %v2061 = vld [vmem:[%s1663 + $0x9c] sm:$0xf]
        %v2062 = vld [vmem:[%s1663 + $0xa0] sm:$0xf]
        %v2063 = vld [vmem:[%s1663 + $0xa4] sm:$0x1]
        %v2064 = vld [vmem:[%s1663 + $0xa8] sm:$0xf]
        %v2065 = vld [vmem:[%s1663 + $0xac] sm:$0xf]
        %v2066 = vld [vmem:[%s1663 + $0xb0] sm:$0x1]
        %v2067 = vld [vmem:[%s1663 + $0xb4] sm:$0xf]
        %v2068 = vld [vmem:[%s1663 + $0xb8] sm:$0xf]
        %v2069 = vld [vmem:[%s1663 + $0xbc] sm:$0x1]
        %v2071 = vshrl.u32 %v2022, 16
        %v2073 = vrot.slane %v2071, 4
        %v2074 = vshll.u32 %v2022, 16
        %v2076 = vrot.slane %v2074, 5
        %v2077 = vor.u32 %v2073, %v2076
        %v2078 = vrot.slane %v2077, 4
        %v2080 = vshll.u32 %v2023, 16
        %v2082 = vrot.slane %v2080, 5
        %v2083 = vsel %vm265, %v2078, %v2082
        %v2084 = vshrl.u32 %v2023, 16
        %v2086 = vrot.slane %v2084, 4
        %v2087 = vor.u32 %v2086, %v2082
        %v2088 = vrot.slane %v2087, 4
        %v2090 = vshll.u32 %v2024, 16
        %v2092 = vrot.slane %v2090, 5
        %v2093 = vsel %vm265, %v2088, %v2092
        %v2095 = vshrl.u32 %v2025, 16
        %v2097 = vrot.slane %v2095, 4
        %v2098 = vshll.u32 %v2025, 16
        %v2100 = vrot.slane %v2098, 5
        %v2101 = vor.u32 %v2097, %v2100
        %v2102 = vrot.slane %v2101, 4
        %v2104 = vshll.u32 %v2026, 16
        %v2106 = vrot.slane %v2104, 5
        %v2107 = vsel %vm265, %v2102, %v2106
        %v2108 = vshrl.u32 %v2026, 16
        %v2110 = vrot.slane %v2108, 4
        %v2111 = vor.u32 %v2110, %v2106
        %v2112 = vrot.slane %v2111, 4
        %v2114 = vshll.u32 %v2027, 16
        %v2116 = vrot.slane %v2114, 5
        %v2117 = vsel %vm265, %v2112, %v2116
        %v2119 = vshrl.u32 %v2028, 16
        %v2121 = vrot.slane %v2119, 4
        %v2122 = vshll.u32 %v2028, 16
        %v2124 = vrot.slane %v2122, 5
        %v2125 = vor.u32 %v2121, %v2124
        %v2126 = vrot.slane %v2125, 4
        %v2128 = vshll.u32 %v2029, 16
        %v2130 = vrot.slane %v2128, 5
        %v2131 = vsel %vm265, %v2126, %v2130
        %v2132 = vshrl.u32 %v2029, 16
        %v2134 = vrot.slane %v2132, 4
        %v2135 = vor.u32 %v2134, %v2130
        %v2136 = vrot.slane %v2135, 4
        %v2138 = vshll.u32 %v2030, 16
        %v2140 = vrot.slane %v2138, 5
        %v2141 = vsel %vm265, %v2136, %v2140
        %v2143 = vshrl.u32 %v2031, 16
        %v2145 = vrot.slane %v2143, 4
        %v2146 = vshll.u32 %v2031, 16
        %v2148 = vrot.slane %v2146, 5
        %v2149 = vor.u32 %v2145, %v2148
        %v2150 = vrot.slane %v2149, 4
        %v2152 = vshll.u32 %v2032, 16
        %v2154 = vrot.slane %v2152, 5
        %v2155 = vsel %vm265, %v2150, %v2154
        %v2156 = vshrl.u32 %v2032, 16
        %v2158 = vrot.slane %v2156, 4
        %v2159 = vor.u32 %v2158, %v2154
        %v2160 = vrot.slane %v2159, 4
        %v2162 = vshll.u32 %v2033, 16
        %v2164 = vrot.slane %v2162, 5
        %v2165 = vsel %vm265, %v2160, %v2164
        %v2167 = vshrl.u32 %v2034, 16
        %v2169 = vrot.slane %v2167, 4
        %v2170 = vshll.u32 %v2034, 16
        %v2172 = vrot.slane %v2170, 5
        %v2173 = vor.u32 %v2169, %v2172
        %v2174 = vrot.slane %v2173, 4
        %v2176 = vshll.u32 %v2035, 16
        %v2178 = vrot.slane %v2176, 5
        %v2179 = vsel %vm265, %v2174, %v2178
        %v2180 = vshrl.u32 %v2035, 16
        %v2182 = vrot.slane %v2180, 4
        %v2183 = vor.u32 %v2182, %v2178
        %v2184 = vrot.slane %v2183, 4
        %v2186 = vshll.u32 %v2036, 16
        %v2188 = vrot.slane %v2186, 5
        %v2189 = vsel %vm265, %v2184, %v2188
        %v2191 = vshrl.u32 %v2037, 16
        %v2193 = vrot.slane %v2191, 4
        %v2194 = vshll.u32 %v2037, 16
        %v2196 = vrot.slane %v2194, 5
        %v2197 = vor.u32 %v2193, %v2196
        %v2198 = vrot.slane %v2197, 4
        %v2200 = vshll.u32 %v2038, 16
        %v2202 = vrot.slane %v2200, 5
        %v2203 = vsel %vm265, %v2198, %v2202
        %v2204 = vshrl.u32 %v2038, 16
        %v2206 = vrot.slane %v2204, 4
        %v2207 = vor.u32 %v2206, %v2202
        %v2208 = vrot.slane %v2207, 4
        %v2210 = vshll.u32 %v2039, 16
        %v2212 = vrot.slane %v2210, 5
        %v2213 = vsel %vm265, %v2208, %v2212
        %v2215 = vshrl.u32 %v2040, 16
        %v2217 = vrot.slane %v2215, 4
        %v2218 = vshll.u32 %v2040, 16
        %v2220 = vrot.slane %v2218, 5
        %v2221 = vor.u32 %v2217, %v2220
        %v2222 = vrot.slane %v2221, 4
        %v2224 = vshll.u32 %v2041, 16
        %v2226 = vrot.slane %v2224, 5
        %v2227 = vsel %vm265, %v2222, %v2226
        %v2228 = vshrl.u32 %v2041, 16
        %v2230 = vrot.slane %v2228, 4
        %v2231 = vor.u32 %v2230, %v2226
        %v2232 = vrot.slane %v2231, 4
        %v2234 = vshll.u32 %v2042, 16
        %v2236 = vrot.slane %v2234, 5
        %v2237 = vsel %vm265, %v2232, %v2236
        %v2239 = vshrl.u32 %v2043, 16
        %v2241 = vrot.slane %v2239, 4
        %v2242 = vshll.u32 %v2043, 16
        %v2244 = vrot.slane %v2242, 5
        %v2245 = vor.u32 %v2241, %v2244
        %v2246 = vrot.slane %v2245, 4
        %v2248 = vshll.u32 %v2044, 16
        %v2250 = vrot.slane %v2248, 5
        %v2251 = vsel %vm265, %v2246, %v2250
        %v2252 = vshrl.u32 %v2044, 16
        %v2254 = vrot.slane %v2252, 4
        %v2255 = vor.u32 %v2254, %v2250
        %v2256 = vrot.slane %v2255, 4
        %v2258 = vshll.u32 %v2045, 16
        %v2260 = vrot.slane %v2258, 5
        %v2261 = vsel %vm265, %v2256, %v2260
        %v2263 = vshrl.u32 %v2046, 16
        %v2265 = vrot.slane %v2263, 4
        %v2266 = vshll.u32 %v2046, 16
        %v2268 = vrot.slane %v2266, 5
        %v2269 = vor.u32 %v2265, %v2268
        %v2270 = vrot.slane %v2269, 4
        %v2272 = vshll.u32 %v2047, 16
        %v2274 = vrot.slane %v2272, 5
        %v2275 = vsel %vm265, %v2270, %v2274
        %v2276 = vshrl.u32 %v2047, 16
        %v2278 = vrot.slane %v2276, 4
        %v2279 = vor.u32 %v2278, %v2274
        %v2280 = vrot.slane %v2279, 4
        %v2282 = vshll.u32 %v2048, 16
        %v2284 = vrot.slane %v2282, 5
        %v2285 = vsel %vm265, %v2280, %v2284
        %v2287 = vshrl.u32 %v2049, 16
        %v2289 = vrot.slane %v2287, 4
        %v2290 = vshll.u32 %v2049, 16
        %v2292 = vrot.slane %v2290, 5
        %v2293 = vor.u32 %v2289, %v2292
        %v2294 = vrot.slane %v2293, 4
        %v2296 = vshll.u32 %v2050, 16
        %v2298 = vrot.slane %v2296, 5
        %v2299 = vsel %vm265, %v2294, %v2298
        %v2300 = vshrl.u32 %v2050, 16
        %v2302 = vrot.slane %v2300, 4
        %v2303 = vor.u32 %v2302, %v2298
        %v2304 = vrot.slane %v2303, 4
        %v2306 = vshll.u32 %v2051, 16
        %v2308 = vrot.slane %v2306, 5
        %v2309 = vsel %vm265, %v2304, %v2308
        %v2311 = vshrl.u32 %v2052, 16
        %v2313 = vrot.slane %v2311, 4
        %v2314 = vshll.u32 %v2052, 16
        %v2316 = vrot.slane %v2314, 5
        %v2317 = vor.u32 %v2313, %v2316
        %v2318 = vrot.slane %v2317, 4
        %v2320 = vshll.u32 %v2053, 16
        %v2322 = vrot.slane %v2320, 5
        %v2323 = vsel %vm265, %v2318, %v2322
        %v2324 = vshrl.u32 %v2053, 16
        %v2326 = vrot.slane %v2324, 4
        %v2327 = vor.u32 %v2326, %v2322
        %v2328 = vrot.slane %v2327, 4
        %v2330 = vshll.u32 %v2054, 16
        %v2332 = vrot.slane %v2330, 5
        %v2333 = vsel %vm265, %v2328, %v2332
        %v2335 = vshrl.u32 %v2055, 16
        %v2337 = vrot.slane %v2335, 4
        %v2338 = vshll.u32 %v2055, 16
        %v2340 = vrot.slane %v2338, 5
        %v2341 = vor.u32 %v2337, %v2340
        %v2342 = vrot.slane %v2341, 4
        %v2344 = vshll.u32 %v2056, 16
        %v2346 = vrot.slane %v2344, 5
        %v2347 = vsel %vm265, %v2342, %v2346
        %v2348 = vshrl.u32 %v2056, 16
        %v2350 = vrot.slane %v2348, 4
        %v2351 = vor.u32 %v2350, %v2346
        %v2352 = vrot.slane %v2351, 4
        %v2354 = vshll.u32 %v2057, 16
        %v2356 = vrot.slane %v2354, 5
        %v2357 = vsel %vm265, %v2352, %v2356
        %v2359 = vshrl.u32 %v2058, 16
        %v2361 = vrot.slane %v2359, 4
        %v2362 = vshll.u32 %v2058, 16
        %v2364 = vrot.slane %v2362, 5
        %v2365 = vor.u32 %v2361, %v2364
        %v2366 = vrot.slane %v2365, 4
        %v2368 = vshll.u32 %v2059, 16
        %v2370 = vrot.slane %v2368, 5
        %v2371 = vsel %vm265, %v2366, %v2370
        %v2372 = vshrl.u32 %v2059, 16
        %v2374 = vrot.slane %v2372, 4
        %v2375 = vor.u32 %v2374, %v2370
        %v2376 = vrot.slane %v2375, 4
        %v2378 = vshll.u32 %v2060, 16
        %v2380 = vrot.slane %v2378, 5
        %v2381 = vsel %vm265, %v2376, %v2380
        %v2383 = vshrl.u32 %v2061, 16
        %v2385 = vrot.slane %v2383, 4
        %v2386 = vshll.u32 %v2061, 16
        %v2388 = vrot.slane %v2386, 5
        %v2389 = vor.u32 %v2385, %v2388
        %v2390 = vrot.slane %v2389, 4
        %v2392 = vshll.u32 %v2062, 16
        %v2394 = vrot.slane %v2392, 5
        %v2395 = vsel %vm265, %v2390, %v2394
        %v2396 = vshrl.u32 %v2062, 16
        %v2398 = vrot.slane %v2396, 4
        %v2399 = vor.u32 %v2398, %v2394
        %v2400 = vrot.slane %v2399, 4
        %v2402 = vshll.u32 %v2063, 16
        %v2404 = vrot.slane %v2402, 5
        %v2405 = vsel %vm265, %v2400, %v2404
        %v2407 = vshrl.u32 %v2064, 16
        %v2409 = vrot.slane %v2407, 4
        %v2410 = vshll.u32 %v2064, 16
        %v2412 = vrot.slane %v2410, 5
        %v2413 = vor.u32 %v2409, %v2412
        %v2414 = vrot.slane %v2413, 4
        %v2416 = vshll.u32 %v2065, 16
        %v2418 = vrot.slane %v2416, 5
        %v2419 = vsel %vm265, %v2414, %v2418
        %v2420 = vshrl.u32 %v2065, 16
        %v2422 = vrot.slane %v2420, 4
        %v2423 = vor.u32 %v2422, %v2418
        %v2424 = vrot.slane %v2423, 4
        %v2426 = vshll.u32 %v2066, 16
        %v2428 = vrot.slane %v2426, 5
        %v2429 = vsel %vm265, %v2424, %v2428
        %v2431 = vshrl.u32 %v2067, 16
        %v2433 = vrot.slane %v2431, 4
        %v2434 = vshll.u32 %v2067, 16
        %v2436 = vrot.slane %v2434, 5
        %v2437 = vor.u32 %v2433, %v2436
        %v2438 = vrot.slane %v2437, 4
        %v2440 = vshll.u32 %v2068, 16
        %v2442 = vrot.slane %v2440, 5
        %v2443 = vsel %vm265, %v2438, %v2442
        %v2444 = vshrl.u32 %v2068, 16
        %v2446 = vrot.slane %v2444, 4
        %v2447 = vor.u32 %v2446, %v2442
        %v2448 = vrot.slane %v2447, 4
        %v2450 = vshll.u32 %v2069, 16
        %v2452 = vrot.slane %v2450, 5
        %v2453 = vsel %vm265, %v2448, %v2452
        %s2454 = scalar_lea.vmem %s1, 16
        %v2455 = vld [vmem:[%s2454] sm:$0xf]
        %v2456 = vunpack.c.l.b16 %v2083
        %v2457 = vunpack.c.l.b16 %v2093
        %v2458 = vunpack.c.l.b16 %v2107
        %v2459 = vunpack.c.l.b16 %v2117
        %v2460 = vunpack.c.l.b16 %v2131
        %v2461 = vunpack.c.l.b16 %v2141
        %v2462 = vunpack.c.l.b16 %v2155
        %v2463 = vunpack.c.l.b16 %v2165
        %v2464 = vunpack.c.l.b16 %v2179
        %v2465 = vunpack.c.l.b16 %v2189
        %v2466 = vunpack.c.l.b16 %v2203
        %v2467 = vunpack.c.l.b16 %v2213
        %v2468 = vunpack.c.l.b16 %v2227
        %v2469 = vunpack.c.l.b16 %v2237
        %v2470 = vunpack.c.l.b16 %v2251
        %v2471 = vunpack.c.l.b16 %v2261
        %v2472 = vunpack.c.l.b16 %v2275
        %v2473 = vunpack.c.l.b16 %v2285
        %v2474 = vunpack.c.l.b16 %v2299
        %v2475 = vunpack.c.l.b16 %v2309
        %v2476 = vunpack.c.l.b16 %v2323
        %v2477 = vunpack.c.l.b16 %v2333
        %v2478 = vunpack.c.l.b16 %v2347
        %v2479 = vunpack.c.l.b16 %v2357
        %v2480 = vunpack.c.l.b16 %v2371
        %v2481 = vunpack.c.l.b16 %v2381
        %v2482 = vunpack.c.l.b16 %v2395
        %v2483 = vunpack.c.l.b16 %v2405
        %v2484 = vunpack.c.l.b16 %v2419
        %v2485 = vunpack.c.l.b16 %v2429
        %v2486 = vunpack.c.l.b16 %v2443
        %v2487 = vunpack.c.l.b16 %v2453
        %v2488 = vpack.c.b16 %v2457, %v2456
        %v2489 = vpack.c.b16 %v2459, %v2458
        %v2490 = vpack.c.b16 %v2461, %v2460
        %v2491 = vpack.c.b16 %v2463, %v2462
        %v2492 = vpack.c.b16 %v2465, %v2464
        %v2493 = vpack.c.b16 %v2467, %v2466
        %v2494 = vpack.c.b16 %v2469, %v2468
        %v2495 = vpack.c.b16 %v2471, %v2470
        %v2496 = vpack.c.b16 %v2473, %v2472
        %v2497 = vpack.c.b16 %v2475, %v2474
        %v2498 = vpack.c.b16 %v2477, %v2476
        %v2499 = vpack.c.b16 %v2479, %v2478
        %v2500 = vpack.c.b16 %v2481, %v2480
        %v2501 = vpack.c.b16 %v2483, %v2482
        %v2502 = vpack.c.b16 %v2485, %v2484
        %v2503 = vpack.c.b16 %v2487, %v2486
        %v2505 = vsel %vm700, %v2488, 0
        %v2508 = vsel %vm700, %v2489, 0
        %v2511 = vsel %vm700, %v2490, 0
        %v2514 = vsel %vm700, %v2491, 0
        %v2517 = vsel %vm700, %v2492, 0
        %v2520 = vsel %vm700, %v2493, 0
        %v2523 = vsel %vm700, %v2494, 0
        %v2526 = vsel %vm700, %v2495, 0
        %v2529 = vsel %vm700, %v2496, 0
        %v2532 = vsel %vm700, %v2497, 0
        %v2535 = vsel %vm700, %v2498, 0
        %v2538 = vsel %vm700, %v2499, 0
        %v2541 = vsel %vm700, %v2500, 0
        %v2544 = vsel %vm700, %v2501, 0
        %v2547 = vsel %vm700, %v2502, 0
        %v2550 = vsel %vm700, %v2503, 0
        %v2553 = vsel %vm749, %v2455, 0
        %2555 = vmatprep.subr.bf16.mxu0 0
        %2556 = vmatpush1.bf16.msra.mxu0 %v2553
        %2557 = vmatprep.subr.bf16.mxu0 0
        %2558 = vmatpush1.bf16.msra.mxu0 0
        %2559 = vmatprep.subr.bf16.mxu0 0
        %2560 = vmatpush1.bf16.msra.mxu0 0
        %2561 = vmatprep.subr.bf16.mxu0 0
        %2562 = vmatpush1.bf16.msra.mxu0 0
        %2563 = vmatprep.subr.bf16.mxu0 0
        %2564 = vmatpush1.bf16.msra.mxu0 0
        %2565 = vmatprep.subr.bf16.mxu0 0
        %2566 = vmatpush1.bf16.msra.mxu0 0
        %2567 = vmatprep.subr.bf16.mxu0 0
        %2568 = vmatpush1.bf16.msra.mxu0 0
        %2569 = vmatprep.subr.bf16.mxu0 0
        %2570 = vmatpush1.bf16.msra.mxu0 0
        %2571 = vmatprep.subr.bf16.mxu0 0
        %2572 = vmatpush1.bf16.msra.mxu0 0
        %2573 = vmatprep.subr.bf16.mxu0 0
        %2574 = vmatpush1.bf16.msra.mxu0 0
        %2575 = vmatprep.subr.bf16.mxu0 0
        %2576 = vmatpush1.bf16.msra.mxu0 0
        %2577 = vmatprep.subr.bf16.mxu0 0
        %2578 = vmatpush1.bf16.msra.mxu0 0
        %2579 = vmatprep.subr.bf16.mxu0 0
        %2580 = vmatpush1.bf16.msra.mxu0 0
        %2581 = vmatprep.subr.bf16.mxu0 0
        %2582 = vmatpush1.bf16.msra.mxu0 0
        %2583 = vmatprep.subr.bf16.mxu0 0
        %2584 = vmatpush1.bf16.msra.mxu0 0
        %2585 = vmatprep.subr.bf16.mxu0 0
        %2586 = vmatpush1.bf16.msra.mxu0 0
        %2587 = vmatprep.mubr.bf16.mxu0 0
        %2588 = vmatmul.mubr.bf16.gmra.mrb[0].mxu0 %v2505
        %v2589 = vpop.f32.mrb[0].mxu0
        %v2590 = vadd.f32 0.0, %v2589
        %v2591 = vpop.f32.mrb[0].mxu0
        %v2592 = vpop.f32.mrb[0].mxu0
        %v2593 = vadd.f32 0.0, %v2592
        %v2594 = vpop.f32.mrb[0].mxu0
        %2595 = vmatprep.mubr.bf16.mxu0 0
        %2596 = vmatmul.mubr.bf16.gmra.mrb[0].mxu0 %v2508
        %v2597 = vpop.f32.mrb[0].mxu0
        %v2598 = vadd.f32 0.0, %v2597
        %v2599 = vpop.f32.mrb[0].mxu0
        %v2600 = vpop.f32.mrb[0].mxu0
        %v2601 = vadd.f32 0.0, %v2600
        %v2602 = vpop.f32.mrb[0].mxu0
        %2603 = vmatprep.mubr.bf16.mxu0 0
        %2604 = vmatmul.mubr.bf16.gmra.mrb[0].mxu0 %v2511
        %v2605 = vpop.f32.mrb[0].mxu0
        %v2606 = vadd.f32 0.0, %v2605
        %v2607 = vpop.f32.mrb[0].mxu0
        %v2608 = vpop.f32.mrb[0].mxu0
        %v2609 = vadd.f32 0.0, %v2608
        %v2610 = vpop.f32.mrb[0].mxu0
        %2611 = vmatprep.mubr.bf16.mxu0 0
        %2612 = vmatmul.mubr.bf16.gmra.mrb[0].mxu0 %v2514
        %v2613 = vpop.f32.mrb[0].mxu0
        %v2614 = vadd.f32 0.0, %v2613
        %v2615 = vpop.f32.mrb[0].mxu0
        %v2616 = vpop.f32.mrb[0].mxu0
        %v2617 = vadd.f32 0.0, %v2616
        %v2618 = vpop.f32.mrb[0].mxu0
        %2619 = vmatprep.mubr.bf16.mxu0 0
        %2620 = vmatmul.mubr.bf16.gmra.mrb[0].mxu0 %v2517
        %v2621 = vpop.f32.mrb[0].mxu0
        %v2622 = vadd.f32 0.0, %v2621
        %v2623 = vpop.f32.mrb[0].mxu0
        %v2624 = vpop.f32.mrb[0].mxu0
        %v2625 = vadd.f32 0.0, %v2624
        %v2626 = vpop.f32.mrb[0].mxu0
        %2627 = vmatprep.mubr.bf16.mxu0 0
        %2628 = vmatmul.mubr.bf16.gmra.mrb[0].mxu0 %v2520
        %v2629 = vpop.f32.mrb[0].mxu0
        %v2630 = vadd.f32 0.0, %v2629
        %v2631 = vpop.f32.mrb[0].mxu0
        %v2632 = vpop.f32.mrb[0].mxu0
        %v2633 = vadd.f32 0.0, %v2632
        %v2634 = vpop.f32.mrb[0].mxu0
        %2635 = vmatprep.mubr.bf16.mxu0 0
        %2636 = vmatmul.mubr.bf16.gmra.mrb[0].mxu0 %v2523
        %v2637 = vpop.f32.mrb[0].mxu0
        %v2638 = vadd.f32 0.0, %v2637
        %v2639 = vpop.f32.mrb[0].mxu0
        %v2640 = vpop.f32.mrb[0].mxu0
        %v2641 = vadd.f32 0.0, %v2640
        %v2642 = vpop.f32.mrb[0].mxu0
        %2643 = vmatprep.mubr.bf16.mxu0 0
        %2644 = vmatmul.mubr.bf16.gmra.mrb[0].mxu0 %v2526
        %v2645 = vpop.f32.mrb[0].mxu0
        %v2646 = vadd.f32 0.0, %v2645
        %v2647 = vpop.f32.mrb[0].mxu0
        %v2648 = vpop.f32.mrb[0].mxu0
        %v2649 = vadd.f32 0.0, %v2648
        %v2650 = vpop.f32.mrb[0].mxu0
        %2651 = vmatprep.mubr.bf16.mxu0 0
        %2652 = vmatmul.mubr.bf16.gmra.mrb[0].mxu0 %v2529
        %v2653 = vpop.f32.mrb[0].mxu0
        %v2654 = vadd.f32 0.0, %v2653
        %v2655 = vpop.f32.mrb[0].mxu0
        %v2656 = vpop.f32.mrb[0].mxu0
        %v2657 = vadd.f32 0.0, %v2656
        %v2658 = vpop.f32.mrb[0].mxu0
        %2659 = vmatprep.mubr.bf16.mxu0 0
        %2660 = vmatmul.mubr.bf16.gmra.mrb[0].mxu0 %v2532
        %v2661 = vpop.f32.mrb[0].mxu0
        %v2662 = vadd.f32 0.0, %v2661
        %v2663 = vpop.f32.mrb[0].mxu0
        %v2664 = vpop.f32.mrb[0].mxu0
        %v2665 = vadd.f32 0.0, %v2664
        %v2666 = vpop.f32.mrb[0].mxu0
        %2667 = vmatprep.mubr.bf16.mxu0 0
        %2668 = vmatmul.mubr.bf16.gmra.mrb[0].mxu0 %v2535
        %v2669 = vpop.f32.mrb[0].mxu0
        %v2670 = vadd.f32 0.0, %v2669
        %v2671 = vpop.f32.mrb[0].mxu0
        %v2672 = vpop.f32.mrb[0].mxu0
        %v2673 = vadd.f32 0.0, %v2672
        %v2674 = vpop.f32.mrb[0].mxu0
        %2675 = vmatprep.mubr.bf16.mxu0 0
        %2676 = vmatmul.mubr.bf16.gmra.mrb[0].mxu0 %v2538
        %v2677 = vpop.f32.mrb[0].mxu0
        %v2678 = vadd.f32 0.0, %v2677
        %v2679 = vpop.f32.mrb[0].mxu0
        %v2680 = vpop.f32.mrb[0].mxu0
        %v2681 = vadd.f32 0.0, %v2680
        %v2682 = vpop.f32.mrb[0].mxu0
        %2683 = vmatprep.mubr.bf16.mxu0 0
        %2684 = vmatmul.mubr.bf16.gmra.mrb[0].mxu0 %v2541
        %v2685 = vpop.f32.mrb[0].mxu0
        %v2686 = vadd.f32 0.0, %v2685
        %v2687 = vpop.f32.mrb[0].mxu0
        %v2688 = vpop.f32.mrb[0].mxu0
        %v2689 = vadd.f32 0.0, %v2688
        %v2690 = vpop.f32.mrb[0].mxu0
        %2691 = vmatprep.mubr.bf16.mxu0 0
        %2692 = vmatmul.mubr.bf16.gmra.mrb[0].mxu0 %v2544
        %v2693 = vpop.f32.mrb[0].mxu0
        %v2694 = vadd.f32 0.0, %v2693
        %v2695 = vpop.f32.mrb[0].mxu0
        %v2696 = vpop.f32.mrb[0].mxu0
        %v2697 = vadd.f32 0.0, %v2696
        %v2698 = vpop.f32.mrb[0].mxu0
        %2699 = vmatprep.mubr.bf16.mxu0 0
        %2700 = vmatmul.mubr.bf16.gmra.mrb[0].mxu0 %v2547
        %v2701 = vpop.f32.mrb[0].mxu0
        %v2702 = vadd.f32 0.0, %v2701
        %v2703 = vpop.f32.mrb[0].mxu0
        %v2704 = vpop.f32.mrb[0].mxu0
        %v2705 = vadd.f32 0.0, %v2704
        %v2706 = vpop.f32.mrb[0].mxu0
        %2707 = vmatprep.mubr.bf16.mxu0 0
        %2708 = vmatmul.mubr.bf16.gmra.mrb[0].mxu0 %v2550
        %v2709 = vpop.f32.mrb[0].mxu0
        %v2710 = vadd.f32 0.0, %v2709
        %v2711 = vpop.f32.mrb[0].mxu0
        %v2712 = vpop.f32.mrb[0].mxu0
        %v2713 = vadd.f32 0.0, %v2712
        %v2714 = vpop.f32.mrb[0].mxu0
        %2715 = vdwg.mxu0
        %v2716 = vadd.f32 %v1990, %v2590
        %v2717 = vadd.f32 %v1991, %v2593
        %v2718 = vadd.f32 %v1992, %v2598
        %v2719 = vadd.f32 %v1993, %v2601
        %v2720 = vadd.f32 %v1994, %v2606
        %v2721 = vadd.f32 %v1995, %v2609
        %v2722 = vadd.f32 %v1996, %v2614
        %v2723 = vadd.f32 %v1997, %v2617
        %v2724 = vadd.f32 %v1998, %v2622
        %v2725 = vadd.f32 %v1999, %v2625
        %v2726 = vadd.f32 %v2000, %v2630
        %v2727 = vadd.f32 %v2001, %v2633
        %v2728 = vadd.f32 %v2002, %v2638
        %v2729 = vadd.f32 %v2003, %v2641
        %v2730 = vadd.f32 %v2004, %v2646
        %v2731 = vadd.f32 %v2005, %v2649
        %v2732 = vadd.f32 %v2006, %v2654
        %v2733 = vadd.f32 %v2007, %v2657
        %v2734 = vadd.f32 %v2008, %v2662
        %v2735 = vadd.f32 %v2009, %v2665
        %v2736 = vadd.f32 %v2010, %v2670
        %v2737 = vadd.f32 %v2011, %v2673
        %v2738 = vadd.f32 %v2012, %v2678
        %v2739 = vadd.f32 %v2013, %v2681
        %v2740 = vadd.f32 %v2014, %v2686
        %v2741 = vadd.f32 %v2015, %v2689
        %v2742 = vadd.f32 %v2016, %v2694
        %v2743 = vadd.f32 %v2017, %v2697
        %v2744 = vadd.f32 %v2018, %v2702
        %v2745 = vadd.f32 %v2019, %v2705
        %v2746 = vadd.f32 %v2020, %v2710
        %v2747 = vadd.f32 %v2021, %v2713
        %v2748 = vld [vmem:[%s1663] sm:$0xe]
        %v2749 = vld [vmem:[%s1663 + $0xc] sm:$0xe]
        %v2750 = vld [vmem:[%s1663 + $0x18] sm:$0xe]
        %v2751 = vld [vmem:[%s1663 + $0x24] sm:$0xe]
        %v2752 = vld [vmem:[%s1663 + $0x30] sm:$0xe]
        %v2753 = vld [vmem:[%s1663 + $0x3c] sm:$0xe]
        %v2754 = vld [vmem:[%s1663 + $0x48] sm:$0xe]
        %v2755 = vld [vmem:[%s1663 + $0x54] sm:$0xe]
        %v2756 = vld [vmem:[%s1663 + $0x60] sm:$0xe]
        %v2757 = vld [vmem:[%s1663 + $0x6c] sm:$0xe]
        %v2758 = vld [vmem:[%s1663 + $0x78] sm:$0xe]
        %v2759 = vld [vmem:[%s1663 + $0x84] sm:$0xe]
        %v2760 = vld [vmem:[%s1663 + $0x90] sm:$0xe]
        %v2761 = vld [vmem:[%s1663 + $0x9c] sm:$0xe]
        %v2762 = vld [vmem:[%s1663 + $0xa8] sm:$0xe]
        %v2763 = vld [vmem:[%s1663 + $0xb4] sm:$0xe]
        %v2812 = vrot.slane %v2748, 5
        %v2813 = vrot.slane %v2812, 4
        %v2814 = vrot.slane %v2023, 5
        %v2815 = vsel %vm1256, %v2813, %v2814
        %v2816 = vrot.slane %v2814, 4
        %v2817 = vrot.slane %v2024, 5
        %v2818 = vsel %vm1256, %v2816, %v2817
        %v2819 = vrot.slane %v2749, 5
        %v2820 = vrot.slane %v2819, 4
        %v2821 = vrot.slane %v2026, 5
        %v2822 = vsel %vm1256, %v2820, %v2821
        %v2823 = vrot.slane %v2821, 4
        %v2824 = vrot.slane %v2027, 5
        %v2825 = vsel %vm1256, %v2823, %v2824
        %v2826 = vrot.slane %v2750, 5
        %v2827 = vrot.slane %v2826, 4
        %v2828 = vrot.slane %v2029, 5
        %v2829 = vsel %vm1256, %v2827, %v2828
        %v2830 = vrot.slane %v2828, 4
        %v2831 = vrot.slane %v2030, 5
        %v2832 = vsel %vm1256, %v2830, %v2831
        %v2833 = vrot.slane %v2751, 5
        %v2834 = vrot.slane %v2833, 4
        %v2835 = vrot.slane %v2032, 5
        %v2836 = vsel %vm1256, %v2834, %v2835
        %v2837 = vrot.slane %v2835, 4
        %v2838 = vrot.slane %v2033, 5
        %v2839 = vsel %vm1256, %v2837, %v2838
        %v2840 = vrot.slane %v2752, 5
        %v2841 = vrot.slane %v2840, 4
        %v2842 = vrot.slane %v2035, 5
        %v2843 = vsel %vm1256, %v2841, %v2842
        %v2844 = vrot.slane %v2842, 4
        %v2845 = vrot.slane %v2036, 5
        %v2846 = vsel %vm1256, %v2844, %v2845
        %v2847 = vrot.slane %v2753, 5
        %v2848 = vrot.slane %v2847, 4
        %v2849 = vrot.slane %v2038, 5
        %v2850 = vsel %vm1256, %v2848, %v2849
        %v2851 = vrot.slane %v2849, 4
        %v2852 = vrot.slane %v2039, 5
        %v2853 = vsel %vm1256, %v2851, %v2852
        %v2854 = vrot.slane %v2754, 5
        %v2855 = vrot.slane %v2854, 4
        %v2856 = vrot.slane %v2041, 5
        %v2857 = vsel %vm1256, %v2855, %v2856
        %v2858 = vrot.slane %v2856, 4
        %v2859 = vrot.slane %v2042, 5
        %v2860 = vsel %vm1256, %v2858, %v2859
        %v2861 = vrot.slane %v2755, 5
        %v2862 = vrot.slane %v2861, 4
        %v2863 = vrot.slane %v2044, 5
        %v2864 = vsel %vm1256, %v2862, %v2863
        %v2865 = vrot.slane %v2863, 4
        %v2866 = vrot.slane %v2045, 5
        %v2867 = vsel %vm1256, %v2865, %v2866
        %v2868 = vrot.slane %v2756, 5
        %v2869 = vrot.slane %v2868, 4
        %v2870 = vrot.slane %v2047, 5
        %v2871 = vsel %vm1256, %v2869, %v2870
        %v2872 = vrot.slane %v2870, 4
        %v2873 = vrot.slane %v2048, 5
        %v2874 = vsel %vm1256, %v2872, %v2873
        %v2875 = vrot.slane %v2757, 5
        %v2876 = vrot.slane %v2875, 4
        %v2877 = vrot.slane %v2050, 5
        %v2878 = vsel %vm1256, %v2876, %v2877
        %v2879 = vrot.slane %v2877, 4
        %v2880 = vrot.slane %v2051, 5
        %v2881 = vsel %vm1256, %v2879, %v2880
        %v2882 = vrot.slane %v2758, 5
        %v2883 = vrot.slane %v2882, 4
        %v2884 = vrot.slane %v2053, 5
        %v2885 = vsel %vm1256, %v2883, %v2884
        %v2886 = vrot.slane %v2884, 4
        %v2887 = vrot.slane %v2054, 5
        %v2888 = vsel %vm1256, %v2886, %v2887
        %v2889 = vrot.slane %v2759, 5
        %v2890 = vrot.slane %v2889, 4
        %v2891 = vrot.slane %v2056, 5
        %v2892 = vsel %vm1256, %v2890, %v2891
        %v2893 = vrot.slane %v2891, 4
        %v2894 = vrot.slane %v2057, 5
        %v2895 = vsel %vm1256, %v2893, %v2894
        %v2896 = vrot.slane %v2760, 5
        %v2897 = vrot.slane %v2896, 4
        %v2898 = vrot.slane %v2059, 5
        %v2899 = vsel %vm1256, %v2897, %v2898
        %v2900 = vrot.slane %v2898, 4
        %v2901 = vrot.slane %v2060, 5
        %v2902 = vsel %vm1256, %v2900, %v2901
        %v2903 = vrot.slane %v2761, 5
        %v2904 = vrot.slane %v2903, 4
        %v2905 = vrot.slane %v2062, 5
        %v2906 = vsel %vm1256, %v2904, %v2905
        %v2907 = vrot.slane %v2905, 4
        %v2908 = vrot.slane %v2063, 5
        %v2909 = vsel %vm1256, %v2907, %v2908
        %v2910 = vrot.slane %v2762, 5
        %v2911 = vrot.slane %v2910, 4
        %v2912 = vrot.slane %v2065, 5
        %v2913 = vsel %vm1256, %v2911, %v2912
        %v2914 = vrot.slane %v2912, 4
        %v2915 = vrot.slane %v2066, 5
        %v2916 = vsel %vm1256, %v2914, %v2915
        %v2917 = vrot.slane %v2763, 5
        %v2918 = vrot.slane %v2917, 4
        %v2919 = vrot.slane %v2068, 5
        %v2920 = vsel %vm1256, %v2918, %v2919
        %v2921 = vrot.slane %v2919, 4
        %v2922 = vrot.slane %v2069, 5
        %v2923 = vsel %vm1256, %v2921, %v2922
        %s2924 = scalar_lea.vmem %s1, 20
        %v2925 = vld [vmem:[%s2924] sm:$0xf]
        %v2926 = vunpack.c.l.b16 %v2815
        %v2927 = vunpack.c.l.b16 %v2818
        %v2928 = vunpack.c.l.b16 %v2822
        %v2929 = vunpack.c.l.b16 %v2825
        %v2930 = vunpack.c.l.b16 %v2829
        %v2931 = vunpack.c.l.b16 %v2832
        %v2932 = vunpack.c.l.b16 %v2836
        %v2933 = vunpack.c.l.b16 %v2839
        %v2934 = vunpack.c.l.b16 %v2843
        %v2935 = vunpack.c.l.b16 %v2846
        %v2936 = vunpack.c.l.b16 %v2850
        %v2937 = vunpack.c.l.b16 %v2853
        %v2938 = vunpack.c.l.b16 %v2857
        %v2939 = vunpack.c.l.b16 %v2860
        %v2940 = vunpack.c.l.b16 %v2864
        %v2941 = vunpack.c.l.b16 %v2867
        %v2942 = vunpack.c.l.b16 %v2871
        %v2943 = vunpack.c.l.b16 %v2874
        %v2944 = vunpack.c.l.b16 %v2878
        %v2945 = vunpack.c.l.b16 %v2881
        %v2946 = vunpack.c.l.b16 %v2885
        %v2947 = vunpack.c.l.b16 %v2888
        %v2948 = vunpack.c.l.b16 %v2892
        %v2949 = vunpack.c.l.b16 %v2895
        %v2950 = vunpack.c.l.b16 %v2899
        %v2951 = vunpack.c.l.b16 %v2902
        %v2952 = vunpack.c.l.b16 %v2906
        %v2953 = vunpack.c.l.b16 %v2909
        %v2954 = vunpack.c.l.b16 %v2913
        %v2955 = vunpack.c.l.b16 %v2916
        %v2956 = vunpack.c.l.b16 %v2920
        %v2957 = vunpack.c.l.b16 %v2923
        %v2958 = vpack.c.b16 %v2927, %v2926
        %v2959 = vpack.c.b16 %v2929, %v2928
        %v2960 = vpack.c.b16 %v2931, %v2930
        %v2961 = vpack.c.b16 %v2933, %v2932
        %v2962 = vpack.c.b16 %v2935, %v2934
        %v2963 = vpack.c.b16 %v2937, %v2936
        %v2964 = vpack.c.b16 %v2939, %v2938
        %v2965 = vpack.c.b16 %v2941, %v2940
        %v2966 = vpack.c.b16 %v2943, %v2942
        %v2967 = vpack.c.b16 %v2945, %v2944
        %v2968 = vpack.c.b16 %v2947, %v2946
        %v2969 = vpack.c.b16 %v2949, %v2948
        %v2970 = vpack.c.b16 %v2951, %v2950
        %v2971 = vpack.c.b16 %v2953, %v2952
        %v2972 = vpack.c.b16 %v2955, %v2954
        %v2973 = vpack.c.b16 %v2957, %v2956
        %v2975 = vsel %vm700, %v2958, 0
        %v2978 = vsel %vm700, %v2959, 0
        %v2981 = vsel %vm700, %v2960, 0
        %v2984 = vsel %vm700, %v2961, 0
        %v2987 = vsel %vm700, %v2962, 0
        %v2990 = vsel %vm700, %v2963, 0
        %v2993 = vsel %vm700, %v2964, 0
        %v2996 = vsel %vm700, %v2965, 0
        %v2999 = vsel %vm700, %v2966, 0
        %v3002 = vsel %vm700, %v2967, 0
        %v3005 = vsel %vm700, %v2968, 0
        %v3008 = vsel %vm700, %v2969, 0
        %v3011 = vsel %vm700, %v2970, 0
        %v3014 = vsel %vm700, %v2971, 0
        %v3017 = vsel %vm700, %v2972, 0
        %v3020 = vsel %vm700, %v2973, 0
        %v3023 = vsel %vm749, %v2925, 0
        %3025 = vmatprep.subr.bf16.mxu0 0
        %3026 = vmatpush1.bf16.msra.mxu0 %v3023
        %3027 = vmatprep.subr.bf16.mxu0 0
        %3028 = vmatpush1.bf16.msra.mxu0 0
        %3029 = vmatprep.subr.bf16.mxu0 0
        %3030 = vmatpush1.bf16.msra.mxu0 0
        %3031 = vmatprep.subr.bf16.mxu0 0
        %3032 = vmatpush1.bf16.msra.mxu0 0
        %3033 = vmatprep.subr.bf16.mxu0 0
        %3034 = vmatpush1.bf16.msra.mxu0 0
        %3035 = vmatprep.subr.bf16.mxu0 0
        %3036 = vmatpush1.bf16.msra.mxu0 0
        %3037 = vmatprep.subr.bf16.mxu0 0
        %3038 = vmatpush1.bf16.msra.mxu0 0
        %3039 = vmatprep.subr.bf16.mxu0 0
        %3040 = vmatpush1.bf16.msra.mxu0 0
        %3041 = vmatprep.subr.bf16.mxu0 0
        %3042 = vmatpush1.bf16.msra.mxu0 0
        %3043 = vmatprep.subr.bf16.mxu0 0
        %3044 = vmatpush1.bf16.msra.mxu0 0
        %3045 = vmatprep.subr.bf16.mxu0 0
        %3046 = vmatpush1.bf16.msra.mxu0 0
        %3047 = vmatprep.subr.bf16.mxu0 0
        %3048 = vmatpush1.bf16.msra.mxu0 0
        %3049 = vmatprep.subr.bf16.mxu0 0
        %3050 = vmatpush1.bf16.msra.mxu0 0
        %3051 = vmatprep.subr.bf16.mxu0 0
        %3052 = vmatpush1.bf16.msra.mxu0 0
        %3053 = vmatprep.subr.bf16.mxu0 0
        %3054 = vmatpush1.bf16.msra.mxu0 0
        %3055 = vmatprep.subr.bf16.mxu0 0
        %3056 = vmatpush1.bf16.msra.mxu0 0
        %3057 = vmatprep.mubr.bf16.mxu0 0
        %3058 = vmatmul.mubr.bf16.gmra.mrb[0].mxu0 %v2975
        %v3059 = vpop.f32.mrb[0].mxu0
        %v3060 = vadd.f32 0.0, %v3059
        %v3061 = vpop.f32.mrb[0].mxu0
        %v3062 = vpop.f32.mrb[0].mxu0
        %v3063 = vadd.f32 0.0, %v3062
        %v3064 = vpop.f32.mrb[0].mxu0
        %3065 = vmatprep.mubr.bf16.mxu0 0
        %3066 = vmatmul.mubr.bf16.gmra.mrb[0].mxu0 %v2978
        %v3067 = vpop.f32.mrb[0].mxu0
        %v3068 = vadd.f32 0.0, %v3067
        %v3069 = vpop.f32.mrb[0].mxu0
        %v3070 = vpop.f32.mrb[0].mxu0
        %v3071 = vadd.f32 0.0, %v3070
        %v3072 = vpop.f32.mrb[0].mxu0
        %3073 = vmatprep.mubr.bf16.mxu0 0
        %3074 = vmatmul.mubr.bf16.gmra.mrb[0].mxu0 %v2981
        %v3075 = vpop.f32.mrb[0].mxu0
        %v3076 = vadd.f32 0.0, %v3075
        %v3077 = vpop.f32.mrb[0].mxu0
        %v3078 = vpop.f32.mrb[0].mxu0
        %v3079 = vadd.f32 0.0, %v3078
        %v3080 = vpop.f32.mrb[0].mxu0
        %3081 = vmatprep.mubr.bf16.mxu0 0
        %3082 = vmatmul.mubr.bf16.gmra.mrb[0].mxu0 %v2984
        %v3083 = vpop.f32.mrb[0].mxu0
        %v3084 = vadd.f32 0.0, %v3083
        %v3085 = vpop.f32.mrb[0].mxu0
        %v3086 = vpop.f32.mrb[0].mxu0
        %v3087 = vadd.f32 0.0, %v3086
        %v3088 = vpop.f32.mrb[0].mxu0
        %3089 = vmatprep.mubr.bf16.mxu0 0
        %3090 = vmatmul.mubr.bf16.gmra.mrb[0].mxu0 %v2987
        %v3091 = vpop.f32.mrb[0].mxu0
        %v3092 = vadd.f32 0.0, %v3091
        %v3093 = vpop.f32.mrb[0].mxu0
        %v3094 = vpop.f32.mrb[0].mxu0
        %v3095 = vadd.f32 0.0, %v3094
        %v3096 = vpop.f32.mrb[0].mxu0
        %3097 = vmatprep.mubr.bf16.mxu0 0
        %3098 = vmatmul.mubr.bf16.gmra.mrb[0].mxu0 %v2990
        %v3099 = vpop.f32.mrb[0].mxu0
        %v3100 = vadd.f32 0.0, %v3099
        %v3101 = vpop.f32.mrb[0].mxu0
        %v3102 = vpop.f32.mrb[0].mxu0
        %v3103 = vadd.f32 0.0, %v3102
        %v3104 = vpop.f32.mrb[0].mxu0
        %3105 = vmatprep.mubr.bf16.mxu0 0
        %3106 = vmatmul.mubr.bf16.gmra.mrb[0].mxu0 %v2993
        %v3107 = vpop.f32.mrb[0].mxu0
        %v3108 = vadd.f32 0.0, %v3107
        %v3109 = vpop.f32.mrb[0].mxu0
        %v3110 = vpop.f32.mrb[0].mxu0
        %v3111 = vadd.f32 0.0, %v3110
        %v3112 = vpop.f32.mrb[0].mxu0
        %3113 = vmatprep.mubr.bf16.mxu0 0
        %3114 = vmatmul.mubr.bf16.gmra.mrb[0].mxu0 %v2996
        %v3115 = vpop.f32.mrb[0].mxu0
        %v3116 = vadd.f32 0.0, %v3115
        %v3117 = vpop.f32.mrb[0].mxu0
        %v3118 = vpop.f32.mrb[0].mxu0
        %v3119 = vadd.f32 0.0, %v3118
        %v3120 = vpop.f32.mrb[0].mxu0
        %3121 = vmatprep.mubr.bf16.mxu0 0
        %3122 = vmatmul.mubr.bf16.gmra.mrb[0].mxu0 %v2999
        %v3123 = vpop.f32.mrb[0].mxu0
        %v3124 = vadd.f32 0.0, %v3123
        %v3125 = vpop.f32.mrb[0].mxu0
        %v3126 = vpop.f32.mrb[0].mxu0
        %v3127 = vadd.f32 0.0, %v3126
        %v3128 = vpop.f32.mrb[0].mxu0
        %3129 = vmatprep.mubr.bf16.mxu0 0
        %3130 = vmatmul.mubr.bf16.gmra.mrb[0].mxu0 %v3002
        %v3131 = vpop.f32.mrb[0].mxu0
        %v3132 = vadd.f32 0.0, %v3131
        %v3133 = vpop.f32.mrb[0].mxu0
        %v3134 = vpop.f32.mrb[0].mxu0
        %v3135 = vadd.f32 0.0, %v3134
        %v3136 = vpop.f32.mrb[0].mxu0
        %3137 = vmatprep.mubr.bf16.mxu0 0
        %3138 = vmatmul.mubr.bf16.gmra.mrb[0].mxu0 %v3005
        %v3139 = vpop.f32.mrb[0].mxu0
        %v3140 = vadd.f32 0.0, %v3139
        %v3141 = vpop.f32.mrb[0].mxu0
        %v3142 = vpop.f32.mrb[0].mxu0
        %v3143 = vadd.f32 0.0, %v3142
        %v3144 = vpop.f32.mrb[0].mxu0
        %3145 = vmatprep.mubr.bf16.mxu0 0
        %3146 = vmatmul.mubr.bf16.gmra.mrb[0].mxu0 %v3008
        %v3147 = vpop.f32.mrb[0].mxu0
        %v3148 = vadd.f32 0.0, %v3147
        %v3149 = vpop.f32.mrb[0].mxu0
        %v3150 = vpop.f32.mrb[0].mxu0
        %v3151 = vadd.f32 0.0, %v3150
        %v3152 = vpop.f32.mrb[0].mxu0
        %3153 = vmatprep.mubr.bf16.mxu0 0
        %3154 = vmatmul.mubr.bf16.gmra.mrb[0].mxu0 %v3011
        %v3155 = vpop.f32.mrb[0].mxu0
        %v3156 = vadd.f32 0.0, %v3155
        %v3157 = vpop.f32.mrb[0].mxu0
        %v3158 = vpop.f32.mrb[0].mxu0
        %v3159 = vadd.f32 0.0, %v3158
        %v3160 = vpop.f32.mrb[0].mxu0
        %3161 = vmatprep.mubr.bf16.mxu0 0
        %3162 = vmatmul.mubr.bf16.gmra.mrb[0].mxu0 %v3014
        %v3163 = vpop.f32.mrb[0].mxu0
        %v3164 = vadd.f32 0.0, %v3163
        %v3165 = vpop.f32.mrb[0].mxu0
        %v3166 = vpop.f32.mrb[0].mxu0
        %v3167 = vadd.f32 0.0, %v3166
        %v3168 = vpop.f32.mrb[0].mxu0
        %3169 = vmatprep.mubr.bf16.mxu0 0
        %3170 = vmatmul.mubr.bf16.gmra.mrb[0].mxu0 %v3017
        %v3171 = vpop.f32.mrb[0].mxu0
        %v3172 = vadd.f32 0.0, %v3171
        %v3173 = vpop.f32.mrb[0].mxu0
        %v3174 = vpop.f32.mrb[0].mxu0
        %v3175 = vadd.f32 0.0, %v3174
        %v3176 = vpop.f32.mrb[0].mxu0
        %3177 = vmatprep.mubr.bf16.mxu0 0
        %3178 = vmatmul.mubr.bf16.gmra.mrb[0].mxu0 %v3020
        %v3179 = vpop.f32.mrb[0].mxu0
        %v3180 = vadd.f32 0.0, %v3179
        %v3181 = vpop.f32.mrb[0].mxu0
        %v3182 = vpop.f32.mrb[0].mxu0
        %v3183 = vadd.f32 0.0, %v3182
        %v3184 = vpop.f32.mrb[0].mxu0
        %3185 = vdwg.mxu0
        %v3186 = vadd.f32 %v2716, %v3060
        %v3187 = vadd.f32 %v2717, %v3063
        %v3188 = vadd.f32 %v2718, %v3068
        %v3189 = vadd.f32 %v2719, %v3071
        %v3190 = vadd.f32 %v2720, %v3076
        %v3191 = vadd.f32 %v2721, %v3079
        %v3192 = vadd.f32 %v2722, %v3084
        %v3193 = vadd.f32 %v2723, %v3087
        %v3194 = vadd.f32 %v2724, %v3092
        %v3195 = vadd.f32 %v2725, %v3095
        %v3196 = vadd.f32 %v2726, %v3100
        %v3197 = vadd.f32 %v2727, %v3103
        %v3198 = vadd.f32 %v2728, %v3108
        %v3199 = vadd.f32 %v2729, %v3111
        %v3200 = vadd.f32 %v2730, %v3116
        %v3201 = vadd.f32 %v2731, %v3119
        %v3202 = vadd.f32 %v2732, %v3124
        %v3203 = vadd.f32 %v2733, %v3127
        %v3204 = vadd.f32 %v2734, %v3132
        %v3205 = vadd.f32 %v2735, %v3135
        %v3206 = vadd.f32 %v2736, %v3140
        %v3207 = vadd.f32 %v2737, %v3143
        %v3208 = vadd.f32 %v2738, %v3148
        %v3209 = vadd.f32 %v2739, %v3151
        %v3210 = vadd.f32 %v2740, %v3156
        %v3211 = vadd.f32 %v2741, %v3159
        %v3212 = vadd.f32 %v2742, %v3164
        %v3213 = vadd.f32 %v2743, %v3167
        %v3214 = vadd.f32 %v2744, %v3172
        %v3215 = vadd.f32 %v2745, %v3175
        %v3216 = vadd.f32 %v2746, %v3180
        %v3217 = vadd.f32 %v2747, %v3183
        %s3218 = scalar_lea.vmem %s209, 24
        %v3219 = vld [vmem:[%s3218] sm:$0xf]
        %v3220 = vld [vmem:[%s3218 + $0x4] sm:$0xf]
        %v3221 = vld [vmem:[%s3218 + $0xc] sm:$0xf]
        %v3222 = vld [vmem:[%s3218 + $0x10] sm:$0xf]
        %v3223 = vld [vmem:[%s3218 + $0x18] sm:$0xf]
        %v3224 = vld [vmem:[%s3218 + $0x1c] sm:$0xf]
        %v3225 = vld [vmem:[%s3218 + $0x24] sm:$0xf]
        %v3226 = vld [vmem:[%s3218 + $0x28] sm:$0xf]
        %v3227 = vld [vmem:[%s3218 + $0x30] sm:$0xf]
        %v3228 = vld [vmem:[%s3218 + $0x34] sm:$0xf]
        %v3229 = vld [vmem:[%s3218 + $0x3c] sm:$0xf]
        %v3230 = vld [vmem:[%s3218 + $0x40] sm:$0xf]
        %v3231 = vld [vmem:[%s3218 + $0x48] sm:$0xf]
        %v3232 = vld [vmem:[%s3218 + $0x4c] sm:$0xf]
        %v3233 = vld [vmem:[%s3218 + $0x54] sm:$0xf]
        %v3234 = vld [vmem:[%s3218 + $0x58] sm:$0xf]
        %v3235 = vld [vmem:[%s3218 + $0x60] sm:$0xf]
        %v3236 = vld [vmem:[%s3218 + $0x64] sm:$0xf]
        %v3237 = vld [vmem:[%s3218 + $0x6c] sm:$0xf]
        %v3238 = vld [vmem:[%s3218 + $0x70] sm:$0xf]
        %v3239 = vld [vmem:[%s3218 + $0x78] sm:$0xf]
        %v3240 = vld [vmem:[%s3218 + $0x7c] sm:$0xf]
        %v3241 = vld [vmem:[%s3218 + $0x84] sm:$0xf]
        %v3242 = vld [vmem:[%s3218 + $0x88] sm:$0xf]
        %v3243 = vld [vmem:[%s3218 + $0x90] sm:$0xf]
        %v3244 = vld [vmem:[%s3218 + $0x94] sm:$0xf]
        %v3245 = vld [vmem:[%s3218 + $0x9c] sm:$0xf]
        %v3246 = vld [vmem:[%s3218 + $0xa0] sm:$0xf]
        %v3247 = vld [vmem:[%s3218 + $0xa8] sm:$0xf]
        %v3248 = vld [vmem:[%s3218 + $0xac] sm:$0xf]
        %v3249 = vld [vmem:[%s3218 + $0xb4] sm:$0xf]
        %v3250 = vld [vmem:[%s3218 + $0xb8] sm:$0xf]
        %s3251 = scalar_lea.vmem %s1, 24
        %v3252 = vld [vmem:[%s3251] sm:$0xf]
        %v3285 = vunpack.c.l.b16 %v3219
        %v3286 = vunpack.c.l.b16 %v3220
        %v3287 = vunpack.c.l.b16 %v3221
        %v3288 = vunpack.c.l.b16 %v3222
        %v3289 = vunpack.c.l.b16 %v3223
        %v3290 = vunpack.c.l.b16 %v3224
        %v3291 = vunpack.c.l.b16 %v3225
        %v3292 = vunpack.c.l.b16 %v3226
        %v3293 = vunpack.c.l.b16 %v3227
        %v3294 = vunpack.c.l.b16 %v3228
        %v3295 = vunpack.c.l.b16 %v3229
        %v3296 = vunpack.c.l.b16 %v3230
        %v3297 = vunpack.c.l.b16 %v3231
        %v3298 = vunpack.c.l.b16 %v3232
        %v3299 = vunpack.c.l.b16 %v3233
        %v3300 = vunpack.c.l.b16 %v3234
        %v3301 = vunpack.c.l.b16 %v3235
        %v3302 = vunpack.c.l.b16 %v3236
        %v3303 = vunpack.c.l.b16 %v3237
        %v3304 = vunpack.c.l.b16 %v3238
        %v3305 = vunpack.c.l.b16 %v3239
        %v3306 = vunpack.c.l.b16 %v3240
        %v3307 = vunpack.c.l.b16 %v3241
        %v3308 = vunpack.c.l.b16 %v3242
        %v3309 = vunpack.c.l.b16 %v3243
        %v3310 = vunpack.c.l.b16 %v3244
        %v3311 = vunpack.c.l.b16 %v3245
        %v3312 = vunpack.c.l.b16 %v3246
        %v3313 = vunpack.c.l.b16 %v3247
        %v3314 = vunpack.c.l.b16 %v3248
        %v3315 = vunpack.c.l.b16 %v3249
        %v3316 = vunpack.c.l.b16 %v3250
        %v3317 = vpack.c.b16 %v3286, %v3285
        %v3318 = vpack.c.b16 %v3288, %v3287
        %v3319 = vpack.c.b16 %v3290, %v3289
        %v3320 = vpack.c.b16 %v3292, %v3291
        %v3321 = vpack.c.b16 %v3294, %v3293
        %v3322 = vpack.c.b16 %v3296, %v3295
        %v3323 = vpack.c.b16 %v3298, %v3297
        %v3324 = vpack.c.b16 %v3300, %v3299
        %v3325 = vpack.c.b16 %v3302, %v3301
        %v3326 = vpack.c.b16 %v3304, %v3303
        %v3327 = vpack.c.b16 %v3306, %v3305
        %v3328 = vpack.c.b16 %v3308, %v3307
        %v3329 = vpack.c.b16 %v3310, %v3309
        %v3330 = vpack.c.b16 %v3312, %v3311
        %v3331 = vpack.c.b16 %v3314, %v3313
        %v3332 = vpack.c.b16 %v3316, %v3315
        %v3334 = vsel %vm700, %v3317, 0
        %v3337 = vsel %vm700, %v3318, 0
        %v3340 = vsel %vm700, %v3319, 0
        %v3343 = vsel %vm700, %v3320, 0
        %v3346 = vsel %vm700, %v3321, 0
        %v3349 = vsel %vm700, %v3322, 0
        %v3352 = vsel %vm700, %v3323, 0
        %v3355 = vsel %vm700, %v3324, 0
        %v3358 = vsel %vm700, %v3325, 0
        %v3361 = vsel %vm700, %v3326, 0
        %v3364 = vsel %vm700, %v3327, 0
        %v3367 = vsel %vm700, %v3328, 0
        %v3370 = vsel %vm700, %v3329, 0
        %v3373 = vsel %vm700, %v3330, 0
        %v3376 = vsel %vm700, %v3331, 0
        %v3379 = vsel %vm700, %v3332, 0
        %v3382 = vsel %vm749, %v3252, 0
        %3384 = vmatprep.subr.bf16.mxu0 0
        %3385 = vmatpush1.bf16.msra.mxu0 %v3382
        %3386 = vmatprep.subr.bf16.mxu0 0
        %3387 = vmatpush1.bf16.msra.mxu0 0
        %3388 = vmatprep.subr.bf16.mxu0 0
        %3389 = vmatpush1.bf16.msra.mxu0 0
        %3390 = vmatprep.subr.bf16.mxu0 0
        %3391 = vmatpush1.bf16.msra.mxu0 0
        %3392 = vmatprep.subr.bf16.mxu0 0
        %3393 = vmatpush1.bf16.msra.mxu0 0
        %3394 = vmatprep.subr.bf16.mxu0 0
        %3395 = vmatpush1.bf16.msra.mxu0 0
        %3396 = vmatprep.subr.bf16.mxu0 0
        %3397 = vmatpush1.bf16.msra.mxu0 0
        %3398 = vmatprep.subr.bf16.mxu0 0
        %3399 = vmatpush1.bf16.msra.mxu0 0
        %3400 = vmatprep.subr.bf16.mxu0 0
        %3401 = vmatpush1.bf16.msra.mxu0 0
        %3402 = vmatprep.subr.bf16.mxu0 0
        %3403 = vmatpush1.bf16.msra.mxu0 0
        %3404 = vmatprep.subr.bf16.mxu0 0
        %3405 = vmatpush1.bf16.msra.mxu0 0
        %3406 = vmatprep.subr.bf16.mxu0 0
        %3407 = vmatpush1.bf16.msra.mxu0 0
        %3408 = vmatprep.subr.bf16.mxu0 0
        %3409 = vmatpush1.bf16.msra.mxu0 0
        %3410 = vmatprep.subr.bf16.mxu0 0
        %3411 = vmatpush1.bf16.msra.mxu0 0
        %3412 = vmatprep.subr.bf16.mxu0 0
        %3413 = vmatpush1.bf16.msra.mxu0 0
        %3414 = vmatprep.subr.bf16.mxu0 0
        %3415 = vmatpush1.bf16.msra.mxu0 0
        %3416 = vmatprep.mubr.bf16.mxu0 0
        %3417 = vmatmul.mubr.bf16.gmra.mrb[0].mxu0 %v3334
        %v3418 = vpop.f32.mrb[0].mxu0
        %v3419 = vadd.f32 0.0, %v3418
        %v3420 = vpop.f32.mrb[0].mxu0
        %v3421 = vpop.f32.mrb[0].mxu0
        %v3422 = vadd.f32 0.0, %v3421
        %v3423 = vpop.f32.mrb[0].mxu0
        %3424 = vmatprep.mubr.bf16.mxu0 0
        %3425 = vmatmul.mubr.bf16.gmra.mrb[0].mxu0 %v3337
        %v3426 = vpop.f32.mrb[0].mxu0
        %v3427 = vadd.f32 0.0, %v3426
        %v3428 = vpop.f32.mrb[0].mxu0
        %v3429 = vpop.f32.mrb[0].mxu0
        %v3430 = vadd.f32 0.0, %v3429
        %v3431 = vpop.f32.mrb[0].mxu0
        %3432 = vmatprep.mubr.bf16.mxu0 0
        %3433 = vmatmul.mubr.bf16.gmra.mrb[0].mxu0 %v3340
        %v3434 = vpop.f32.mrb[0].mxu0
        %v3435 = vadd.f32 0.0, %v3434
        %v3436 = vpop.f32.mrb[0].mxu0
        %v3437 = vpop.f32.mrb[0].mxu0
        %v3438 = vadd.f32 0.0, %v3437
        %v3439 = vpop.f32.mrb[0].mxu0
        %3440 = vmatprep.mubr.bf16.mxu0 0
        %3441 = vmatmul.mubr.bf16.gmra.mrb[0].mxu0 %v3343
        %v3442 = vpop.f32.mrb[0].mxu0
        %v3443 = vadd.f32 0.0, %v3442
        %v3444 = vpop.f32.mrb[0].mxu0
        %v3445 = vpop.f32.mrb[0].mxu0
        %v3446 = vadd.f32 0.0, %v3445
        %v3447 = vpop.f32.mrb[0].mxu0
        %3448 = vmatprep.mubr.bf16.mxu0 0
        %3449 = vmatmul.mubr.bf16.gmra.mrb[0].mxu0 %v3346
        %v3450 = vpop.f32.mrb[0].mxu0
        %v3451 = vadd.f32 0.0, %v3450
        %v3452 = vpop.f32.mrb[0].mxu0
        %v3453 = vpop.f32.mrb[0].mxu0
        %v3454 = vadd.f32 0.0, %v3453
        %v3455 = vpop.f32.mrb[0].mxu0
        %3456 = vmatprep.mubr.bf16.mxu0 0
        %3457 = vmatmul.mubr.bf16.gmra.mrb[0].mxu0 %v3349
        %v3458 = vpop.f32.mrb[0].mxu0
        %v3459 = vadd.f32 0.0, %v3458
        %v3460 = vpop.f32.mrb[0].mxu0
        %v3461 = vpop.f32.mrb[0].mxu0
        %v3462 = vadd.f32 0.0, %v3461
        %v3463 = vpop.f32.mrb[0].mxu0
        %3464 = vmatprep.mubr.bf16.mxu0 0
        %3465 = vmatmul.mubr.bf16.gmra.mrb[0].mxu0 %v3352
        %v3466 = vpop.f32.mrb[0].mxu0
        %v3467 = vadd.f32 0.0, %v3466
        %v3468 = vpop.f32.mrb[0].mxu0
        %v3469 = vpop.f32.mrb[0].mxu0
        %v3470 = vadd.f32 0.0, %v3469
        %v3471 = vpop.f32.mrb[0].mxu0
        %3472 = vmatprep.mubr.bf16.mxu0 0
        %3473 = vmatmul.mubr.bf16.gmra.mrb[0].mxu0 %v3355
        %v3474 = vpop.f32.mrb[0].mxu0
        %v3475 = vadd.f32 0.0, %v3474
        %v3476 = vpop.f32.mrb[0].mxu0
        %v3477 = vpop.f32.mrb[0].mxu0
        %v3478 = vadd.f32 0.0, %v3477
        %v3479 = vpop.f32.mrb[0].mxu0
        %3480 = vmatprep.mubr.bf16.mxu0 0
        %3481 = vmatmul.mubr.bf16.gmra.mrb[0].mxu0 %v3358
        %v3482 = vpop.f32.mrb[0].mxu0
        %v3483 = vadd.f32 0.0, %v3482
        %v3484 = vpop.f32.mrb[0].mxu0
        %v3485 = vpop.f32.mrb[0].mxu0
        %v3486 = vadd.f32 0.0, %v3485
        %v3487 = vpop.f32.mrb[0].mxu0
        %3488 = vmatprep.mubr.bf16.mxu0 0
        %3489 = vmatmul.mubr.bf16.gmra.mrb[0].mxu0 %v3361
        %v3490 = vpop.f32.mrb[0].mxu0
        %v3491 = vadd.f32 0.0, %v3490
        %v3492 = vpop.f32.mrb[0].mxu0
        %v3493 = vpop.f32.mrb[0].mxu0
        %v3494 = vadd.f32 0.0, %v3493
        %v3495 = vpop.f32.mrb[0].mxu0
        %3496 = vmatprep.mubr.bf16.mxu0 0
        %3497 = vmatmul.mubr.bf16.gmra.mrb[0].mxu0 %v3364
        %v3498 = vpop.f32.mrb[0].mxu0
        %v3499 = vadd.f32 0.0, %v3498
        %v3500 = vpop.f32.mrb[0].mxu0
        %v3501 = vpop.f32.mrb[0].mxu0
        %v3502 = vadd.f32 0.0, %v3501
        %v3503 = vpop.f32.mrb[0].mxu0
        %3504 = vmatprep.mubr.bf16.mxu0 0
        %3505 = vmatmul.mubr.bf16.gmra.mrb[0].mxu0 %v3367
        %v3506 = vpop.f32.mrb[0].mxu0
        %v3507 = vadd.f32 0.0, %v3506
        %v3508 = vpop.f32.mrb[0].mxu0
        %v3509 = vpop.f32.mrb[0].mxu0
        %v3510 = vadd.f32 0.0, %v3509
        %v3511 = vpop.f32.mrb[0].mxu0
        %3512 = vmatprep.mubr.bf16.mxu0 0
        %3513 = vmatmul.mubr.bf16.gmra.mrb[0].mxu0 %v3370
        %v3514 = vpop.f32.mrb[0].mxu0
        %v3515 = vadd.f32 0.0, %v3514
        %v3516 = vpop.f32.mrb[0].mxu0
        %v3517 = vpop.f32.mrb[0].mxu0
        %v3518 = vadd.f32 0.0, %v3517
        %v3519 = vpop.f32.mrb[0].mxu0
        %3520 = vmatprep.mubr.bf16.mxu0 0
        %3521 = vmatmul.mubr.bf16.gmra.mrb[0].mxu0 %v3373
        %v3522 = vpop.f32.mrb[0].mxu0
        %v3523 = vadd.f32 0.0, %v3522
        %v3524 = vpop.f32.mrb[0].mxu0
        %v3525 = vpop.f32.mrb[0].mxu0
        %v3526 = vadd.f32 0.0, %v3525
        %v3527 = vpop.f32.mrb[0].mxu0
        %3528 = vmatprep.mubr.bf16.mxu0 0
        %3529 = vmatmul.mubr.bf16.gmra.mrb[0].mxu0 %v3376
        %v3530 = vpop.f32.mrb[0].mxu0
        %v3531 = vadd.f32 0.0, %v3530
        %v3532 = vpop.f32.mrb[0].mxu0
        %v3533 = vpop.f32.mrb[0].mxu0
        %v3534 = vadd.f32 0.0, %v3533
        %v3535 = vpop.f32.mrb[0].mxu0
        %3536 = vmatprep.mubr.bf16.mxu0 0
        %3537 = vmatmul.mubr.bf16.gmra.mrb[0].mxu0 %v3379
        %v3538 = vpop.f32.mrb[0].mxu0
        %v3539 = vadd.f32 0.0, %v3538
        %v3540 = vpop.f32.mrb[0].mxu0
        %v3541 = vpop.f32.mrb[0].mxu0
        %v3542 = vadd.f32 0.0, %v3541
        %v3543 = vpop.f32.mrb[0].mxu0
        %3544 = vdwg.mxu0
        %v3545 = vadd.f32 %v3186, %v3419
        %v3546 = vadd.f32 %v3187, %v3422
        %v3547 = vadd.f32 %v3188, %v3427
        %v3548 = vadd.f32 %v3189, %v3430
        %v3549 = vadd.f32 %v3190, %v3435
        %v3550 = vadd.f32 %v3191, %v3438
        %v3551 = vadd.f32 %v3192, %v3443
        %v3552 = vadd.f32 %v3193, %v3446
        %v3553 = vadd.f32 %v3194, %v3451
        %v3554 = vadd.f32 %v3195, %v3454
        %v3555 = vadd.f32 %v3196, %v3459
        %v3556 = vadd.f32 %v3197, %v3462
        %v3557 = vadd.f32 %v3198, %v3467
        %v3558 = vadd.f32 %v3199, %v3470
        %v3559 = vadd.f32 %v3200, %v3475
        %v3560 = vadd.f32 %v3201, %v3478
        %v3561 = vadd.f32 %v3202, %v3483
        %v3562 = vadd.f32 %v3203, %v3486
        %v3563 = vadd.f32 %v3204, %v3491
        %v3564 = vadd.f32 %v3205, %v3494
        %v3565 = vadd.f32 %v3206, %v3499
        %v3566 = vadd.f32 %v3207, %v3502
        %v3567 = vadd.f32 %v3208, %v3507
        %v3568 = vadd.f32 %v3209, %v3510
        %v3569 = vadd.f32 %v3210, %v3515
        %v3570 = vadd.f32 %v3211, %v3518
        %v3571 = vadd.f32 %v3212, %v3523
        %v3572 = vadd.f32 %v3213, %v3526
        %v3573 = vadd.f32 %v3214, %v3531
        %v3574 = vadd.f32 %v3215, %v3534
        %v3575 = vadd.f32 %v3216, %v3539
        %v3576 = vadd.f32 %v3217, %v3542
        %v3577 = vld [vmem:[%s3218] sm:$0xf]
        %v3578 = vld [vmem:[%s3218 + $0x4] sm:$0xf]
        %v3579 = vld [vmem:[%s3218 + $0x8] sm:$0x1]
        %v3580 = vld [vmem:[%s3218 + $0xc] sm:$0xf]
        %v3581 = vld [vmem:[%s3218 + $0x10] sm:$0xf]
        %v3582 = vld [vmem:[%s3218 + $0x14] sm:$0x1]
        %v3583 = vld [vmem:[%s3218 + $0x18] sm:$0xf]
        %v3584 = vld [vmem:[%s3218 + $0x1c] sm:$0xf]
        %v3585 = vld [vmem:[%s3218 + $0x20] sm:$0x1]
        %v3586 = vld [vmem:[%s3218 + $0x24] sm:$0xf]
        %v3587 = vld [vmem:[%s3218 + $0x28] sm:$0xf]
        %v3588 = vld [vmem:[%s3218 + $0x2c] sm:$0x1]
        %v3589 = vld [vmem:[%s3218 + $0x30] sm:$0xf]
        %v3590 = vld [vmem:[%s3218 + $0x34] sm:$0xf]
        %v3591 = vld [vmem:[%s3218 + $0x38] sm:$0x1]
        %v3592 = vld [vmem:[%s3218 + $0x3c] sm:$0xf]
        %v3593 = vld [vmem:[%s3218 + $0x40] sm:$0xf]
        %v3594 = vld [vmem:[%s3218 + $0x44] sm:$0x1]
        %v3595 = vld [vmem:[%s3218 + $0x48] sm:$0xf]
        %v3596 = vld [vmem:[%s3218 + $0x4c] sm:$0xf]
        %v3597 = vld [vmem:[%s3218 + $0x50] sm:$0x1]
        %v3598 = vld [vmem:[%s3218 + $0x54] sm:$0xf]
        %v3599 = vld [vmem:[%s3218 + $0x58] sm:$0xf]
        %v3600 = vld [vmem:[%s3218 + $0x5c] sm:$0x1]
        %v3601 = vld [vmem:[%s3218 + $0x60] sm:$0xf]
        %v3602 = vld [vmem:[%s3218 + $0x64] sm:$0xf]
        %v3603 = vld [vmem:[%s3218 + $0x68] sm:$0x1]
        %v3604 = vld [vmem:[%s3218 + $0x6c] sm:$0xf]
        %v3605 = vld [vmem:[%s3218 + $0x70] sm:$0xf]
        %v3606 = vld [vmem:[%s3218 + $0x74] sm:$0x1]
        %v3607 = vld [vmem:[%s3218 + $0x78] sm:$0xf]
        %v3608 = vld [vmem:[%s3218 + $0x7c] sm:$0xf]
        %v3609 = vld [vmem:[%s3218 + $0x80] sm:$0x1]
        %v3610 = vld [vmem:[%s3218 + $0x84] sm:$0xf]
        %v3611 = vld [vmem:[%s3218 + $0x88] sm:$0xf]
        %v3612 = vld [vmem:[%s3218 + $0x8c] sm:$0x1]
        %v3613 = vld [vmem:[%s3218 + $0x90] sm:$0xf]
        %v3614 = vld [vmem:[%s3218 + $0x94] sm:$0xf]
        %v3615 = vld [vmem:[%s3218 + $0x98] sm:$0x1]
        %v3616 = vld [vmem:[%s3218 + $0x9c] sm:$0xf]
        %v3617 = vld [vmem:[%s3218 + $0xa0] sm:$0xf]
        %v3618 = vld [vmem:[%s3218 + $0xa4] sm:$0x1]
        %v3619 = vld [vmem:[%s3218 + $0xa8] sm:$0xf]
        %v3620 = vld [vmem:[%s3218 + $0xac] sm:$0xf]
        %v3621 = vld [vmem:[%s3218 + $0xb0] sm:$0x1]
        %v3622 = vld [vmem:[%s3218 + $0xb4] sm:$0xf]
        %v3623 = vld [vmem:[%s3218 + $0xb8] sm:$0xf]
        %v3624 = vld [vmem:[%s3218 + $0xbc] sm:$0x1]
        %v3626 = vshrl.u32 %v3577, 16
        %v3628 = vrot.slane %v3626, 4
        %v3629 = vshll.u32 %v3577, 16
        %v3631 = vrot.slane %v3629, 5
        %v3632 = vor.u32 %v3628, %v3631
        %v3633 = vrot.slane %v3632, 4
        %v3635 = vshll.u32 %v3578, 16
        %v3637 = vrot.slane %v3635, 5
        %v3638 = vsel %vm265, %v3633, %v3637
        %v3639 = vshrl.u32 %v3578, 16
        %v3641 = vrot.slane %v3639, 4
        %v3642 = vor.u32 %v3641, %v3637
        %v3643 = vrot.slane %v3642, 4
        %v3645 = vshll.u32 %v3579, 16
        %v3647 = vrot.slane %v3645, 5
        %v3648 = vsel %vm265, %v3643, %v3647
        %v3650 = vshrl.u32 %v3580, 16
        %v3652 = vrot.slane %v3650, 4
        %v3653 = vshll.u32 %v3580, 16
        %v3655 = vrot.slane %v3653, 5
        %v3656 = vor.u32 %v3652, %v3655
        %v3657 = vrot.slane %v3656, 4
        %v3659 = vshll.u32 %v3581, 16
        %v3661 = vrot.slane %v3659, 5
        %v3662 = vsel %vm265, %v3657, %v3661
        %v3663 = vshrl.u32 %v3581, 16
        %v3665 = vrot.slane %v3663, 4
        %v3666 = vor.u32 %v3665, %v3661
        %v3667 = vrot.slane %v3666, 4
        %v3669 = vshll.u32 %v3582, 16
        %v3671 = vrot.slane %v3669, 5
        %v3672 = vsel %vm265, %v3667, %v3671
        %v3674 = vshrl.u32 %v3583, 16
        %v3676 = vrot.slane %v3674, 4
        %v3677 = vshll.u32 %v3583, 16
        %v3679 = vrot.slane %v3677, 5
        %v3680 = vor.u32 %v3676, %v3679
        %v3681 = vrot.slane %v3680, 4
        %v3683 = vshll.u32 %v3584, 16
        %v3685 = vrot.slane %v3683, 5
        %v3686 = vsel %vm265, %v3681, %v3685
        %v3687 = vshrl.u32 %v3584, 16
        %v3689 = vrot.slane %v3687, 4
        %v3690 = vor.u32 %v3689, %v3685
        %v3691 = vrot.slane %v3690, 4
        %v3693 = vshll.u32 %v3585, 16
        %v3695 = vrot.slane %v3693, 5
        %v3696 = vsel %vm265, %v3691, %v3695
        %v3698 = vshrl.u32 %v3586, 16
        %v3700 = vrot.slane %v3698, 4
        %v3701 = vshll.u32 %v3586, 16
        %v3703 = vrot.slane %v3701, 5
        %v3704 = vor.u32 %v3700, %v3703
        %v3705 = vrot.slane %v3704, 4
        %v3707 = vshll.u32 %v3587, 16
        %v3709 = vrot.slane %v3707, 5
        %v3710 = vsel %vm265, %v3705, %v3709
        %v3711 = vshrl.u32 %v3587, 16
        %v3713 = vrot.slane %v3711, 4
        %v3714 = vor.u32 %v3713, %v3709
        %v3715 = vrot.slane %v3714, 4
        %v3717 = vshll.u32 %v3588, 16
        %v3719 = vrot.slane %v3717, 5
        %v3720 = vsel %vm265, %v3715, %v3719
        %v3722 = vshrl.u32 %v3589, 16
        %v3724 = vrot.slane %v3722, 4
        %v3725 = vshll.u32 %v3589, 16
        %v3727 = vrot.slane %v3725, 5
        %v3728 = vor.u32 %v3724, %v3727
        %v3729 = vrot.slane %v3728, 4
        %v3731 = vshll.u32 %v3590, 16
        %v3733 = vrot.slane %v3731, 5
        %v3734 = vsel %vm265, %v3729, %v3733
        %v3735 = vshrl.u32 %v3590, 16
        %v3737 = vrot.slane %v3735, 4
        %v3738 = vor.u32 %v3737, %v3733
        %v3739 = vrot.slane %v3738, 4
        %v3741 = vshll.u32 %v3591, 16
        %v3743 = vrot.slane %v3741, 5
        %v3744 = vsel %vm265, %v3739, %v3743
        %v3746 = vshrl.u32 %v3592, 16
        %v3748 = vrot.slane %v3746, 4
        %v3749 = vshll.u32 %v3592, 16
        %v3751 = vrot.slane %v3749, 5
        %v3752 = vor.u32 %v3748, %v3751
        %v3753 = vrot.slane %v3752, 4
        %v3755 = vshll.u32 %v3593, 16
        %v3757 = vrot.slane %v3755, 5
        %v3758 = vsel %vm265, %v3753, %v3757
        %v3759 = vshrl.u32 %v3593, 16
        %v3761 = vrot.slane %v3759, 4
        %v3762 = vor.u32 %v3761, %v3757
        %v3763 = vrot.slane %v3762, 4
        %v3765 = vshll.u32 %v3594, 16
        %v3767 = vrot.slane %v3765, 5
        %v3768 = vsel %vm265, %v3763, %v3767
        %v3770 = vshrl.u32 %v3595, 16
        %v3772 = vrot.slane %v3770, 4
        %v3773 = vshll.u32 %v3595, 16
        %v3775 = vrot.slane %v3773, 5
        %v3776 = vor.u32 %v3772, %v3775
        %v3777 = vrot.slane %v3776, 4
        %v3779 = vshll.u32 %v3596, 16
        %v3781 = vrot.slane %v3779, 5
        %v3782 = vsel %vm265, %v3777, %v3781
        %v3783 = vshrl.u32 %v3596, 16
        %v3785 = vrot.slane %v3783, 4
        %v3786 = vor.u32 %v3785, %v3781
        %v3787 = vrot.slane %v3786, 4
        %v3789 = vshll.u32 %v3597, 16
        %v3791 = vrot.slane %v3789, 5
        %v3792 = vsel %vm265, %v3787, %v3791
        %v3794 = vshrl.u32 %v3598, 16
        %v3796 = vrot.slane %v3794, 4
        %v3797 = vshll.u32 %v3598, 16
        %v3799 = vrot.slane %v3797, 5
        %v3800 = vor.u32 %v3796, %v3799
        %v3801 = vrot.slane %v3800, 4
        %v3803 = vshll.u32 %v3599, 16
        %v3805 = vrot.slane %v3803, 5
        %v3806 = vsel %vm265, %v3801, %v3805
        %v3807 = vshrl.u32 %v3599, 16
        %v3809 = vrot.slane %v3807, 4
        %v3810 = vor.u32 %v3809, %v3805
        %v3811 = vrot.slane %v3810, 4
        %v3813 = vshll.u32 %v3600, 16
        %v3815 = vrot.slane %v3813, 5
        %v3816 = vsel %vm265, %v3811, %v3815
        %v3818 = vshrl.u32 %v3601, 16
        %v3820 = vrot.slane %v3818, 4
        %v3821 = vshll.u32 %v3601, 16
        %v3823 = vrot.slane %v3821, 5
        %v3824 = vor.u32 %v3820, %v3823
        %v3825 = vrot.slane %v3824, 4
        %v3827 = vshll.u32 %v3602, 16
        %v3829 = vrot.slane %v3827, 5
        %v3830 = vsel %vm265, %v3825, %v3829
        %v3831 = vshrl.u32 %v3602, 16
        %v3833 = vrot.slane %v3831, 4
        %v3834 = vor.u32 %v3833, %v3829
        %v3835 = vrot.slane %v3834, 4
        %v3837 = vshll.u32 %v3603, 16
        %v3839 = vrot.slane %v3837, 5
        %v3840 = vsel %vm265, %v3835, %v3839
        %v3842 = vshrl.u32 %v3604, 16
        %v3844 = vrot.slane %v3842, 4
        %v3845 = vshll.u32 %v3604, 16
        %v3847 = vrot.slane %v3845, 5
        %v3848 = vor.u32 %v3844, %v3847
        %v3849 = vrot.slane %v3848, 4
        %v3851 = vshll.u32 %v3605, 16
        %v3853 = vrot.slane %v3851, 5
        %v3854 = vsel %vm265, %v3849, %v3853
        %v3855 = vshrl.u32 %v3605, 16
        %v3857 = vrot.slane %v3855, 4
        %v3858 = vor.u32 %v3857, %v3853
        %v3859 = vrot.slane %v3858, 4
        %v3861 = vshll.u32 %v3606, 16
        %v3863 = vrot.slane %v3861, 5
        %v3864 = vsel %vm265, %v3859, %v3863
        %v3866 = vshrl.u32 %v3607, 16
        %v3868 = vrot.slane %v3866, 4
        %v3869 = vshll.u32 %v3607, 16
        %v3871 = vrot.slane %v3869, 5
        %v3872 = vor.u32 %v3868, %v3871
        %v3873 = vrot.slane %v3872, 4
        %v3875 = vshll.u32 %v3608, 16
        %v3877 = vrot.slane %v3875, 5
        %v3878 = vsel %vm265, %v3873, %v3877
        %v3879 = vshrl.u32 %v3608, 16
        %v3881 = vrot.slane %v3879, 4
        %v3882 = vor.u32 %v3881, %v3877
        %v3883 = vrot.slane %v3882, 4
        %v3885 = vshll.u32 %v3609, 16
        %v3887 = vrot.slane %v3885, 5
        %v3888 = vsel %vm265, %v3883, %v3887
        %v3890 = vshrl.u32 %v3610, 16
        %v3892 = vrot.slane %v3890, 4
        %v3893 = vshll.u32 %v3610, 16
        %v3895 = vrot.slane %v3893, 5
        %v3896 = vor.u32 %v3892, %v3895
        %v3897 = vrot.slane %v3896, 4
        %v3899 = vshll.u32 %v3611, 16
        %v3901 = vrot.slane %v3899, 5
        %v3902 = vsel %vm265, %v3897, %v3901
        %v3903 = vshrl.u32 %v3611, 16
        %v3905 = vrot.slane %v3903, 4
        %v3906 = vor.u32 %v3905, %v3901
        %v3907 = vrot.slane %v3906, 4
        %v3909 = vshll.u32 %v3612, 16
        %v3911 = vrot.slane %v3909, 5
        %v3912 = vsel %vm265, %v3907, %v3911
        %v3914 = vshrl.u32 %v3613, 16
        %v3916 = vrot.slane %v3914, 4
        %v3917 = vshll.u32 %v3613, 16
        %v3919 = vrot.slane %v3917, 5
        %v3920 = vor.u32 %v3916, %v3919
        %v3921 = vrot.slane %v3920, 4
        %v3923 = vshll.u32 %v3614, 16
        %v3925 = vrot.slane %v3923, 5
        %v3926 = vsel %vm265, %v3921, %v3925
        %v3927 = vshrl.u32 %v3614, 16
        %v3929 = vrot.slane %v3927, 4
        %v3930 = vor.u32 %v3929, %v3925
        %v3931 = vrot.slane %v3930, 4
        %v3933 = vshll.u32 %v3615, 16
        %v3935 = vrot.slane %v3933, 5
        %v3936 = vsel %vm265, %v3931, %v3935
        %v3938 = vshrl.u32 %v3616, 16
        %v3940 = vrot.slane %v3938, 4
        %v3941 = vshll.u32 %v3616, 16
        %v3943 = vrot.slane %v3941, 5
        %v3944 = vor.u32 %v3940, %v3943
        %v3945 = vrot.slane %v3944, 4
        %v3947 = vshll.u32 %v3617, 16
        %v3949 = vrot.slane %v3947, 5
        %v3950 = vsel %vm265, %v3945, %v3949
        %v3951 = vshrl.u32 %v3617, 16
        %v3953 = vrot.slane %v3951, 4
        %v3954 = vor.u32 %v3953, %v3949
        %v3955 = vrot.slane %v3954, 4
        %v3957 = vshll.u32 %v3618, 16
        %v3959 = vrot.slane %v3957, 5
        %v3960 = vsel %vm265, %v3955, %v3959
        %v3962 = vshrl.u32 %v3619, 16
        %v3964 = vrot.slane %v3962, 4
        %v3965 = vshll.u32 %v3619, 16
        %v3967 = vrot.slane %v3965, 5
        %v3968 = vor.u32 %v3964, %v3967
        %v3969 = vrot.slane %v3968, 4
        %v3971 = vshll.u32 %v3620, 16
        %v3973 = vrot.slane %v3971, 5
        %v3974 = vsel %vm265, %v3969, %v3973
        %v3975 = vshrl.u32 %v3620, 16
        %v3977 = vrot.slane %v3975, 4
        %v3978 = vor.u32 %v3977, %v3973
        %v3979 = vrot.slane %v3978, 4
        %v3981 = vshll.u32 %v3621, 16
        %v3983 = vrot.slane %v3981, 5
        %v3984 = vsel %vm265, %v3979, %v3983
        %v3986 = vshrl.u32 %v3622, 16
        %v3988 = vrot.slane %v3986, 4
        %v3989 = vshll.u32 %v3622, 16
        %v3991 = vrot.slane %v3989, 5
        %v3992 = vor.u32 %v3988, %v3991
        %v3993 = vrot.slane %v3992, 4
        %v3995 = vshll.u32 %v3623, 16
        %v3997 = vrot.slane %v3995, 5
        %v3998 = vsel %vm265, %v3993, %v3997
        %v3999 = vshrl.u32 %v3623, 16
        %v4001 = vrot.slane %v3999, 4
        %v4002 = vor.u32 %v4001, %v3997
        %v4003 = vrot.slane %v4002, 4
        %v4005 = vshll.u32 %v3624, 16
        %v4007 = vrot.slane %v4005, 5
        %v4008 = vsel %vm265, %v4003, %v4007
        %s4009 = scalar_lea.vmem %s1, 28
        %v4010 = vld [vmem:[%s4009] sm:$0xf]
        %v4011 = vunpack.c.l.b16 %v3638
        %v4012 = vunpack.c.l.b16 %v3648
        %v4013 = vunpack.c.l.b16 %v3662
        %v4014 = vunpack.c.l.b16 %v3672
        %v4015 = vunpack.c.l.b16 %v3686
        %v4016 = vunpack.c.l.b16 %v3696
        %v4017 = vunpack.c.l.b16 %v3710
        %v4018 = vunpack.c.l.b16 %v3720
        %v4019 = vunpack.c.l.b16 %v3734
        %v4020 = vunpack.c.l.b16 %v3744
        %v4021 = vunpack.c.l.b16 %v3758
        %v4022 = vunpack.c.l.b16 %v3768
        %v4023 = vunpack.c.l.b16 %v3782
        %v4024 = vunpack.c.l.b16 %v3792
        %v4025 = vunpack.c.l.b16 %v3806
        %v4026 = vunpack.c.l.b16 %v3816
        %v4027 = vunpack.c.l.b16 %v3830
        %v4028 = vunpack.c.l.b16 %v3840
        %v4029 = vunpack.c.l.b16 %v3854
        %v4030 = vunpack.c.l.b16 %v3864
        %v4031 = vunpack.c.l.b16 %v3878
        %v4032 = vunpack.c.l.b16 %v3888
        %v4033 = vunpack.c.l.b16 %v3902
        %v4034 = vunpack.c.l.b16 %v3912
        %v4035 = vunpack.c.l.b16 %v3926
        %v4036 = vunpack.c.l.b16 %v3936
        %v4037 = vunpack.c.l.b16 %v3950
        %v4038 = vunpack.c.l.b16 %v3960
        %v4039 = vunpack.c.l.b16 %v3974
        %v4040 = vunpack.c.l.b16 %v3984
        %v4041 = vunpack.c.l.b16 %v3998
        %v4042 = vunpack.c.l.b16 %v4008
        %v4043 = vpack.c.b16 %v4012, %v4011
        %v4044 = vpack.c.b16 %v4014, %v4013
        %v4045 = vpack.c.b16 %v4016, %v4015
        %v4046 = vpack.c.b16 %v4018, %v4017
        %v4047 = vpack.c.b16 %v4020, %v4019
        %v4048 = vpack.c.b16 %v4022, %v4021
        %v4049 = vpack.c.b16 %v4024, %v4023
        %v4050 = vpack.c.b16 %v4026, %v4025
        %v4051 = vpack.c.b16 %v4028, %v4027
        %v4052 = vpack.c.b16 %v4030, %v4029
        %v4053 = vpack.c.b16 %v4032, %v4031
        %v4054 = vpack.c.b16 %v4034, %v4033
        %v4055 = vpack.c.b16 %v4036, %v4035
        %v4056 = vpack.c.b16 %v4038, %v4037
        %v4057 = vpack.c.b16 %v4040, %v4039
        %v4058 = vpack.c.b16 %v4042, %v4041
        %v4060 = vsel %vm700, %v4043, 0
        %v4063 = vsel %vm700, %v4044, 0
        %v4066 = vsel %vm700, %v4045, 0
        %v4069 = vsel %vm700, %v4046, 0
        %v4072 = vsel %vm700, %v4047, 0
        %v4075 = vsel %vm700, %v4048, 0
        %v4078 = vsel %vm700, %v4049, 0
        %v4081 = vsel %vm700, %v4050, 0
        %v4084 = vsel %vm700, %v4051, 0
        %v4087 = vsel %vm700, %v4052, 0
        %v4090 = vsel %vm700, %v4053, 0
        %v4093 = vsel %vm700, %v4054, 0
        %v4096 = vsel %vm700, %v4055, 0
        %v4099 = vsel %vm700, %v4056, 0
        %v4102 = vsel %vm700, %v4057, 0
        %v4105 = vsel %vm700, %v4058, 0
        %v4108 = vsel %vm749, %v4010, 0
        %4110 = vmatprep.subr.bf16.mxu0 0
        %4111 = vmatpush1.bf16.msra.mxu0 %v4108
        %4112 = vmatprep.subr.bf16.mxu0 0
        %4113 = vmatpush1.bf16.msra.mxu0 0
        %4114 = vmatprep.subr.bf16.mxu0 0
        %4115 = vmatpush1.bf16.msra.mxu0 0
        %4116 = vmatprep.subr.bf16.mxu0 0
        %4117 = vmatpush1.bf16.msra.mxu0 0
        %4118 = vmatprep.subr.bf16.mxu0 0
        %4119 = vmatpush1.bf16.msra.mxu0 0
        %4120 = vmatprep.subr.bf16.mxu0 0
        %4121 = vmatpush1.bf16.msra.mxu0 0
        %4122 = vmatprep.subr.bf16.mxu0 0
        %4123 = vmatpush1.bf16.msra.mxu0 0
        %4124 = vmatprep.subr.bf16.mxu0 0
        %4125 = vmatpush1.bf16.msra.mxu0 0
        %4126 = vmatprep.subr.bf16.mxu0 0
        %4127 = vmatpush1.bf16.msra.mxu0 0
        %4128 = vmatprep.subr.bf16.mxu0 0
        %4129 = vmatpush1.bf16.msra.mxu0 0
        %4130 = vmatprep.subr.bf16.mxu0 0
        %4131 = vmatpush1.bf16.msra.mxu0 0
        %4132 = vmatprep.subr.bf16.mxu0 0
        %4133 = vmatpush1.bf16.msra.mxu0 0
        %4134 = vmatprep.subr.bf16.mxu0 0
        %4135 = vmatpush1.bf16.msra.mxu0 0
        %4136 = vmatprep.subr.bf16.mxu0 0
        %4137 = vmatpush1.bf16.msra.mxu0 0
        %4138 = vmatprep.subr.bf16.mxu0 0
        %4139 = vmatpush1.bf16.msra.mxu0 0
        %4140 = vmatprep.subr.bf16.mxu0 0
        %4141 = vmatpush1.bf16.msra.mxu0 0
        %4142 = vmatprep.mubr.bf16.mxu0 0
        %4143 = vmatmul.mubr.bf16.gmra.mrb[0].mxu0 %v4060
        %v4144 = vpop.f32.mrb[0].mxu0
        %v4145 = vadd.f32 0.0, %v4144
        %v4146 = vpop.f32.mrb[0].mxu0
        %v4147 = vpop.f32.mrb[0].mxu0
        %v4148 = vadd.f32 0.0, %v4147
        %v4149 = vpop.f32.mrb[0].mxu0
        %4150 = vmatprep.mubr.bf16.mxu0 0
        %4151 = vmatmul.mubr.bf16.gmra.mrb[0].mxu0 %v4063
        %v4152 = vpop.f32.mrb[0].mxu0
        %v4153 = vadd.f32 0.0, %v4152
        %v4154 = vpop.f32.mrb[0].mxu0
        %v4155 = vpop.f32.mrb[0].mxu0
        %v4156 = vadd.f32 0.0, %v4155
        %v4157 = vpop.f32.mrb[0].mxu0
        %4158 = vmatprep.mubr.bf16.mxu0 0
        %4159 = vmatmul.mubr.bf16.gmra.mrb[0].mxu0 %v4066
        %v4160 = vpop.f32.mrb[0].mxu0
        %v4161 = vadd.f32 0.0, %v4160
        %v4162 = vpop.f32.mrb[0].mxu0
        %v4163 = vpop.f32.mrb[0].mxu0
        %v4164 = vadd.f32 0.0, %v4163
        %v4165 = vpop.f32.mrb[0].mxu0
        %4166 = vmatprep.mubr.bf16.mxu0 0
        %4167 = vmatmul.mubr.bf16.gmra.mrb[0].mxu0 %v4069
        %v4168 = vpop.f32.mrb[0].mxu0
        %v4169 = vadd.f32 0.0, %v4168
        %v4170 = vpop.f32.mrb[0].mxu0
        %v4171 = vpop.f32.mrb[0].mxu0
        %v4172 = vadd.f32 0.0, %v4171
        %v4173 = vpop.f32.mrb[0].mxu0
        %4174 = vmatprep.mubr.bf16.mxu0 0
        %4175 = vmatmul.mubr.bf16.gmra.mrb[0].mxu0 %v4072
        %v4176 = vpop.f32.mrb[0].mxu0
        %v4177 = vadd.f32 0.0, %v4176
        %v4178 = vpop.f32.mrb[0].mxu0
        %v4179 = vpop.f32.mrb[0].mxu0
        %v4180 = vadd.f32 0.0, %v4179
        %v4181 = vpop.f32.mrb[0].mxu0
        %4182 = vmatprep.mubr.bf16.mxu0 0
        %4183 = vmatmul.mubr.bf16.gmra.mrb[0].mxu0 %v4075
        %v4184 = vpop.f32.mrb[0].mxu0
        %v4185 = vadd.f32 0.0, %v4184
        %v4186 = vpop.f32.mrb[0].mxu0
        %v4187 = vpop.f32.mrb[0].mxu0
        %v4188 = vadd.f32 0.0, %v4187
        %v4189 = vpop.f32.mrb[0].mxu0
        %4190 = vmatprep.mubr.bf16.mxu0 0
        %4191 = vmatmul.mubr.bf16.gmra.mrb[0].mxu0 %v4078
        %v4192 = vpop.f32.mrb[0].mxu0
        %v4193 = vadd.f32 0.0, %v4192
        %v4194 = vpop.f32.mrb[0].mxu0
        %v4195 = vpop.f32.mrb[0].mxu0
        %v4196 = vadd.f32 0.0, %v4195
        %v4197 = vpop.f32.mrb[0].mxu0
        %4198 = vmatprep.mubr.bf16.mxu0 0
        %4199 = vmatmul.mubr.bf16.gmra.mrb[0].mxu0 %v4081
        %v4200 = vpop.f32.mrb[0].mxu0
        %v4201 = vadd.f32 0.0, %v4200
        %v4202 = vpop.f32.mrb[0].mxu0
        %v4203 = vpop.f32.mrb[0].mxu0
        %v4204 = vadd.f32 0.0, %v4203
        %v4205 = vpop.f32.mrb[0].mxu0
        %4206 = vmatprep.mubr.bf16.mxu0 0
        %4207 = vmatmul.mubr.bf16.gmra.mrb[0].mxu0 %v4084
        %v4208 = vpop.f32.mrb[0].mxu0
        %v4209 = vadd.f32 0.0, %v4208
        %v4210 = vpop.f32.mrb[0].mxu0
        %v4211 = vpop.f32.mrb[0].mxu0
        %v4212 = vadd.f32 0.0, %v4211
        %v4213 = vpop.f32.mrb[0].mxu0
        %4214 = vmatprep.mubr.bf16.mxu0 0
        %4215 = vmatmul.mubr.bf16.gmra.mrb[0].mxu0 %v4087
        %v4216 = vpop.f32.mrb[0].mxu0
        %v4217 = vadd.f32 0.0, %v4216
        %v4218 = vpop.f32.mrb[0].mxu0
        %v4219 = vpop.f32.mrb[0].mxu0
        %v4220 = vadd.f32 0.0, %v4219
        %v4221 = vpop.f32.mrb[0].mxu0
        %4222 = vmatprep.mubr.bf16.mxu0 0
        %4223 = vmatmul.mubr.bf16.gmra.mrb[0].mxu0 %v4090
        %v4224 = vpop.f32.mrb[0].mxu0
        %v4225 = vadd.f32 0.0, %v4224
        %v4226 = vpop.f32.mrb[0].mxu0
        %v4227 = vpop.f32.mrb[0].mxu0
        %v4228 = vadd.f32 0.0, %v4227
        %v4229 = vpop.f32.mrb[0].mxu0
        %4230 = vmatprep.mubr.bf16.mxu0 0
        %4231 = vmatmul.mubr.bf16.gmra.mrb[0].mxu0 %v4093
        %v4232 = vpop.f32.mrb[0].mxu0
        %v4233 = vadd.f32 0.0, %v4232
        %v4234 = vpop.f32.mrb[0].mxu0
        %v4235 = vpop.f32.mrb[0].mxu0
        %v4236 = vadd.f32 0.0, %v4235
        %v4237 = vpop.f32.mrb[0].mxu0
        %4238 = vmatprep.mubr.bf16.mxu0 0
        %4239 = vmatmul.mubr.bf16.gmra.mrb[0].mxu0 %v4096
        %v4240 = vpop.f32.mrb[0].mxu0
        %v4241 = vadd.f32 0.0, %v4240
        %v4242 = vpop.f32.mrb[0].mxu0
        %v4243 = vpop.f32.mrb[0].mxu0
        %v4244 = vadd.f32 0.0, %v4243
        %v4245 = vpop.f32.mrb[0].mxu0
        %4246 = vmatprep.mubr.bf16.mxu0 0
        %4247 = vmatmul.mubr.bf16.gmra.mrb[0].mxu0 %v4099
        %v4248 = vpop.f32.mrb[0].mxu0
        %v4249 = vadd.f32 0.0, %v4248
        %v4250 = vpop.f32.mrb[0].mxu0
        %v4251 = vpop.f32.mrb[0].mxu0
        %v4252 = vadd.f32 0.0, %v4251
        %v4253 = vpop.f32.mrb[0].mxu0
        %4254 = vmatprep.mubr.bf16.mxu0 0
        %4255 = vmatmul.mubr.bf16.gmra.mrb[0].mxu0 %v4102
        %v4256 = vpop.f32.mrb[0].mxu0
        %v4257 = vadd.f32 0.0, %v4256
        %v4258 = vpop.f32.mrb[0].mxu0
        %v4259 = vpop.f32.mrb[0].mxu0
        %v4260 = vadd.f32 0.0, %v4259
        %v4261 = vpop.f32.mrb[0].mxu0
        %4262 = vmatprep.mubr.bf16.mxu0 0
        %4263 = vmatmul.mubr.bf16.gmra.mrb[0].mxu0 %v4105
        %v4264 = vpop.f32.mrb[0].mxu0
        %v4265 = vadd.f32 0.0, %v4264
        %v4266 = vpop.f32.mrb[0].mxu0
        %v4267 = vpop.f32.mrb[0].mxu0
        %v4268 = vadd.f32 0.0, %v4267
        %v4269 = vpop.f32.mrb[0].mxu0
        %4270 = vdwg.mxu0
        %v4271 = vadd.f32 %v3545, %v4145
        %v4272 = vadd.f32 %v3546, %v4148
        %v4273 = vadd.f32 %v3547, %v4153
        %v4274 = vadd.f32 %v3548, %v4156
        %v4275 = vadd.f32 %v3549, %v4161
        %v4276 = vadd.f32 %v3550, %v4164
        %v4277 = vadd.f32 %v3551, %v4169
        %v4278 = vadd.f32 %v3552, %v4172
        %v4279 = vadd.f32 %v3553, %v4177
        %v4280 = vadd.f32 %v3554, %v4180
        %v4281 = vadd.f32 %v3555, %v4185
        %v4282 = vadd.f32 %v3556, %v4188
        %v4283 = vadd.f32 %v3557, %v4193
        %v4284 = vadd.f32 %v3558, %v4196
        %v4285 = vadd.f32 %v3559, %v4201
        %v4286 = vadd.f32 %v3560, %v4204
        %v4287 = vadd.f32 %v3561, %v4209
        %v4288 = vadd.f32 %v3562, %v4212
        %v4289 = vadd.f32 %v3563, %v4217
        %v4290 = vadd.f32 %v3564, %v4220
        %v4291 = vadd.f32 %v3565, %v4225
        %v4292 = vadd.f32 %v3566, %v4228
        %v4293 = vadd.f32 %v3567, %v4233
        %v4294 = vadd.f32 %v3568, %v4236
        %v4295 = vadd.f32 %v3569, %v4241
        %v4296 = vadd.f32 %v3570, %v4244
        %v4297 = vadd.f32 %v3571, %v4249
        %v4298 = vadd.f32 %v3572, %v4252
        %v4299 = vadd.f32 %v3573, %v4257
        %v4300 = vadd.f32 %v3574, %v4260
        %v4301 = vadd.f32 %v3575, %v4265
        %v4302 = vadd.f32 %v3576, %v4268
        %v4303 = vld [vmem:[%s3218] sm:$0xe]
        %v4304 = vld [vmem:[%s3218 + $0xc] sm:$0xe]
        %v4305 = vld [vmem:[%s3218 + $0x18] sm:$0xe]
        %v4306 = vld [vmem:[%s3218 + $0x24] sm:$0xe]
        %v4307 = vld [vmem:[%s3218 + $0x30] sm:$0xe]
        %v4308 = vld [vmem:[%s3218 + $0x3c] sm:$0xe]
        %v4309 = vld [vmem:[%s3218 + $0x48] sm:$0xe]
        %v4310 = vld [vmem:[%s3218 + $0x54] sm:$0xe]
        %v4311 = vld [vmem:[%s3218 + $0x60] sm:$0xe]
        %v4312 = vld [vmem:[%s3218 + $0x6c] sm:$0xe]
        %v4313 = vld [vmem:[%s3218 + $0x78] sm:$0xe]
        %v4314 = vld [vmem:[%s3218 + $0x84] sm:$0xe]
        %v4315 = vld [vmem:[%s3218 + $0x90] sm:$0xe]
        %v4316 = vld [vmem:[%s3218 + $0x9c] sm:$0xe]
        %v4317 = vld [vmem:[%s3218 + $0xa8] sm:$0xe]
        %v4318 = vld [vmem:[%s3218 + $0xb4] sm:$0xe]
        %v4367 = vrot.slane %v4303, 5
        %v4368 = vrot.slane %v4367, 4
        %v4369 = vrot.slane %v3578, 5
        %v4370 = vsel %vm1256, %v4368, %v4369
        %v4371 = vrot.slane %v4369, 4
        %v4372 = vrot.slane %v3579, 5
        %v4373 = vsel %vm1256, %v4371, %v4372
        %v4374 = vrot.slane %v4304, 5
        %v4375 = vrot.slane %v4374, 4
        %v4376 = vrot.slane %v3581, 5
        %v4377 = vsel %vm1256, %v4375, %v4376
        %v4378 = vrot.slane %v4376, 4
        %v4379 = vrot.slane %v3582, 5
        %v4380 = vsel %vm1256, %v4378, %v4379
        %v4381 = vrot.slane %v4305, 5
        %v4382 = vrot.slane %v4381, 4
        %v4383 = vrot.slane %v3584, 5
        %v4384 = vsel %vm1256, %v4382, %v4383
        %v4385 = vrot.slane %v4383, 4
        %v4386 = vrot.slane %v3585, 5
        %v4387 = vsel %vm1256, %v4385, %v4386
        %v4388 = vrot.slane %v4306, 5
        %v4389 = vrot.slane %v4388, 4
        %v4390 = vrot.slane %v3587, 5
        %v4391 = vsel %vm1256, %v4389, %v4390
        %v4392 = vrot.slane %v4390, 4
        %v4393 = vrot.slane %v3588, 5
        %v4394 = vsel %vm1256, %v4392, %v4393
        %v4395 = vrot.slane %v4307, 5
        %v4396 = vrot.slane %v4395, 4
        %v4397 = vrot.slane %v3590, 5
        %v4398 = vsel %vm1256, %v4396, %v4397
        %v4399 = vrot.slane %v4397, 4
        %v4400 = vrot.slane %v3591, 5
        %v4401 = vsel %vm1256, %v4399, %v4400
        %v4402 = vrot.slane %v4308, 5
        %v4403 = vrot.slane %v4402, 4
        %v4404 = vrot.slane %v3593, 5
        %v4405 = vsel %vm1256, %v4403, %v4404
        %v4406 = vrot.slane %v4404, 4
        %v4407 = vrot.slane %v3594, 5
        %v4408 = vsel %vm1256, %v4406, %v4407
        %v4409 = vrot.slane %v4309, 5
        %v4410 = vrot.slane %v4409, 4
        %v4411 = vrot.slane %v3596, 5
        %v4412 = vsel %vm1256, %v4410, %v4411
        %v4413 = vrot.slane %v4411, 4
        %v4414 = vrot.slane %v3597, 5
        %v4415 = vsel %vm1256, %v4413, %v4414
        %v4416 = vrot.slane %v4310, 5
        %v4417 = vrot.slane %v4416, 4
        %v4418 = vrot.slane %v3599, 5
        %v4419 = vsel %vm1256, %v4417, %v4418
        %v4420 = vrot.slane %v4418, 4
        %v4421 = vrot.slane %v3600, 5
        %v4422 = vsel %vm1256, %v4420, %v4421
        %v4423 = vrot.slane %v4311, 5
        %v4424 = vrot.slane %v4423, 4
        %v4425 = vrot.slane %v3602, 5
        %v4426 = vsel %vm1256, %v4424, %v4425
        %v4427 = vrot.slane %v4425, 4
        %v4428 = vrot.slane %v3603, 5
        %v4429 = vsel %vm1256, %v4427, %v4428
        %v4430 = vrot.slane %v4312, 5
        %v4431 = vrot.slane %v4430, 4
        %v4432 = vrot.slane %v3605, 5
        %v4433 = vsel %vm1256, %v4431, %v4432
        %v4434 = vrot.slane %v4432, 4
        %v4435 = vrot.slane %v3606, 5
        %v4436 = vsel %vm1256, %v4434, %v4435
        %v4437 = vrot.slane %v4313, 5
        %v4438 = vrot.slane %v4437, 4
        %v4439 = vrot.slane %v3608, 5
        %v4440 = vsel %vm1256, %v4438, %v4439
        %v4441 = vrot.slane %v4439, 4
        %v4442 = vrot.slane %v3609, 5
        %v4443 = vsel %vm1256, %v4441, %v4442
        %v4444 = vrot.slane %v4314, 5
        %v4445 = vrot.slane %v4444, 4
        %v4446 = vrot.slane %v3611, 5
        %v4447 = vsel %vm1256, %v4445, %v4446
        %v4448 = vrot.slane %v4446, 4
        %v4449 = vrot.slane %v3612, 5
        %v4450 = vsel %vm1256, %v4448, %v4449
        %v4451 = vrot.slane %v4315, 5
        %v4452 = vrot.slane %v4451, 4
        %v4453 = vrot.slane %v3614, 5
        %v4454 = vsel %vm1256, %v4452, %v4453
        %v4455 = vrot.slane %v4453, 4
        %v4456 = vrot.slane %v3615, 5
        %v4457 = vsel %vm1256, %v4455, %v4456
        %v4458 = vrot.slane %v4316, 5
        %v4459 = vrot.slane %v4458, 4
        %v4460 = vrot.slane %v3617, 5
        %v4461 = vsel %vm1256, %v4459, %v4460
        %v4462 = vrot.slane %v4460, 4
        %v4463 = vrot.slane %v3618, 5
        %v4464 = vsel %vm1256, %v4462, %v4463
        %v4465 = vrot.slane %v4317, 5
        %v4466 = vrot.slane %v4465, 4
        %v4467 = vrot.slane %v3620, 5
        %v4468 = vsel %vm1256, %v4466, %v4467
        %v4469 = vrot.slane %v4467, 4
        %v4470 = vrot.slane %v3621, 5
        %v4471 = vsel %vm1256, %v4469, %v4470
        %v4472 = vrot.slane %v4318, 5
        %v4473 = vrot.slane %v4472, 4
        %v4474 = vrot.slane %v3623, 5
        %v4475 = vsel %vm1256, %v4473, %v4474
        %v4476 = vrot.slane %v4474, 4
        %v4477 = vrot.slane %v3624, 5
        %v4478 = vsel %vm1256, %v4476, %v4477
        %s4479 = scalar_lea.vmem %s1, 32
        %v4480 = vld [vmem:[%s4479] sm:$0xf]
        %v4481 = vunpack.c.l.b16 %v4370
        %v4482 = vunpack.c.l.b16 %v4373
        %v4483 = vunpack.c.l.b16 %v4377
        %v4484 = vunpack.c.l.b16 %v4380
        %v4485 = vunpack.c.l.b16 %v4384
        %v4486 = vunpack.c.l.b16 %v4387
        %v4487 = vunpack.c.l.b16 %v4391
        %v4488 = vunpack.c.l.b16 %v4394
        %v4489 = vunpack.c.l.b16 %v4398
        %v4490 = vunpack.c.l.b16 %v4401
        %v4491 = vunpack.c.l.b16 %v4405
        %v4492 = vunpack.c.l.b16 %v4408
        %v4493 = vunpack.c.l.b16 %v4412
        %v4494 = vunpack.c.l.b16 %v4415
        %v4495 = vunpack.c.l.b16 %v4419
        %v4496 = vunpack.c.l.b16 %v4422
        %v4497 = vunpack.c.l.b16 %v4426
        %v4498 = vunpack.c.l.b16 %v4429
        %v4499 = vunpack.c.l.b16 %v4433
        %v4500 = vunpack.c.l.b16 %v4436
        %v4501 = vunpack.c.l.b16 %v4440
        %v4502 = vunpack.c.l.b16 %v4443
        %v4503 = vunpack.c.l.b16 %v4447
        %v4504 = vunpack.c.l.b16 %v4450
        %v4505 = vunpack.c.l.b16 %v4454
        %v4506 = vunpack.c.l.b16 %v4457
        %v4507 = vunpack.c.l.b16 %v4461
        %v4508 = vunpack.c.l.b16 %v4464
        %v4509 = vunpack.c.l.b16 %v4468
        %v4510 = vunpack.c.l.b16 %v4471
        %v4511 = vunpack.c.l.b16 %v4475
        %v4512 = vunpack.c.l.b16 %v4478
        %v4513 = vpack.c.b16 %v4482, %v4481
        %v4514 = vpack.c.b16 %v4484, %v4483
        %v4515 = vpack.c.b16 %v4486, %v4485
        %v4516 = vpack.c.b16 %v4488, %v4487
        %v4517 = vpack.c.b16 %v4490, %v4489
        %v4518 = vpack.c.b16 %v4492, %v4491
        %v4519 = vpack.c.b16 %v4494, %v4493
        %v4520 = vpack.c.b16 %v4496, %v4495
        %v4521 = vpack.c.b16 %v4498, %v4497
        %v4522 = vpack.c.b16 %v4500, %v4499
        %v4523 = vpack.c.b16 %v4502, %v4501
        %v4524 = vpack.c.b16 %v4504, %v4503
        %v4525 = vpack.c.b16 %v4506, %v4505
        %v4526 = vpack.c.b16 %v4508, %v4507
        %v4527 = vpack.c.b16 %v4510, %v4509
        %v4528 = vpack.c.b16 %v4512, %v4511
        %v4530 = vsel %vm700, %v4513, 0
        %v4533 = vsel %vm700, %v4514, 0
        %v4536 = vsel %vm700, %v4515, 0
        %v4539 = vsel %vm700, %v4516, 0
        %v4542 = vsel %vm700, %v4517, 0
        %v4545 = vsel %vm700, %v4518, 0
        %v4548 = vsel %vm700, %v4519, 0
        %v4551 = vsel %vm700, %v4520, 0
        %v4554 = vsel %vm700, %v4521, 0
        %v4557 = vsel %vm700, %v4522, 0
        %v4560 = vsel %vm700, %v4523, 0
        %v4563 = vsel %vm700, %v4524, 0
        %v4566 = vsel %vm700, %v4525, 0
        %v4569 = vsel %vm700, %v4526, 0
        %v4572 = vsel %vm700, %v4527, 0
        %v4575 = vsel %vm700, %v4528, 0
        %v4578 = vsel %vm749, %v4480, 0
        %4580 = vmatprep.subr.bf16.mxu0 0
        %4581 = vmatpush1.bf16.msra.mxu0 %v4578
        %4582 = vmatprep.subr.bf16.mxu0 0
        %4583 = vmatpush1.bf16.msra.mxu0 0
        %4584 = vmatprep.subr.bf16.mxu0 0
        %4585 = vmatpush1.bf16.msra.mxu0 0
        %4586 = vmatprep.subr.bf16.mxu0 0
        %4587 = vmatpush1.bf16.msra.mxu0 0
        %4588 = vmatprep.subr.bf16.mxu0 0
        %4589 = vmatpush1.bf16.msra.mxu0 0
        %4590 = vmatprep.subr.bf16.mxu0 0
        %4591 = vmatpush1.bf16.msra.mxu0 0
        %4592 = vmatprep.subr.bf16.mxu0 0
        %4593 = vmatpush1.bf16.msra.mxu0 0
        %4594 = vmatprep.subr.bf16.mxu0 0
        %4595 = vmatpush1.bf16.msra.mxu0 0
        %4596 = vmatprep.subr.bf16.mxu0 0
        %4597 = vmatpush1.bf16.msra.mxu0 0
        %4598 = vmatprep.subr.bf16.mxu0 0
        %4599 = vmatpush1.bf16.msra.mxu0 0
        %4600 = vmatprep.subr.bf16.mxu0 0
        %4601 = vmatpush1.bf16.msra.mxu0 0
        %4602 = vmatprep.subr.bf16.mxu0 0
        %4603 = vmatpush1.bf16.msra.mxu0 0
        %4604 = vmatprep.subr.bf16.mxu0 0
        %4605 = vmatpush1.bf16.msra.mxu0 0
        %4606 = vmatprep.subr.bf16.mxu0 0
        %4607 = vmatpush1.bf16.msra.mxu0 0
        %4608 = vmatprep.subr.bf16.mxu0 0
        %4609 = vmatpush1.bf16.msra.mxu0 0
        %4610 = vmatprep.subr.bf16.mxu0 0
        %4611 = vmatpush1.bf16.msra.mxu0 0
        %4612 = vmatprep.mubr.bf16.mxu0 0
        %4613 = vmatmul.mubr.bf16.gmra.mrb[0].mxu0 %v4530
        %v4614 = vpop.f32.mrb[0].mxu0
        %v4615 = vadd.f32 0.0, %v4614
        %v4616 = vpop.f32.mrb[0].mxu0
        %v4617 = vpop.f32.mrb[0].mxu0
        %v4618 = vadd.f32 0.0, %v4617
        %v4619 = vpop.f32.mrb[0].mxu0
        %4620 = vmatprep.mubr.bf16.mxu0 0
        %4621 = vmatmul.mubr.bf16.gmra.mrb[0].mxu0 %v4533
        %v4622 = vpop.f32.mrb[0].mxu0
        %v4623 = vadd.f32 0.0, %v4622
        %v4624 = vpop.f32.mrb[0].mxu0
        %v4625 = vpop.f32.mrb[0].mxu0
        %v4626 = vadd.f32 0.0, %v4625
        %v4627 = vpop.f32.mrb[0].mxu0
        %4628 = vmatprep.mubr.bf16.mxu0 0
        %4629 = vmatmul.mubr.bf16.gmra.mrb[0].mxu0 %v4536
        %v4630 = vpop.f32.mrb[0].mxu0
        %v4631 = vadd.f32 0.0, %v4630
        %v4632 = vpop.f32.mrb[0].mxu0
        %v4633 = vpop.f32.mrb[0].mxu0
        %v4634 = vadd.f32 0.0, %v4633
        %v4635 = vpop.f32.mrb[0].mxu0
        %4636 = vmatprep.mubr.bf16.mxu0 0
        %4637 = vmatmul.mubr.bf16.gmra.mrb[0].mxu0 %v4539
        %v4638 = vpop.f32.mrb[0].mxu0
        %v4639 = vadd.f32 0.0, %v4638
        %v4640 = vpop.f32.mrb[0].mxu0
        %v4641 = vpop.f32.mrb[0].mxu0
        %v4642 = vadd.f32 0.0, %v4641
        %v4643 = vpop.f32.mrb[0].mxu0
        %4644 = vmatprep.mubr.bf16.mxu0 0
        %4645 = vmatmul.mubr.bf16.gmra.mrb[0].mxu0 %v4542
        %v4646 = vpop.f32.mrb[0].mxu0
        %v4647 = vadd.f32 0.0, %v4646
        %v4648 = vpop.f32.mrb[0].mxu0
        %v4649 = vpop.f32.mrb[0].mxu0
        %v4650 = vadd.f32 0.0, %v4649
        %v4651 = vpop.f32.mrb[0].mxu0
        %4652 = vmatprep.mubr.bf16.mxu0 0
        %4653 = vmatmul.mubr.bf16.gmra.mrb[0].mxu0 %v4545
        %v4654 = vpop.f32.mrb[0].mxu0
        %v4655 = vadd.f32 0.0, %v4654
        %v4656 = vpop.f32.mrb[0].mxu0
        %v4657 = vpop.f32.mrb[0].mxu0
        %v4658 = vadd.f32 0.0, %v4657
        %v4659 = vpop.f32.mrb[0].mxu0
        %4660 = vmatprep.mubr.bf16.mxu0 0
        %4661 = vmatmul.mubr.bf16.gmra.mrb[0].mxu0 %v4548
        %v4662 = vpop.f32.mrb[0].mxu0
        %v4663 = vadd.f32 0.0, %v4662
        %v4664 = vpop.f32.mrb[0].mxu0
        %v4665 = vpop.f32.mrb[0].mxu0
        %v4666 = vadd.f32 0.0, %v4665
        %v4667 = vpop.f32.mrb[0].mxu0
        %4668 = vmatprep.mubr.bf16.mxu0 0
        %4669 = vmatmul.mubr.bf16.gmra.mrb[0].mxu0 %v4551
        %v4670 = vpop.f32.mrb[0].mxu0
        %v4671 = vadd.f32 0.0, %v4670
        %v4672 = vpop.f32.mrb[0].mxu0
        %v4673 = vpop.f32.mrb[0].mxu0
        %v4674 = vadd.f32 0.0, %v4673
        %v4675 = vpop.f32.mrb[0].mxu0
        %4676 = vmatprep.mubr.bf16.mxu0 0
        %4677 = vmatmul.mubr.bf16.gmra.mrb[0].mxu0 %v4554
        %v4678 = vpop.f32.mrb[0].mxu0
        %v4679 = vadd.f32 0.0, %v4678
        %v4680 = vpop.f32.mrb[0].mxu0
        %v4681 = vpop.f32.mrb[0].mxu0
        %v4682 = vadd.f32 0.0, %v4681
        %v4683 = vpop.f32.mrb[0].mxu0
        %4684 = vmatprep.mubr.bf16.mxu0 0
        %4685 = vmatmul.mubr.bf16.gmra.mrb[0].mxu0 %v4557
        %v4686 = vpop.f32.mrb[0].mxu0
        %v4687 = vadd.f32 0.0, %v4686
        %v4688 = vpop.f32.mrb[0].mxu0
        %v4689 = vpop.f32.mrb[0].mxu0
        %v4690 = vadd.f32 0.0, %v4689
        %v4691 = vpop.f32.mrb[0].mxu0
        %4692 = vmatprep.mubr.bf16.mxu0 0
        %4693 = vmatmul.mubr.bf16.gmra.mrb[0].mxu0 %v4560
        %v4694 = vpop.f32.mrb[0].mxu0
        %v4695 = vadd.f32 0.0, %v4694
        %v4696 = vpop.f32.mrb[0].mxu0
        %v4697 = vpop.f32.mrb[0].mxu0
        %v4698 = vadd.f32 0.0, %v4697
        %v4699 = vpop.f32.mrb[0].mxu0
        %4700 = vmatprep.mubr.bf16.mxu0 0
        %4701 = vmatmul.mubr.bf16.gmra.mrb[0].mxu0 %v4563
        %v4702 = vpop.f32.mrb[0].mxu0
        %v4703 = vadd.f32 0.0, %v4702
        %v4704 = vpop.f32.mrb[0].mxu0
        %v4705 = vpop.f32.mrb[0].mxu0
        %v4706 = vadd.f32 0.0, %v4705
        %v4707 = vpop.f32.mrb[0].mxu0
        %4708 = vmatprep.mubr.bf16.mxu0 0
        %4709 = vmatmul.mubr.bf16.gmra.mrb[0].mxu0 %v4566
        %v4710 = vpop.f32.mrb[0].mxu0
        %v4711 = vadd.f32 0.0, %v4710
        %v4712 = vpop.f32.mrb[0].mxu0
        %v4713 = vpop.f32.mrb[0].mxu0
        %v4714 = vadd.f32 0.0, %v4713
        %v4715 = vpop.f32.mrb[0].mxu0
        %4716 = vmatprep.mubr.bf16.mxu0 0
        %4717 = vmatmul.mubr.bf16.gmra.mrb[0].mxu0 %v4569
        %v4718 = vpop.f32.mrb[0].mxu0
        %v4719 = vadd.f32 0.0, %v4718
        %v4720 = vpop.f32.mrb[0].mxu0
        %v4721 = vpop.f32.mrb[0].mxu0
        %v4722 = vadd.f32 0.0, %v4721
        %v4723 = vpop.f32.mrb[0].mxu0
        %4724 = vmatprep.mubr.bf16.mxu0 0
        %4725 = vmatmul.mubr.bf16.gmra.mrb[0].mxu0 %v4572
        %v4726 = vpop.f32.mrb[0].mxu0
        %v4727 = vadd.f32 0.0, %v4726
        %v4728 = vpop.f32.mrb[0].mxu0
        %v4729 = vpop.f32.mrb[0].mxu0
        %v4730 = vadd.f32 0.0, %v4729
        %v4731 = vpop.f32.mrb[0].mxu0
        %4732 = vmatprep.mubr.bf16.mxu0 0
        %4733 = vmatmul.mubr.bf16.gmra.mrb[0].mxu0 %v4575
        %v4734 = vpop.f32.mrb[0].mxu0
        %v4735 = vadd.f32 0.0, %v4734
        %v4736 = vpop.f32.mrb[0].mxu0
        %v4737 = vpop.f32.mrb[0].mxu0
        %v4738 = vadd.f32 0.0, %v4737
        %v4739 = vpop.f32.mrb[0].mxu0
        %4740 = vdwg.mxu0
        %v4741 = vadd.f32 %v4271, %v4615
        %v4742 = vadd.f32 %v4272, %v4618
        %v4743 = vadd.f32 %v4273, %v4623
        %v4744 = vadd.f32 %v4274, %v4626
        %v4745 = vadd.f32 %v4275, %v4631
        %v4746 = vadd.f32 %v4276, %v4634
        %v4747 = vadd.f32 %v4277, %v4639
        %v4748 = vadd.f32 %v4278, %v4642
        %v4749 = vadd.f32 %v4279, %v4647
        %v4750 = vadd.f32 %v4280, %v4650
        %v4751 = vadd.f32 %v4281, %v4655
        %v4752 = vadd.f32 %v4282, %v4658
        %v4753 = vadd.f32 %v4283, %v4663
        %v4754 = vadd.f32 %v4284, %v4666
        %v4755 = vadd.f32 %v4285, %v4671
        %v4756 = vadd.f32 %v4286, %v4674
        %v4757 = vadd.f32 %v4287, %v4679
        %v4758 = vadd.f32 %v4288, %v4682
        %v4759 = vadd.f32 %v4289, %v4687
        %v4760 = vadd.f32 %v4290, %v4690
        %v4761 = vadd.f32 %v4291, %v4695
        %v4762 = vadd.f32 %v4292, %v4698
        %v4763 = vadd.f32 %v4293, %v4703
        %v4764 = vadd.f32 %v4294, %v4706
        %v4765 = vadd.f32 %v4295, %v4711
        %v4766 = vadd.f32 %v4296, %v4714
        %v4767 = vadd.f32 %v4297, %v4719
        %v4768 = vadd.f32 %v4298, %v4722
        %v4769 = vadd.f32 %v4299, %v4727
        %v4770 = vadd.f32 %v4300, %v4730
        %v4771 = vadd.f32 %v4301, %v4735
        %v4772 = vadd.f32 %v4302, %v4738
        %v4773 = vpack.c.bf16 %v4742, %v4741
        %v4774 = vpack.c.bf16 %v4744, %v4743
        %v4775 = vpack.c.bf16 %v4746, %v4745
        %v4776 = vpack.c.bf16 %v4748, %v4747
        %v4777 = vpack.c.bf16 %v4750, %v4749
        %v4778 = vpack.c.bf16 %v4752, %v4751
        %v4779 = vpack.c.bf16 %v4754, %v4753
        %v4780 = vpack.c.bf16 %v4756, %v4755
        %v4781 = vpack.c.bf16 %v4758, %v4757
        %v4782 = vpack.c.bf16 %v4760, %v4759
        %v4783 = vpack.c.bf16 %v4762, %v4761
        %v4784 = vpack.c.bf16 %v4764, %v4763
        %v4785 = vpack.c.bf16 %v4766, %v4765
        %v4786 = vpack.c.bf16 %v4768, %v4767
        %v4787 = vpack.c.bf16 %v4770, %v4769
        %v4788 = vpack.c.bf16 %v4772, %v4771
        %v4805 = vunpack.c.l.b16 %v4773
        %v4806 = vunpack.c.h.b16 %v4773
        %v4807 = vunpack.c.l.b16 %v4774
        %v4808 = vunpack.c.h.b16 %v4774
        %v4809 = vunpack.c.l.b16 %v4775
        %v4810 = vunpack.c.h.b16 %v4775
        %v4811 = vunpack.c.l.b16 %v4776
        %v4812 = vunpack.c.h.b16 %v4776
        %v4813 = vunpack.c.l.b16 %v4777
        %v4814 = vunpack.c.h.b16 %v4777
        %v4815 = vunpack.c.l.b16 %v4778
        %v4816 = vunpack.c.h.b16 %v4778
        %v4817 = vunpack.c.l.b16 %v4779
        %v4818 = vunpack.c.h.b16 %v4779
        %v4819 = vunpack.c.l.b16 %v4780
        %v4820 = vunpack.c.h.b16 %v4780
        %v4821 = vunpack.c.l.b16 %v4781
        %v4822 = vunpack.c.h.b16 %v4781
        %v4823 = vunpack.c.l.b16 %v4782
        %v4824 = vunpack.c.h.b16 %v4782
        %v4825 = vunpack.c.l.b16 %v4783
        %v4826 = vunpack.c.h.b16 %v4783
        %v4827 = vunpack.c.l.b16 %v4784
        %v4828 = vunpack.c.h.b16 %v4784
        %v4829 = vunpack.c.l.b16 %v4785
        %v4830 = vunpack.c.h.b16 %v4785
        %v4831 = vunpack.c.l.b16 %v4786
        %v4832 = vunpack.c.h.b16 %v4786
        %v4833 = vunpack.c.l.b16 %v4787
        %v4834 = vunpack.c.h.b16 %v4787
        %v4835 = vunpack.c.l.b16 %v4788
        %v4836 = vunpack.c.h.b16 %v4788
        %v4837 = vpack.c.b16 %v4805, %v4805
        %v4838 = vpack.c.b16 %v4806, %v4806
        %v4839 = vpack.c.b16 %v4807, %v4807
        %v4840 = vpack.c.b16 %v4808, %v4808
        %v4841 = vpack.c.b16 %v4809, %v4809
        %v4842 = vpack.c.b16 %v4810, %v4810
        %v4843 = vpack.c.b16 %v4811, %v4811
        %v4844 = vpack.c.b16 %v4812, %v4812
        %v4845 = vpack.c.b16 %v4813, %v4813
        %v4846 = vpack.c.b16 %v4814, %v4814
        %v4847 = vpack.c.b16 %v4815, %v4815
        %v4848 = vpack.c.b16 %v4816, %v4816
        %v4849 = vpack.c.b16 %v4817, %v4817
        %v4850 = vpack.c.b16 %v4818, %v4818
        %v4851 = vpack.c.b16 %v4819, %v4819
        %v4852 = vpack.c.b16 %v4820, %v4820
        %v4853 = vpack.c.b16 %v4821, %v4821
        %v4854 = vpack.c.b16 %v4822, %v4822
        %v4855 = vpack.c.b16 %v4823, %v4823
        %v4856 = vpack.c.b16 %v4824, %v4824
        %v4857 = vpack.c.b16 %v4825, %v4825
        %v4858 = vpack.c.b16 %v4826, %v4826
        %v4859 = vpack.c.b16 %v4827, %v4827
        %v4860 = vpack.c.b16 %v4828, %v4828
        %v4861 = vpack.c.b16 %v4829, %v4829
        %v4862 = vpack.c.b16 %v4830, %v4830
        %v4863 = vpack.c.b16 %v4831, %v4831
        %v4864 = vpack.c.b16 %v4832, %v4832
        %v4865 = vpack.c.b16 %v4833, %v4833
        %v4866 = vpack.c.b16 %v4834, %v4834
        %v4867 = vpack.c.b16 %v4835, %v4835
        %v4868 = vpack.c.b16 %v4836, %v4836
        %4901 = vst [vmem:[%s193] sm:$0xf] %v4837
        %4902 = vst [vmem:[%s193 + $0x4] sm:$0xf] %v4838
        %4903 = vst [vmem:[%s193 + $0x8] sm:$0xf] %v4839
        %4904 = vst [vmem:[%s193 + $0xc] sm:$0xf] %v4840
        %4905 = vst [vmem:[%s193 + $0x10] sm:$0xf] %v4841
        %4906 = vst [vmem:[%s193 + $0x14] sm:$0xf] %v4842
        %4907 = vst [vmem:[%s193 + $0x18] sm:$0xf] %v4843
        %4908 = vst [vmem:[%s193 + $0x1c] sm:$0xf] %v4844
        %4909 = vst [vmem:[%s193 + $0x20] sm:$0xf] %v4845
        %4910 = vst [vmem:[%s193 + $0x24] sm:$0xf] %v4846
        %4911 = vst [vmem:[%s193 + $0x28] sm:$0xf] %v4847
        %4912 = vst [vmem:[%s193 + $0x2c] sm:$0xf] %v4848
        %4913 = vst [vmem:[%s193 + $0x30] sm:$0xf] %v4849
        %4914 = vst [vmem:[%s193 + $0x34] sm:$0xf] %v4850
        %4915 = vst [vmem:[%s193 + $0x38] sm:$0xf] %v4851
        %4916 = vst [vmem:[%s193 + $0x3c] sm:$0xf] %v4852
        %4917 = vst [vmem:[%s193 + $0x40] sm:$0xf] %v4853
        %4918 = vst [vmem:[%s193 + $0x44] sm:$0xf] %v4854
        %4919 = vst [vmem:[%s193 + $0x48] sm:$0xf] %v4855
        %4920 = vst [vmem:[%s193 + $0x4c] sm:$0xf] %v4856
        %4921 = vst [vmem:[%s193 + $0x50] sm:$0xf] %v4857
        %4922 = vst [vmem:[%s193 + $0x54] sm:$0xf] %v4858
        %4923 = vst [vmem:[%s193 + $0x58] sm:$0xf] %v4859
        %4924 = vst [vmem:[%s193 + $0x5c] sm:$0xf] %v4860
        %4925 = vst [vmem:[%s193 + $0x60] sm:$0xf] %v4861
        %4926 = vst [vmem:[%s193 + $0x64] sm:$0xf] %v4862
        %4927 = vst [vmem:[%s193 + $0x68] sm:$0xf] %v4863
        %4928 = vst [vmem:[%s193 + $0x6c] sm:$0xf] %v4864
        %4929 = vst [vmem:[%s193 + $0x70] sm:$0xf] %v4865
        %4930 = vst [vmem:[%s193 + $0x74] sm:$0xf] %v4866
        %4931 = vst [vmem:[%s193 + $0x78] sm:$0xf] %v4867
        %4932 = vst [vmem:[%s193 + $0x7c] sm:$0xf] %v4868
        %v4933 = vadd.f32 %v4741, %v4742
        %v4934 = vadd.f32 %v4933, %v4743
        %v4935 = vadd.f32 %v4934, %v4744
        %v4936 = vadd.f32 %v4935, %v4745
        %v4937 = vadd.f32 %v4936, %v4746
        %v4938 = vadd.f32 %v4937, %v4747
        %v4939 = vadd.f32 %v4938, %v4748
        %v4940 = vadd.f32 %v4939, %v4749
        %v4941 = vadd.f32 %v4940, %v4750
        %v4942 = vadd.f32 %v4941, %v4751
        %v4943 = vadd.f32 %v4942, %v4752
        %v4944 = vadd.f32 %v4943, %v4753
        %v4945 = vadd.f32 %v4944, %v4754
        %v4946 = vadd.f32 %v4945, %v4755
        %v4947 = vadd.f32 %v4946, %v4756
        %v4948 = vadd.f32 %v4947, %v4757
        %v4949 = vadd.f32 %v4948, %v4758
        %v4950 = vadd.f32 %v4949, %v4759
        %v4951 = vadd.f32 %v4950, %v4760
        %v4952 = vadd.f32 %v4951, %v4761
        %v4953 = vadd.f32 %v4952, %v4762
        %v4954 = vadd.f32 %v4953, %v4763
        %v4955 = vadd.f32 %v4954, %v4764
        %v4956 = vadd.f32 %v4955, %v4765
        %v4957 = vadd.f32 %v4956, %v4766
        %v4958 = vadd.f32 %v4957, %v4767
        %v4959 = vadd.f32 %v4958, %v4768
        %v4960 = vadd.f32 %v4959, %v4769
        %v4961 = vadd.f32 %v4960, %v4770
        %v4962 = vadd.f32 %v4961, %v4771
        %v4963 = vadd.f32 %v4962, %v4772
        %v4964 = vrot.slane %v4963, 4
        %v4965 = vadd.f32 %v4963, %v4964
        %v4966 = vrot.slane %v4965, 2
        %v4967 = vadd.f32 %v4965, %v4966
        %v4968 = vrot.slane %v4967, 1
        %v4969 = vadd.f32 %v4967, %v4968
        %4970 = vst [vmem:[%s200] sm:$0x1] %v4969
        %v4971 = vmul.f32 %v4741, %v4741
        %v4972 = vmul.f32 %v4742, %v4742
        %v4973 = vmul.f32 %v4743, %v4743
        %v4974 = vmul.f32 %v4744, %v4744
        %v4975 = vmul.f32 %v4745, %v4745
        %v4976 = vmul.f32 %v4746, %v4746
        %v4977 = vmul.f32 %v4747, %v4747
        %v4978 = vmul.f32 %v4748, %v4748
        %v4979 = vmul.f32 %v4749, %v4749
        %v4980 = vmul.f32 %v4750, %v4750
        %v4981 = vmul.f32 %v4751, %v4751
        %v4982 = vmul.f32 %v4752, %v4752
        %v4983 = vmul.f32 %v4753, %v4753
        %v4984 = vmul.f32 %v4754, %v4754
        %v4985 = vmul.f32 %v4755, %v4755
        %v4986 = vmul.f32 %v4756, %v4756
        %v4987 = vmul.f32 %v4757, %v4757
        %v4988 = vmul.f32 %v4758, %v4758
        %v4989 = vmul.f32 %v4759, %v4759
        %v4990 = vmul.f32 %v4760, %v4760
        %v4991 = vmul.f32 %v4761, %v4761
        %v4992 = vmul.f32 %v4762, %v4762
        %v4993 = vmul.f32 %v4763, %v4763
        %v4994 = vmul.f32 %v4764, %v4764
        %v4995 = vmul.f32 %v4765, %v4765
        %v4996 = vmul.f32 %v4766, %v4766
        %v4997 = vmul.f32 %v4767, %v4767
        %v4998 = vmul.f32 %v4768, %v4768
        %v4999 = vmul.f32 %v4769, %v4769
        %v5000 = vmul.f32 %v4770, %v4770
        %v5001 = vmul.f32 %v4771, %v4771
        %v5002 = vmul.f32 %v4772, %v4772
        %v5003 = vadd.f32 %v4971, %v4972
        %v5004 = vadd.f32 %v5003, %v4973
        %v5005 = vadd.f32 %v5004, %v4974
        %v5006 = vadd.f32 %v5005, %v4975
        %v5007 = vadd.f32 %v5006, %v4976
        %v5008 = vadd.f32 %v5007, %v4977
        %v5009 = vadd.f32 %v5008, %v4978
        %v5010 = vadd.f32 %v5009, %v4979
        %v5011 = vadd.f32 %v5010, %v4980
        %v5012 = vadd.f32 %v5011, %v4981
        %v5013 = vadd.f32 %v5012, %v4982
        %v5014 = vadd.f32 %v5013, %v4983
        %v5015 = vadd.f32 %v5014, %v4984
        %v5016 = vadd.f32 %v5015, %v4985
        %v5017 = vadd.f32 %v5016, %v4986
        %v5018 = vadd.f32 %v5017, %v4987
        %v5019 = vadd.f32 %v5018, %v4988
        %v5020 = vadd.f32 %v5019, %v4989
        %v5021 = vadd.f32 %v5020, %v4990
        %v5022 = vadd.f32 %v5021, %v4991
        %v5023 = vadd.f32 %v5022, %v4992
        %v5024 = vadd.f32 %v5023, %v4993
        %v5025 = vadd.f32 %v5024, %v4994
        %v5026 = vadd.f32 %v5025, %v4995
        %v5027 = vadd.f32 %v5026, %v4996
        %v5028 = vadd.f32 %v5027, %v4997
        %v5029 = vadd.f32 %v5028, %v4998
        %v5030 = vadd.f32 %v5029, %v4999
        %v5031 = vadd.f32 %v5030, %v5000
        %v5032 = vadd.f32 %v5031, %v5001
        %v5033 = vadd.f32 %v5032, %v5002
        %v5034 = vrot.slane %v5033, 4
        %v5035 = vadd.f32 %v5033, %v5034
        %v5036 = vrot.slane %v5035, 2
        %v5037 = vadd.f32 %v5035, %v5036
        %v5038 = vrot.slane %v5037, 1
        %v5039 = vadd.f32 %v5037, %v5038
        %5040 = vst [vmem:[%s200 + $0x1] sm:$0x1] %v5039
        %s5041 = sand.u32 %s92, 1
        %s5042 = scalar_lea.sflag [#allocation3], %s5041
        %s5043 = sand.u32 %s92, 1
        %s5044 = smul.addr %s5043, 128
        %s5045 = scalar_lea.vmem [#allocation2], %s5044
        %s5046 = sand.u32 %s120, 1
        %s5047 = scalar_lea.sflag [#allocation5], %s5046
        %s5048 = sand.u32 %s120, 1
        %s5049 = smul.addr %s5048, 2
        %s5050 = scalar_lea.vmem [#allocation4], %s5049
        // Predicated region
        $region29: #{tpu_custom_call.1} parent=27 // pred_check
          %p5051 = pneg %p102
        $region30: #{tpu_custom_call.1} parent=27 // pred_check_branch
          %5053 = sbr.rel (%p5051) target = $region32
        $region31: #{tpu_custom_call.1} parent=27 // pred_region
          %s5054 = sadd.s32 %s25, %s26
          %s5055 = smul.u32 32, %s5054
          %s5057 = ssub.s32 2048, 2048
          %5058 = vsyncadd %s5042, %s5057
          %s5059 = smul.addr %s5055, 64
          %s5060 = scalar_lea.hbm %s2, %s5059
          %s5061 = sshll.u32 %s5045, 4
          %s5062 = int_to_ptr.vmem [resolvable:$true] %s5061
          %5067 = dma.vmem_to_hbm [thread:$0]  %s5062, 2048, %s5060, %s5042, 64, 64, 4
        $region32: #{tpu_custom_call.1} parent=27 // pred_fallthru
          _
        // Predicated region
        $region33: #{tpu_custom_call.1} parent=27 // pred_check
          %p5068 = pneg %p130
        $region34: #{tpu_custom_call.1} parent=27 // pred_check_branch
          %5070 = sbr.rel (%p5068) target = $region36
        $region35: #{tpu_custom_call.1} parent=27 // pred_region
          %s5071 = sadd.s32 %s25, %s26
          %s5073 = ssub.s32 32, 32
          %5074 = vsyncadd %s5047, %s5073
          %s5075 = smul.addr %s5071, 32
          %s5076 = scalar_lea.hbm %s3, %s5075
          %s5078 = sshll.u32 %s5050, 4
          %s5079 = int_to_ptr.vmem [resolvable:$true] %s5078
          %5081 = dma.vmem_to_hbm [thread:$0]  %s5079, 32, %s5076, %s5047
        $region36: #{tpu_custom_call.1} parent=27 // pred_fallthru
          _
      $region28: #{tpu_custom_call.1} parent=5 // pred_fallthru
        _
      %p5082 = scmp.le.s32.totalorder 2, %s16
      // Predicated region
      $region37: #{tpu_custom_call.1} parent=5 // pred_check
        %p5083 = pneg %p5082
      $region38: #{tpu_custom_call.1} parent=5 // pred_check_branch
        %5085 = sbr.rel (%p5083) target = $region40
      $region39: #{tpu_custom_call.1} parent=5 // pred_region
        %s5086 = ssub.s32 %s16, 2
        // Predicated region
        $region41: #{tpu_custom_call.1} parent=39 // pred_check
          %p5087 = pneg %p108
        $region42: #{tpu_custom_call.1} parent=39 // pred_check_branch
          %5089 = sbr.rel (%p5087) target = $region44
        $region43: #{tpu_custom_call.1} parent=39 // pred_region
          %s5090 = sand.u32 %s93, 1
          %s5091 = scalar_lea.sflag [#allocation3], %s5090
          %s5092 = sand.u32 %s93, 1
          %s5093 = smul.addr %s5092, 128
          %s5094 = scalar_lea.vmem [#allocation2], %s5093
          %5095 = dma.done %s5091, 2048
        $region44: #{tpu_custom_call.1} parent=39 // pred_fallthru
          _
        // Predicated region
        $region45: #{tpu_custom_call.1} parent=39 // pred_check
          %p5096 = pneg %p136
        $region46: #{tpu_custom_call.1} parent=39 // pred_check_branch
          %5098 = sbr.rel (%p5096) target = $region48
        $region47: #{tpu_custom_call.1} parent=39 // pred_region
          %s5099 = sand.u32 %s121, 1
          %s5100 = scalar_lea.sflag [#allocation5], %s5099
          %s5101 = sand.u32 %s121, 1
          %s5102 = smul.addr %s5101, 2
          %s5103 = scalar_lea.vmem [#allocation4], %s5102
          %5104 = dma.done %s5100, 32
        $region48: #{tpu_custom_call.1} parent=39 // pred_fallthru
          _
      $region40: #{tpu_custom_call.1} parent=5 // pred_fallthru
        _
    $region6: #{tpu_custom_call.1} parent=1 // loop_footer
      %s20 = sadd.s32 1, %s16
    $region7: #{tpu_custom_call.1} parent=1 // loop_footer_branch
      %15 = sbr.rel target = $region3
    $region8: #{tpu_custom_call.1} parent=1 // loop_exit
      _
    %5105 = vsyncpa [#allocation3], 1
    %s5106 = scalar_lea.sflag [#allocation3], 1
    %5107 = vsyncpa %s5106, 1
    %5108 = vsyncpa [#allocation5], 1
    %s5109 = scalar_lea.sflag [#allocation5], 1
    %5110 = vsyncpa %s5109, 1

</llo_original>
